<compile_context>
chip_gen: v6e
topology: v6e:2x2x1
jax: 0.10.0
libtpu: 0.0.40
codegen_flags: <defaults>
</compile_context>

<pallas_src>
import functools

import jax
import jax.numpy as jnp
from jax.experimental import pallas as pl
from jax.experimental.pallas import tpu as pltpu


# ----------------------------------------------------------------------------
# Pallas kernel: one (batch, query-tile) pair per grid step.
#   x_ref    : (1, N, Cin) f32   flattened channels-last input
#   w1_ref   : (9, Cin, C) f32   conv1 weight, tap-major (tap = kh*3+kw)
#   b1_ref   : (1, C)      f32   conv1 bias
#   wqk_ref  : (C, C)      bf16  folded wq @ wk^T (PAM query/key bilinear form)
#   wv_ref   : (C, C)      bf16  PAM value 1x1-conv weight
#   w2t_ref  : (1, C)      f32   conv2 (1x1) weight as a row vector
#   scal_ref : (2,)  SMEM  f32   [gamma, b2]
#   out_ref  : (1, 1, TQ)  f32   lane-dense attention-map tile
#   x1_scr   : (N, C) VMEM f32   conv1 output scratch (q-row slicing via pl.ds)
# ----------------------------------------------------------------------------
def _self_attn_kernel(x_ref, w1_ref, b1_ref, wqk_ref, wv_ref, w2t_ref,
                      scal_ref, out_ref, x1_scr, *, H, W, C, tq):
    x = x_ref[0]                                                     # (N, Cin)
    N, Cin = x.shape

    # ---- conv1 (3x3, pad 1): in-kernel im2col via shifted flat-row slices ---
    # Shifting the flattened (h*W + w) axis by dh*W + dw and zero-padding the
    # shifted-out rows handles the h-boundary exactly; only the w-boundary
    # needs an explicit mask.
    w_idx = jax.lax.broadcasted_iota(jnp.int32, (N, Cin), 0) % W

    def shifted(src, s):
        # y[n] = src[n + s] for 0 <= n + s < N, else 0
        if s == 0:
            return src
        pad = jnp.zeros((abs(s), Cin), src.dtype)
        if s > 0:
            return jnp.concatenate([src[s:], pad], axis=0)
        return jnp.concatenate([pad, src[:s]], axis=0)

    acc = jnp.zeros((N, C), jnp.float32)
    for kh in range(3):
        for kw in range(3):
            dh, dw = kh - 1, kw - 1
            tap = shifted(x, dh * W + dw)
            if dw == -1:
                tap = jnp.where(w_idx >= 1, tap, 0.0)
            elif dw == 1:
                tap = jnp.where(w_idx <= W - 2, tap, 0.0)
            acc = acc + jnp.dot(tap, w1_ref[kh * 3 + kw],
                                preferred_element_type=jnp.float32)
    x1 = acc + b1_ref[...]                                           # (N, C) f32
    x1_scr[...] = x1

    # ---- query-row tile for this grid step (second, parallel grid axis) ----
    q_off = pl.multiple_of(pl.program_id(1) * tq, tq)
    x1_q = x1_scr[pl.ds(q_off, tq), :]                               # (tq, C)

    x1_b = x1.astype(jnp.bfloat16)

    # PAM energy with folded wq @ wk^T; bf16 MXU operands, f32 accumulation.
    t_q = jnp.dot(x1_q.astype(jnp.bfloat16), wqk_ref[...],
                  preferred_element_type=jnp.float32)                # (tq, C)
    energy = jax.lax.dot_general(
        t_q.astype(jnp.bfloat16), x1_b,
        dimension_numbers=(((1,), (1,)), ((), ())),
        preferred_element_type=jnp.float32)                          # (tq, N)

    # Max-shifted, un-normalized softmax in f32; normalization deferred to the
    # (tq, C) result via the approximate EUP reciprocal of the row sums.
    e_max = jnp.max(energy, axis=-1, keepdims=True)                  # (tq, 1)
    p = jnp.exp(energy - e_max)                                      # (tq, N)
    row_sum = jnp.sum(p, axis=-1, keepdims=True)                     # (tq, 1)

    v = jnp.dot(x1_b, wv_ref[...], preferred_element_type=jnp.float32)  # (N, C)
    pv = jnp.dot(p.astype(jnp.bfloat16), v.astype(jnp.bfloat16),
                 preferred_element_type=jnp.float32)                 # (tq, C)
    out_attn = pv * pl.reciprocal(row_sum, approx=True)              # (tq, C)

    gamma = scal_ref[0]                                              # SMEM scalars
    b2 = scal_ref[1]
    m = gamma * out_attn + x1_q                                      # (tq, C) f32

    # conv2 (1x1 -> 1 ch) as (1,C) x (tq,C)^T contraction -> lane-dense (1,tq)
    att_row = jax.lax.dot_general(
        w2t_ref[...], m, dimension_numbers=(((1,), (1,)), ((), ())),
        preferred_element_type=jnp.float32)                          # (1, tq)
    out_ref[0] = att_row + b2


# ----------------------------------------------------------------------------
# Wrapper: weight folding / dtype prep + pallas_call
# ----------------------------------------------------------------------------
def self_attention_block(x_nchw, w1_taps, b1, wq, wk, wv, gamma, w2, b2):
    B, Cin, H, W = x_nchw.shape
    N = H * W
    C = w1_taps.shape[-1]
    TQ = 128 if N % 128 == 0 else N                 # query-tile size

    # Fold query/key 1x1 convs into one bilinear form; bf16 MXU weights.
    wqk = jnp.dot(wq, wk.T).astype(jnp.bfloat16)                     # (C, C)
    wv_b = wv.astype(jnp.bfloat16)                                   # (C, C)
    w2t = w2.T.astype(jnp.float32)                                   # (1, C)
    scal = jnp.concatenate(
        [jnp.reshape(gamma, (1,)), jnp.reshape(b2, (1,))]).astype(jnp.float32)

    # Only layout plumbing in the wrapper: NCHW -> (B, N, Cin) channels-last.
    x_flat = jnp.transpose(x_nchw, (0, 2, 3, 1)).reshape(B, N, Cin)
    x_flat = x_flat.astype(jnp.float32)

    kernel = functools.partial(_self_attn_kernel, H=H, W=W, C=C, tq=TQ)

    out = pl.pallas_call(
        kernel,
        out_shape=jax.ShapeDtypeStruct((B, 1, N), jnp.float32),
        grid_spec=pltpu.PrefetchScalarGridSpec(
            num_scalar_prefetch=0,
            grid=(B, N // TQ),
            in_specs=[
                pl.BlockSpec((1, N, Cin), lambda b, q: (b, 0, 0)),
                pl.BlockSpec((9, Cin, C), lambda b, q: (0, 0, 0)),
                pl.BlockSpec((1, C), lambda b, q: (0, 0)),
                pl.BlockSpec((C, C), lambda b, q: (0, 0)),
                pl.BlockSpec((C, C), lambda b, q: (0, 0)),
                pl.BlockSpec((1, C), lambda b, q: (0, 0)),
                pl.BlockSpec(memory_space=pltpu.MemorySpace.SMEM),   # [gamma, b2]
            ],
            out_specs=pl.BlockSpec((1, 1, TQ), lambda b, q: (b, 0, q)),
            scratch_shapes=[pltpu.VMEM((N, C), jnp.float32)],
        ),
        # TODO(synk): for much larger H*W, set vmem_limit_bytes explicitly and
        # shrink TQ so the (TQ, N) energy/p tiles stay within v7x's 64 MiB VMEM.
        compiler_params=pltpu.CompilerParams(
            dimension_semantics=("parallel", "parallel")),
    )(x_flat, w1_taps, b1, wqk, wv_b, w2t, scal)

    # lane-dense (B, 1, N) -> NCHW (B, 1, H, W) like the PyTorch module
    return out.reshape(B, 1, H, W)


# ----------------------------------------------------------------------------
# Pure-JAX f32 reference (for verification)
# ----------------------------------------------------------------------------
def reference(x, w1_taps, b1, wq, wk, wv, gamma, w2, b2):
    B, Cin, H, W = x.shape
    C = w1_taps.shape[-1]
    N = H * W
    # (9, Cin, C) tap-major -> OIHW
    w1_oihw = jnp.transpose(w1_taps.reshape(3, 3, Cin, C), (3, 2, 0, 1))
    x1 = jax.lax.conv_general_dilated(
        x, w1_oihw, (1, 1), "SAME",
        dimension_numbers=("NCHW", "OIHW", "NCHW")) + b1.reshape(1, C, 1, 1)
    x1f = x1.reshape(B, C, N)
    q = jnp.einsum("bcn,cd->bnd", x1f, wq)          # (B, N, C8)
    k = jnp.einsum("bcn,cd->bdn", x1f, wk)          # (B, C8, N)
    energy = jnp.einsum("bnd,bdm->bnm", q, k)
    att = jax.nn.softmax(energy, axis=-1)
    v = jnp.einsum("bcn,cd->bdn", x1f, wv)          # (B, C, N)
    out = jnp.einsum("bcn,bmn->bcm", v, att).reshape(B, C, H, W)
    m = gamma[0, 0] * out + x1
    att_map = jnp.einsum("bchw,c->bhw", m, w2[:, 0]) + b2[0, 0]
    return att_map[:, None, :, :]


# ----------------------------------------------------------------------------
# Main
# ----------------------------------------------------------------------------
if __name__ == "__main__":
    in_channels, out_channels = 4, 16      # out_channels // 8 = 2
    B, H, W = 2, 16, 16
    Cin, C, C8 = in_channels, out_channels, out_channels // 8

    key = jax.random.PRNGKey(0)
    kx, k1, kq, kk, kv, k2 = jax.random.split(key, 6)

    def xavier(k, shape, fan_in, fan_out):
        lim = (6.0 / (fan_in + fan_out)) ** 0.5
        return jax.random.uniform(k, shape, jnp.float32, -lim, lim)

    # parameters (deterministic in-script init; gamma starts at 0 like the module)
    w1 = xavier(k1, (9, Cin, C), Cin * 9, C)        # conv1 weight (tap, cin, cout)
    b1 = jnp.zeros((1, C), jnp.float32)
    wq = xavier(kq, (C, C8), C, C8)
    wk = xavier(kk, (C, C8), C, C8)
    wv = xavier(kv, (C, C), C, C)
    gamma = jnp.zeros((1, 1), jnp.float32)
    w2 = xavier(k2, (C, 1), C, 1)
    b2 = jnp.zeros((1, 1), jnp.float32)

    x = jax.random.normal(kx, (B, Cin, H, W), jnp.float32)

    # faithful run (gamma = 0, as in the module's __init__)
    result = self_attention_block(x, w1, b1, wq, wk, wv, gamma, w2, b2)
    jax.block_until_ready(result)

    # sanity check with a nonzero gamma so the attention path actually matters
    gamma_t = jnp.full((1, 1), 0.5, jnp.float32)
    got = self_attention_block(x, w1, b1, wq, wk, wv, gamma_t, w2, b2)
    want = reference(x, w1, b1, wq, wk, wv, gamma_t, w2, b2)
    jax.block_until_ready((got, want))
    assert got.shape == (B, 1, H, W)
    # bf16 MXU operands in the energy / p@v matmuls + the approximate EUP
    # reciprocal introduce ~1e-2-level absolute error vs the f32 reference on
    # O(1) outputs, so the tolerance is loosened relative to the all-f32 path.
    assert jnp.allclose(got, want, atol=1e-1, rtol=5e-2), "mismatch vs JAX reference"

    print("KERNEL_OK")
</pallas_src>

<mosaic_0001>
module attributes {stable_mosaic.version = 11 : i64} {
  func.func @_self_attn_kernel(%arg0: i32, %arg1: i32, %arg2: memref<1x256x4xf32, #tpu.memory_space<vmem>>, %arg3: memref<9x4x16xf32, #tpu.memory_space<vmem>>, %arg4: memref<1x16xf32, #tpu.memory_space<vmem>>, %arg5: memref<16x16xbf16, #tpu.memory_space<vmem>>, %arg6: memref<16x16xbf16, #tpu.memory_space<vmem>>, %arg7: memref<1x16xf32, #tpu.memory_space<vmem>>, %arg8: memref<2xf32, #tpu.memory_space<smem>>, %arg9: memref<1x1x128xf32, #tpu.memory_space<vmem>>, %arg10: memref<256x16xf32, #tpu.memory_space<vmem>>) attributes {dimension_semantics = [#tpu.dimension_semantics<parallel>, #tpu.dimension_semantics<parallel>], iteration_bounds = array<i64: 2, 2>, scalar_prefetch = 0 : i64, scratch_operands = 1 : i64, tpu.core_type = #tpu.core_type<tc>, window_params = [{transform_indices = @transform_0, window_bounds = array<i64: 1, 256, 4>}, {pipeline_mode = #tpu.pipeline_mode<synchronous>, transform_indices = @transform_1, window_bounds = array<i64: 9, 4, 16>}, {pipeline_mode = #tpu.pipeline_mode<synchronous>, transform_indices = @transform_2, window_bounds = array<i64: 1, 16>}, {pipeline_mode = #tpu.pipeline_mode<synchronous>, transform_indices = @transform_3, window_bounds = array<i64: 16, 16>}, {pipeline_mode = #tpu.pipeline_mode<synchronous>, transform_indices = @transform_4, window_bounds = array<i64: 16, 16>}, {pipeline_mode = #tpu.pipeline_mode<synchronous>, transform_indices = @transform_5, window_bounds = array<i64: 1, 16>}, {transform_indices = @transform_6, window_bounds = array<i64: 2>}, {transform_indices = @transform_7, window_bounds = array<i64: 1, 1, 128>}]} {
    %c0 = arith.constant 0 : index
    %c0_0 = arith.constant 0 : index
    %c0_1 = arith.constant 0 : index
    %0 = vector.load %arg2[%c0, %c0_0, %c0_1] : memref<1x256x4xf32, #tpu.memory_space<vmem>>, vector<1x256x4xf32>
    %1 = vector.shape_cast %0 : vector<1x256x4xf32> to vector<256x4xf32>
    %2 = tpu.iota {dimensions = array<i32: 0>} : vector<256x4xi32>
    %c16_i32 = arith.constant 16 : i32
    %c0_i32 = arith.constant 0 : i32
    %3 = arith.cmpi eq, %c16_i32, %c0_i32 : i32
    %c1_i32 = arith.constant 1 : i32
    %4 = arith.select %3, %c1_i32, %c16_i32 : i32
    %5 = vector.broadcast %4 : i32 to vector<256x4xi32>
    %6 = arith.remsi %2, %5 : vector<256x4xi32>
    %c0_i32_2 = arith.constant 0 : i32
    %7 = vector.broadcast %c0_i32_2 : i32 to vector<256x4xi32>
    %8 = arith.cmpi ne, %6, %7 : vector<256x4xi32>
    %c0_i32_3 = arith.constant 0 : i32
    %9 = vector.broadcast %c0_i32_3 : i32 to vector<256x4xi32>
    %10 = arith.cmpi slt, %6, %9 : vector<256x4xi32>
    %c0_i32_4 = arith.constant 0 : i32
    %11 = arith.cmpi slt, %4, %c0_i32_4 : i32
    %12 = vector.broadcast %11 : i1 to vector<256x4xi1>
    %13 = vector.broadcast %12 : vector<256x4xi1> to vector<256x4xi1>
    %14 = arith.xori %10, %13 : vector<256x4xi1>
    %15 = arith.andi %14, %8 : vector<256x4xi1>
    %16 = vector.broadcast %4 : i32 to vector<256x4xi32>
    %17 = arith.addi %6, %16 : vector<256x4xi32>
    %18 = arith.select %15, %17, %6 : vector<256x4xi1>, vector<256x4xi32>
    %cst = arith.constant 0.000000e+00 : f32
    %19 = vector.broadcast %cst : f32 to vector<256x16xf32>
    %cst_5 = arith.constant 0.000000e+00 : f32
    %20 = vector.broadcast %cst_5 : f32 to vector<17x4xf32>
    %21 = vector.extract_strided_slice %1 {offsets = [0, 0], sizes = [239, 4], strides = [1, 1]} : vector<256x4xf32> to vector<239x4xf32>
    %22 = tpu.concatenate %20, %21 in 0 : vector<17x4xf32>, vector<239x4xf32> -> vector<256x4xf32>
    %c1_i32_6 = arith.constant 1 : i32
    %23 = vector.broadcast %c1_i32_6 : i32 to vector<256x4xi32>
    %24 = arith.cmpi sge, %18, %23 : vector<256x4xi32>
    %cst_7 = arith.constant 0.000000e+00 : f32
    %25 = vector.broadcast %cst_7 : f32 to vector<256x4xf32>
    %26 = arith.select %24, %22, %25 : vector<256x4xi1>, vector<256x4xf32>
    %c0_8 = arith.constant 0 : index
    %c0_9 = arith.constant 0 : index
    %c0_10 = arith.constant 0 : index
    %27 = vector.load %arg3[%c0_8, %c0_9, %c0_10] : memref<9x4x16xf32, #tpu.memory_space<vmem>>, vector<1x4x16xf32>
    %28 = vector.shape_cast %27 : vector<1x4x16xf32> to vector<4x16xf32>
    %cst_11 = arith.constant dense<0.000000e+00> : vector<256x16xf32>
    %29 = tpu.matmul %26, %28, %cst_11 {dimension_numbers = #tpu.dot_dimension_numbers<[1], [0], [0], [1], [0, 0, 1, 1], [], []>} : vector<256x4xf32>, vector<4x16xf32>, vector<256x16xf32> -> vector<256x16xf32>
    %30 = arith.addf %19, %29 : vector<256x16xf32>
    %cst_12 = arith.constant 0.000000e+00 : f32
    %31 = vector.broadcast %cst_12 : f32 to vector<16x4xf32>
    %32 = vector.extract_strided_slice %1 {offsets = [0, 0], sizes = [240, 4], strides = [1, 1]} : vector<256x4xf32> to vector<240x4xf32>
    %33 = tpu.concatenate %31, %32 in 0 : vector<16x4xf32>, vector<240x4xf32> -> vector<256x4xf32>
    %c1 = arith.constant 1 : index
    %c0_13 = arith.constant 0 : index
    %c0_14 = arith.constant 0 : index
    %34 = vector.load %arg3[%c1, %c0_13, %c0_14] : memref<9x4x16xf32, #tpu.memory_space<vmem>>, vector<1x4x16xf32>
    %35 = vector.shape_cast %34 : vector<1x4x16xf32> to vector<4x16xf32>
    %cst_15 = arith.constant dense<0.000000e+00> : vector<256x16xf32>
    %36 = tpu.matmul %33, %35, %cst_15 {dimension_numbers = #tpu.dot_dimension_numbers<[1], [0], [0], [1], [0, 0, 1, 1], [], []>} : vector<256x4xf32>, vector<4x16xf32>, vector<256x16xf32> -> vector<256x16xf32>
    %37 = arith.addf %30, %36 : vector<256x16xf32>
    %cst_16 = arith.constant 0.000000e+00 : f32
    %38 = vector.broadcast %cst_16 : f32 to vector<15x4xf32>
    %39 = vector.extract_strided_slice %1 {offsets = [0, 0], sizes = [241, 4], strides = [1, 1]} : vector<256x4xf32> to vector<241x4xf32>
    %40 = tpu.concatenate %38, %39 in 0 : vector<15x4xf32>, vector<241x4xf32> -> vector<256x4xf32>
    %c14_i32 = arith.constant 14 : i32
    %41 = vector.broadcast %c14_i32 : i32 to vector<256x4xi32>
    %42 = arith.cmpi sle, %18, %41 : vector<256x4xi32>
    %cst_17 = arith.constant 0.000000e+00 : f32
    %43 = vector.broadcast %cst_17 : f32 to vector<256x4xf32>
    %44 = arith.select %42, %40, %43 : vector<256x4xi1>, vector<256x4xf32>
    %c2 = arith.constant 2 : index
    %c0_18 = arith.constant 0 : index
    %c0_19 = arith.constant 0 : index
    %45 = vector.load %arg3[%c2, %c0_18, %c0_19] : memref<9x4x16xf32, #tpu.memory_space<vmem>>, vector<1x4x16xf32>
    %46 = vector.shape_cast %45 : vector<1x4x16xf32> to vector<4x16xf32>
    %cst_20 = arith.constant dense<0.000000e+00> : vector<256x16xf32>
    %47 = tpu.matmul %44, %46, %cst_20 {dimension_numbers = #tpu.dot_dimension_numbers<[1], [0], [0], [1], [0, 0, 1, 1], [], []>} : vector<256x4xf32>, vector<4x16xf32>, vector<256x16xf32> -> vector<256x16xf32>
    %48 = arith.addf %37, %47 : vector<256x16xf32>
    %cst_21 = arith.constant 0.000000e+00 : f32
    %49 = vector.broadcast %cst_21 : f32 to vector<1x4xf32>
    %50 = vector.extract_strided_slice %1 {offsets = [0, 0], sizes = [255, 4], strides = [1, 1]} : vector<256x4xf32> to vector<255x4xf32>
    %51 = tpu.concatenate %49, %50 in 0 : vector<1x4xf32>, vector<255x4xf32> -> vector<256x4xf32>
    %c1_i32_22 = arith.constant 1 : i32
    %52 = vector.broadcast %c1_i32_22 : i32 to vector<256x4xi32>
    %53 = arith.cmpi sge, %18, %52 : vector<256x4xi32>
    %cst_23 = arith.constant 0.000000e+00 : f32
    %54 = vector.broadcast %cst_23 : f32 to vector<256x4xf32>
    %55 = arith.select %53, %51, %54 : vector<256x4xi1>, vector<256x4xf32>
    %c3 = arith.constant 3 : index
    %c0_24 = arith.constant 0 : index
    %c0_25 = arith.constant 0 : index
    %56 = vector.load %arg3[%c3, %c0_24, %c0_25] : memref<9x4x16xf32, #tpu.memory_space<vmem>>, vector<1x4x16xf32>
    %57 = vector.shape_cast %56 : vector<1x4x16xf32> to vector<4x16xf32>
    %cst_26 = arith.constant dense<0.000000e+00> : vector<256x16xf32>
    %58 = tpu.matmul %55, %57, %cst_26 {dimension_numbers = #tpu.dot_dimension_numbers<[1], [0], [0], [1], [0, 0, 1, 1], [], []>} : vector<256x4xf32>, vector<4x16xf32>, vector<256x16xf32> -> vector<256x16xf32>
    %59 = arith.addf %48, %58 : vector<256x16xf32>
    %c4 = arith.constant 4 : index
    %c0_27 = arith.constant 0 : index
    %c0_28 = arith.constant 0 : index
    %60 = vector.load %arg3[%c4, %c0_27, %c0_28] : memref<9x4x16xf32, #tpu.memory_space<vmem>>, vector<1x4x16xf32>
    %61 = vector.shape_cast %60 : vector<1x4x16xf32> to vector<4x16xf32>
    %cst_29 = arith.constant dense<0.000000e+00> : vector<256x16xf32>
    %62 = tpu.matmul %1, %61, %cst_29 {dimension_numbers = #tpu.dot_dimension_numbers<[1], [0], [0], [1], [0, 0, 1, 1], [], []>} : vector<256x4xf32>, vector<4x16xf32>, vector<256x16xf32> -> vector<256x16xf32>
    %63 = arith.addf %59, %62 : vector<256x16xf32>
    %cst_30 = arith.constant 0.000000e+00 : f32
    %64 = vector.broadcast %cst_30 : f32 to vector<1x4xf32>
    %65 = vector.extract_strided_slice %1 {offsets = [1, 0], sizes = [255, 4], strides = [1, 1]} : vector<256x4xf32> to vector<255x4xf32>
    %66 = tpu.concatenate %65, %64 in 0 : vector<255x4xf32>, vector<1x4xf32> -> vector<256x4xf32>
    %c14_i32_31 = arith.constant 14 : i32
    %67 = vector.broadcast %c14_i32_31 : i32 to vector<256x4xi32>
    %68 = arith.cmpi sle, %18, %67 : vector<256x4xi32>
    %cst_32 = arith.constant 0.000000e+00 : f32
    %69 = vector.broadcast %cst_32 : f32 to vector<256x4xf32>
    %70 = arith.select %68, %66, %69 : vector<256x4xi1>, vector<256x4xf32>
    %c5 = arith.constant 5 : index
    %c0_33 = arith.constant 0 : index
    %c0_34 = arith.constant 0 : index
    %71 = vector.load %arg3[%c5, %c0_33, %c0_34] : memref<9x4x16xf32, #tpu.memory_space<vmem>>, vector<1x4x16xf32>
    %72 = vector.shape_cast %71 : vector<1x4x16xf32> to vector<4x16xf32>
    %cst_35 = arith.constant dense<0.000000e+00> : vector<256x16xf32>
    %73 = tpu.matmul %70, %72, %cst_35 {dimension_numbers = #tpu.dot_dimension_numbers<[1], [0], [0], [1], [0, 0, 1, 1], [], []>} : vector<256x4xf32>, vector<4x16xf32>, vector<256x16xf32> -> vector<256x16xf32>
    %74 = arith.addf %63, %73 : vector<256x16xf32>
    %cst_36 = arith.constant 0.000000e+00 : f32
    %75 = vector.broadcast %cst_36 : f32 to vector<15x4xf32>
    %76 = vector.extract_strided_slice %1 {offsets = [15, 0], sizes = [241, 4], strides = [1, 1]} : vector<256x4xf32> to vector<241x4xf32>
    %77 = tpu.concatenate %76, %75 in 0 : vector<241x4xf32>, vector<15x4xf32> -> vector<256x4xf32>
    %c1_i32_37 = arith.constant 1 : i32
    %78 = vector.broadcast %c1_i32_37 : i32 to vector<256x4xi32>
    %79 = arith.cmpi sge, %18, %78 : vector<256x4xi32>
    %cst_38 = arith.constant 0.000000e+00 : f32
    %80 = vector.broadcast %cst_38 : f32 to vector<256x4xf32>
    %81 = arith.select %79, %77, %80 : vector<256x4xi1>, vector<256x4xf32>
    %c6 = arith.constant 6 : index
    %c0_39 = arith.constant 0 : index
    %c0_40 = arith.constant 0 : index
    %82 = vector.load %arg3[%c6, %c0_39, %c0_40] : memref<9x4x16xf32, #tpu.memory_space<vmem>>, vector<1x4x16xf32>
    %83 = vector.shape_cast %82 : vector<1x4x16xf32> to vector<4x16xf32>
    %cst_41 = arith.constant dense<0.000000e+00> : vector<256x16xf32>
    %84 = tpu.matmul %81, %83, %cst_41 {dimension_numbers = #tpu.dot_dimension_numbers<[1], [0], [0], [1], [0, 0, 1, 1], [], []>} : vector<256x4xf32>, vector<4x16xf32>, vector<256x16xf32> -> vector<256x16xf32>
    %85 = arith.addf %74, %84 : vector<256x16xf32>
    %cst_42 = arith.constant 0.000000e+00 : f32
    %86 = vector.broadcast %cst_42 : f32 to vector<16x4xf32>
    %87 = vector.extract_strided_slice %1 {offsets = [16, 0], sizes = [240, 4], strides = [1, 1]} : vector<256x4xf32> to vector<240x4xf32>
    %88 = tpu.concatenate %87, %86 in 0 : vector<240x4xf32>, vector<16x4xf32> -> vector<256x4xf32>
    %c7 = arith.constant 7 : index
    %c0_43 = arith.constant 0 : index
    %c0_44 = arith.constant 0 : index
    %89 = vector.load %arg3[%c7, %c0_43, %c0_44] : memref<9x4x16xf32, #tpu.memory_space<vmem>>, vector<1x4x16xf32>
    %90 = vector.shape_cast %89 : vector<1x4x16xf32> to vector<4x16xf32>
    %cst_45 = arith.constant dense<0.000000e+00> : vector<256x16xf32>
    %91 = tpu.matmul %88, %90, %cst_45 {dimension_numbers = #tpu.dot_dimension_numbers<[1], [0], [0], [1], [0, 0, 1, 1], [], []>} : vector<256x4xf32>, vector<4x16xf32>, vector<256x16xf32> -> vector<256x16xf32>
    %92 = arith.addf %85, %91 : vector<256x16xf32>
    %cst_46 = arith.constant 0.000000e+00 : f32
    %93 = vector.broadcast %cst_46 : f32 to vector<17x4xf32>
    %94 = vector.extract_strided_slice %1 {offsets = [17, 0], sizes = [239, 4], strides = [1, 1]} : vector<256x4xf32> to vector<239x4xf32>
    %95 = tpu.concatenate %94, %93 in 0 : vector<239x4xf32>, vector<17x4xf32> -> vector<256x4xf32>
    %c14_i32_47 = arith.constant 14 : i32
    %96 = vector.broadcast %c14_i32_47 : i32 to vector<256x4xi32>
    %97 = arith.cmpi sle, %18, %96 : vector<256x4xi32>
    %cst_48 = arith.constant 0.000000e+00 : f32
    %98 = vector.broadcast %cst_48 : f32 to vector<256x4xf32>
    %99 = arith.select %97, %95, %98 : vector<256x4xi1>, vector<256x4xf32>
    %c8 = arith.constant 8 : index
    %c0_49 = arith.constant 0 : index
    %c0_50 = arith.constant 0 : index
    %100 = vector.load %arg3[%c8, %c0_49, %c0_50] : memref<9x4x16xf32, #tpu.memory_space<vmem>>, vector<1x4x16xf32>
    %101 = vector.shape_cast %100 : vector<1x4x16xf32> to vector<4x16xf32>
    %cst_51 = arith.constant dense<0.000000e+00> : vector<256x16xf32>
    %102 = tpu.matmul %99, %101, %cst_51 {dimension_numbers = #tpu.dot_dimension_numbers<[1], [0], [0], [1], [0, 0, 1, 1], [], []>} : vector<256x4xf32>, vector<4x16xf32>, vector<256x16xf32> -> vector<256x16xf32>
    %103 = arith.addf %92, %102 : vector<256x16xf32>
    %c0_52 = arith.constant 0 : index
    %c0_53 = arith.constant 0 : index
    %104 = vector.load %arg4[%c0_52, %c0_53] : memref<1x16xf32, #tpu.memory_space<vmem>>, vector<1x16xf32>
    %105 = vector.broadcast %104 : vector<1x16xf32> to vector<256x16xf32>
    %106 = arith.addf %103, %105 : vector<256x16xf32>
    %c0_54 = arith.constant 0 : index
    %c0_55 = arith.constant 0 : index
    %107 = vector.load %arg10[%c0_54, %c0_55] : memref<256x16xf32, #tpu.memory_space<vmem>>, vector<256x16xf32>
    tpu.vector_store %arg10[%c0_54, %c0_55], %106 {strides = array<i32>} : memref<256x16xf32, #tpu.memory_space<vmem>>, vector<256x16xf32>,
    %c128_i32 = arith.constant 128 : i32
    %108 = arith.muli %arg1, %c128_i32 : i32
    %109 = tpu.assume_multiple %108, 128 : i32
    %110 = arith.index_cast %109 : i32 to index
    %c0_56 = arith.constant 0 : index
    %111 = vector.load %arg10[%110, %c0_56] : memref<256x16xf32, #tpu.memory_space<vmem>>, vector<128x16xf32>
    %112 = arith.truncf %106 : vector<256x16xf32> to vector<256x16xbf16>
    %113 = arith.truncf %111 : vector<128x16xf32> to vector<128x16xbf16>
    %c0_57 = arith.constant 0 : index
    %c0_58 = arith.constant 0 : index
    %114 = vector.load %arg5[%c0_57, %c0_58] : memref<16x16xbf16, #tpu.memory_space<vmem>>, vector<16x16xbf16>
    %cst_59 = arith.constant dense<0.000000e+00> : vector<128x16xf32>
    %115 = tpu.matmul %113, %114, %cst_59 {dimension_numbers = #tpu.dot_dimension_numbers<[1], [0], [0], [1], [0, 0, 1, 1], [], []>} : vector<128x16xbf16>, vector<16x16xbf16>, vector<128x16xf32> -> vector<128x16xf32>
    %116 = arith.truncf %115 : vector<128x16xf32> to vector<128x16xbf16>
    %cst_60 = arith.constant dense<0.000000e+00> : vector<128x256xf32>
    %117 = tpu.matmul %116, %112, %cst_60 {dimension_numbers = #tpu.dot_dimension_numbers<[1], [1], [0], [0], [0, 0, 1, 0], [], []>} : vector<128x16xbf16>, vector<256x16xbf16>, vector<128x256xf32> -> vector<128x256xf32>
    %cst_61 = arith.constant dense<0xFF800000> : vector<128xf32>
    %118 = vector.multi_reduction <maximumf>, %117, %cst_61 [1] : vector<128x256xf32> to vector<128xf32>
    %119 = vector.shape_cast %118 : vector<128xf32> to vector<128x1xf32>
    %120 = vector.broadcast %119 : vector<128x1xf32> to vector<128x256xf32>
    %121 = arith.subf %117, %120 : vector<128x256xf32>
    %122 = math.exp %121 : vector<128x256xf32>
    %cst_62 = arith.constant dense<0.000000e+00> : vector<128xf32>
    %123 = vector.multi_reduction <add>, %122, %cst_62 [1] : vector<128x256xf32> to vector<128xf32>
    %124 = vector.shape_cast %123 : vector<128xf32> to vector<128x1xf32>
    %c0_63 = arith.constant 0 : index
    %c0_64 = arith.constant 0 : index
    %125 = vector.load %arg6[%c0_63, %c0_64] : memref<16x16xbf16, #tpu.memory_space<vmem>>, vector<16x16xbf16>
    %cst_65 = arith.constant dense<0.000000e+00> : vector<256x16xf32>
    %126 = tpu.matmul %112, %125, %cst_65 {dimension_numbers = #tpu.dot_dimension_numbers<[1], [0], [0], [1], [0, 0, 1, 1], [], []>} : vector<256x16xbf16>, vector<16x16xbf16>, vector<256x16xf32> -> vector<256x16xf32>
    %127 = arith.truncf %122 : vector<128x256xf32> to vector<128x256xbf16>
    %128 = arith.truncf %126 : vector<256x16xf32> to vector<256x16xbf16>
    %cst_66 = arith.constant dense<0.000000e+00> : vector<128x16xf32>
    %129 = tpu.matmul %127, %128, %cst_66 {dimension_numbers = #tpu.dot_dimension_numbers<[1], [0], [0], [1], [0, 0, 1, 1], [], []>} : vector<128x256xbf16>, vector<256x16xbf16>, vector<128x16xf32> -> vector<128x16xf32>
    %130 = tpu.reciprocal %124 {approx = true} : vector<128x1xf32> -> vector<128x1xf32>
    %131 = vector.broadcast %130 : vector<128x1xf32> to vector<128x16xf32>
    %132 = arith.mulf %129, %131 : vector<128x16xf32>
    %c0_67 = arith.constant 0 : index
    %133 = memref.load %arg8[%c0_67] : memref<2xf32, #tpu.memory_space<smem>>
    %c1_68 = arith.constant 1 : index
    %134 = memref.load %arg8[%c1_68] : memref<2xf32, #tpu.memory_space<smem>>
    %135 = vector.broadcast %133 : f32 to vector<128x16xf32>
    %136 = arith.mulf %135, %132 : vector<128x16xf32>
    %137 = arith.addf %136, %111 : vector<128x16xf32>
    %c0_69 = arith.constant 0 : index
    %c0_70 = arith.constant 0 : index
    %138 = vector.load %arg7[%c0_69, %c0_70] : memref<1x16xf32, #tpu.memory_space<vmem>>, vector<1x16xf32>
    %cst_71 = arith.constant dense<0.000000e+00> : vector<1x128xf32>
    %139 = tpu.matmul %138, %137, %cst_71 {dimension_numbers = #tpu.dot_dimension_numbers<[1], [1], [0], [0], [0, 0, 1, 0], [], []>} : vector<1x16xf32>, vector<128x16xf32>, vector<1x128xf32> -> vector<1x128xf32>
    %140 = vector.broadcast %134 : f32 to vector<1x128xf32>
    %141 = arith.addf %139, %140 : vector<1x128xf32>
    %c0_72 = arith.constant 0 : index
    %c0_73 = arith.constant 0 : index
    %c0_74 = arith.constant 0 : index
    %142 = vector.load %arg9[%c0_72, %c0_73, %c0_74] : memref<1x1x128xf32, #tpu.memory_space<vmem>>, vector<1x1x128xf32>
    %143 = vector.shape_cast %142 : vector<1x1x128xf32> to vector<1x128xf32>
    %144 = vector.shape_cast %141 : vector<1x128xf32> to vector<1x1x128xf32>
    tpu.vector_store %arg9[%c0_72, %c0_73, %c0_74], %144 {strides = array<i32>} : memref<1x1x128xf32, #tpu.memory_space<vmem>>, vector<1x1x128xf32>,
    return
  }
  func.func @transform_0(%arg0: i32, %arg1: i32) -> (i32, i32, i32) {
    %c0_i32 = arith.constant 0 : i32
    %c0_i32_0 = arith.constant 0 : i32
    %c0_i32_1 = arith.constant 0 : i32
    return %arg0, %c0_i32, %c0_i32_0 : i32, i32, i32
  }
  func.func @transform_1(%arg0: i32, %arg1: i32) -> (i32, i32, i32) {
    %c0_i32 = arith.constant 0 : i32
    %c0_i32_0 = arith.constant 0 : i32
    %c0_i32_1 = arith.constant 0 : i32
    %c0_i32_2 = arith.constant 0 : i32
    return %c0_i32, %c0_i32_0, %c0_i32_1 : i32, i32, i32
  }
  func.func @transform_2(%arg0: i32, %arg1: i32) -> (i32, i32) {
    %c0_i32 = arith.constant 0 : i32
    %c0_i32_0 = arith.constant 0 : i32
    %c0_i32_1 = arith.constant 0 : i32
    return %c0_i32, %c0_i32_0 : i32, i32
  }
  func.func @transform_3(%arg0: i32, %arg1: i32) -> (i32, i32) {
    %c0_i32 = arith.constant 0 : i32
    %c0_i32_0 = arith.constant 0 : i32
    %c0_i32_1 = arith.constant 0 : i32
    return %c0_i32, %c0_i32_0 : i32, i32
  }
  func.func @transform_4(%arg0: i32, %arg1: i32) -> (i32, i32) {
    %c0_i32 = arith.constant 0 : i32
    %c0_i32_0 = arith.constant 0 : i32
    %c0_i32_1 = arith.constant 0 : i32
    return %c0_i32, %c0_i32_0 : i32, i32
  }
  func.func @transform_5(%arg0: i32, %arg1: i32) -> (i32, i32) {
    %c0_i32 = arith.constant 0 : i32
    %c0_i32_0 = arith.constant 0 : i32
    %c0_i32_1 = arith.constant 0 : i32
    return %c0_i32, %c0_i32_0 : i32, i32
  }
  func.func @transform_6(%arg0: i32, %arg1: i32) -> i32 {
    %c0_i32 = arith.constant 0 : i32
    %c0_i32_0 = arith.constant 0 : i32
    return %c0_i32 : i32
  }
  func.func @transform_7(%arg0: i32, %arg1: i32) -> (i32, i32, i32) {
    %c0_i32 = arith.constant 0 : i32
    %c0_i32_0 = arith.constant 0 : i32
    return %arg0, %c0_i32, %arg1 : i32, i32, i32
  }
}

</mosaic_0001>

<llo_original>
// kernel: tpu_custom_call.1
$region0: #{tpu_custom_call.1}
  #allocation0 [shape = 'u32[]', space=smem, size = 0x4, offset = 0x4, fixed_abs, tag = 'smem constant byte address 0x4 - core index']
  #allocation1 [shape = 'u32[144,128]{1,0:T(1,128)}', space=vmem, size = 0x12000, scoped, tag = 'internal scratch']
  #allocation2 [shape = 'f32[256,16]{1,0:T(8,128)}', space=vmem, size = 0x20000, scoped, tag = 'scratch operand']
  %s0 = inlined_call_operand.vmem [shape: f32[2,256,4], index: 0, kind: input, shape index: {}]
  %s1 = inlined_call_operand.vmem [shape: f32[9,4,16], index: 1, kind: input, shape index: {}]
  %s2 = inlined_call_operand.vmem [shape: f32[1,16], index: 2, kind: input, shape index: {}]
  %s3 = inlined_call_operand.vmem [shape: bf16[16,16], index: 3, kind: input, shape index: {}]
  %s4 = inlined_call_operand.vmem [shape: bf16[16,16], index: 4, kind: input, shape index: {}]
  %s5 = inlined_call_operand.vmem [shape: f32[1,16], index: 5, kind: input, shape index: {}]
  %s6 = inlined_call_operand.vmem [shape: f32[2], index: 6, kind: input, shape index: {}]
  %s7 = inlined_call_operand.hbm [shape: f32[2,1,256], index: 7, kind: output, shape index: {}]
  %s8 = sld [smem:[#allocation0]]
  $region65: #{tpu_custom_call.1} parent=0
    _
  %s10 = ssub.s32 1, %s8
  %s11 = scalar_select 0, %s10, %s8
  $region1: #{tpu_custom_call.1} parent=0
    #allocation3 [shape = 'u8[512]{0}', space=smem, size = 0x200, scoped, tag = 'input window, operand 6, single buffered']
    #allocation4 [shape = 's32[2]{0}', space=sflag, size = 0x8, scoped, tag = 'scoped memory for tpu_custom_call.1']
    #allocation5 [shape = 's32[2]{0}', space=sflag, size = 0x8, scoped, tag = 'scoped memory for tpu_custom_call.1']
    #allocation6 [shape = 'u8[1024]{0}', space=vmem, size = 0x400, scoped, tag = 'output window, operand 0']
    %12 = vsyncpa [#allocation5], 0
    %13 = vsyncpa [#allocation4], 0
    %s14 = scalar_lea.sflag [#allocation4], 1
    %15 = vsyncpa %s14, 0
    loop: start=0, step=1, limit=6
    $region2: #{tpu_custom_call.1} parent=1 // loop_pre_header
      _
    $region3: #{tpu_custom_call.1} parent=1 // loop_header
      %s17 = sphi 0, %s21
      %p18 = scmp.ge.s32.totalorder %s17, 6
      %s24 = sphi 0, %s36
      %s25 = sphi 0, %s32
      %s26 = sphi 0, %s24
      %s27 = sphi 0, %s25
      %s28 = sphi 0, %s26
      %s29 = sphi 0, %s27
      %s39 = sphi 0, %s41
      %s42 = sphi 0, %s39
      %s43 = sphi 0, %s42
      %s59 = sphi 0, %s43
      %s63 = sphi 0, %s63
      %s65 = sphi 0, %s63
      %s66 = sphi 0, %s65
      %s80 = sphi 0, %s66
      %s84 = sphi 0, %s84
      %s86 = sphi 0, %s84
      %s87 = sphi 0, %s86
      %s101 = sphi 0, %s87
      %s105 = sphi 0, %s105
      %s107 = sphi 0, %s105
      %s108 = sphi 0, %s107
      %s122 = sphi 0, %s108
      %s126 = sphi 0, %s126
      %s128 = sphi 0, %s126
      %s129 = sphi 0, %s128
      %s143 = sphi 0, %s129
      %s147 = sphi 0, %s147
      %s149 = sphi 0, %s147
      %s150 = sphi 0, %s149
      %s164 = sphi 0, %s150
      %s168 = sphi 0, %s168
      %s170 = sphi 0, %s168
      %s171 = sphi 0, %s170
      %s185 = sphi 0, %s171
      %s193 = sphi 0, %s195
      %s196 = sphi 0, %s193
      %s197 = sphi 0, %s196
      %s213 = sphi 0, %s197
    $region4: #{tpu_custom_call.1} parent=1 // loop_header_branch
      %20 = sbr.rel (%p18) target = $region8
    $region5: #{tpu_custom_call.1} parent=1 // loop_body
      %s22 = ssub.s32 %s17, 1
      %s23 = ssub.s32 %s17, 2
      %s30 = sadd.s32 1, %s25
      %p31 = scmp.ge.s32.totalorder %s30, 2
      %s32 = scalar_select %p31, 0, %s30
      %s33 = sadd.s32 1, %s24
      %s34 = scalar_select %p31, %s33, %s24
      %p35 = scmp.ge.s32.totalorder %s34, 2
      %s36 = scalar_select %p35, 0, %s34
      %s37 = ssub.s32 %s24, %s36
      %p38 = scmp.eq.s32.totalorder %s37, 0
      %s40 = sadd.s32 %s39, 1
      %s41 = scalar_select %p38, %s39, %s40
      %p44 = pneg %p38
      %p45 = scmp.eq.s32.totalorder %s17, 3
      %p46 = por %p44, %p45
      %p47 = scmp.ne.s32.totalorder %s39, %s42
      %p48 = scmp.eq.s32.totalorder %s17, 0
      %p49 = por %p47, %p48
      %p50 = scmp.ne.s32.totalorder %s39, %s42
      %p51 = scmp.eq.s32.totalorder %s22, 3
      %p52 = por %p50, %p51
      %p53 = scmp.ne.s32.totalorder %s42, %s43
      %p54 = scmp.eq.s32.totalorder %s22, 0
      %p55 = por %p53, %p54
      %p56 = scmp.ne.s32.totalorder %s42, %s43
      %p57 = scmp.eq.s32.totalorder %s23, 3
      %p58 = por %p56, %p57
      %p60 = scmp.ne.s32.totalorder %s43, %s59
      %p61 = scmp.eq.s32.totalorder %s23, 0
      %p62 = por %p60, %p61
      %s64 = sadd.s32 %s63, 1
      %p67 = scmp.eq.s32.totalorder %s17, 3
      %p68 = scmp.ne.s32.totalorder %s63, %s65
      %p69 = scmp.eq.s32.totalorder %s17, 0
      %p70 = por %p68, %p69
      %p71 = scmp.ne.s32.totalorder %s63, %s65
      %p72 = scmp.eq.s32.totalorder %s22, 3
      %p73 = por %p71, %p72
      %p74 = scmp.ne.s32.totalorder %s65, %s66
      %p75 = scmp.eq.s32.totalorder %s22, 0
      %p76 = por %p74, %p75
      %p77 = scmp.ne.s32.totalorder %s65, %s66
      %p78 = scmp.eq.s32.totalorder %s23, 3
      %p79 = por %p77, %p78
      %p81 = scmp.ne.s32.totalorder %s66, %s80
      %p82 = scmp.eq.s32.totalorder %s23, 0
      %p83 = por %p81, %p82
      %s85 = sadd.s32 %s84, 1
      %p88 = scmp.eq.s32.totalorder %s17, 3
      %p89 = scmp.ne.s32.totalorder %s84, %s86
      %p90 = scmp.eq.s32.totalorder %s17, 0
      %p91 = por %p89, %p90
      %p92 = scmp.ne.s32.totalorder %s84, %s86
      %p93 = scmp.eq.s32.totalorder %s22, 3
      %p94 = por %p92, %p93
      %p95 = scmp.ne.s32.totalorder %s86, %s87
      %p96 = scmp.eq.s32.totalorder %s22, 0
      %p97 = por %p95, %p96
      %p98 = scmp.ne.s32.totalorder %s86, %s87
      %p99 = scmp.eq.s32.totalorder %s23, 3
      %p100 = por %p98, %p99
      %p102 = scmp.ne.s32.totalorder %s87, %s101
      %p103 = scmp.eq.s32.totalorder %s23, 0
      %p104 = por %p102, %p103
      %s106 = sadd.s32 %s105, 1
      %p109 = scmp.eq.s32.totalorder %s17, 3
      %p110 = scmp.ne.s32.totalorder %s105, %s107
      %p111 = scmp.eq.s32.totalorder %s17, 0
      %p112 = por %p110, %p111
      %p113 = scmp.ne.s32.totalorder %s105, %s107
      %p114 = scmp.eq.s32.totalorder %s22, 3
      %p115 = por %p113, %p114
      %p116 = scmp.ne.s32.totalorder %s107, %s108
      %p117 = scmp.eq.s32.totalorder %s22, 0
      %p118 = por %p116, %p117
      %p119 = scmp.ne.s32.totalorder %s107, %s108
      %p120 = scmp.eq.s32.totalorder %s23, 3
      %p121 = por %p119, %p120
      %p123 = scmp.ne.s32.totalorder %s108, %s122
      %p124 = scmp.eq.s32.totalorder %s23, 0
      %p125 = por %p123, %p124
      %s127 = sadd.s32 %s126, 1
      %p130 = scmp.eq.s32.totalorder %s17, 3
      %p131 = scmp.ne.s32.totalorder %s126, %s128
      %p132 = scmp.eq.s32.totalorder %s17, 0
      %p133 = por %p131, %p132
      %p134 = scmp.ne.s32.totalorder %s126, %s128
      %p135 = scmp.eq.s32.totalorder %s22, 3
      %p136 = por %p134, %p135
      %p137 = scmp.ne.s32.totalorder %s128, %s129
      %p138 = scmp.eq.s32.totalorder %s22, 0
      %p139 = por %p137, %p138
      %p140 = scmp.ne.s32.totalorder %s128, %s129
      %p141 = scmp.eq.s32.totalorder %s23, 3
      %p142 = por %p140, %p141
      %p144 = scmp.ne.s32.totalorder %s129, %s143
      %p145 = scmp.eq.s32.totalorder %s23, 0
      %p146 = por %p144, %p145
      %s148 = sadd.s32 %s147, 1
      %p151 = scmp.eq.s32.totalorder %s17, 3
      %p152 = scmp.ne.s32.totalorder %s147, %s149
      %p153 = scmp.eq.s32.totalorder %s17, 0
      %p154 = por %p152, %p153
      %p155 = scmp.ne.s32.totalorder %s147, %s149
      %p156 = scmp.eq.s32.totalorder %s22, 3
      %p157 = por %p155, %p156
      %p158 = scmp.ne.s32.totalorder %s149, %s150
      %p159 = scmp.eq.s32.totalorder %s22, 0
      %p160 = por %p158, %p159
      %p161 = scmp.ne.s32.totalorder %s149, %s150
      %p162 = scmp.eq.s32.totalorder %s23, 3
      %p163 = por %p161, %p162
      %p165 = scmp.ne.s32.totalorder %s150, %s164
      %p166 = scmp.eq.s32.totalorder %s23, 0
      %p167 = por %p165, %p166
      %s169 = sadd.s32 %s168, 1
      %p172 = scmp.eq.s32.totalorder %s17, 3
      %p173 = scmp.ne.s32.totalorder %s168, %s170
      %p174 = scmp.eq.s32.totalorder %s17, 0
      %p175 = por %p173, %p174
      %p176 = scmp.ne.s32.totalorder %s168, %s170
      %p177 = scmp.eq.s32.totalorder %s22, 3
      %p178 = por %p176, %p177
      %p179 = scmp.ne.s32.totalorder %s170, %s171
      %p180 = scmp.eq.s32.totalorder %s22, 0
      %p181 = por %p179, %p180
      %p182 = scmp.ne.s32.totalorder %s170, %s171
      %p183 = scmp.eq.s32.totalorder %s23, 3
      %p184 = por %p182, %p183
      %p186 = scmp.ne.s32.totalorder %s171, %s185
      %p187 = scmp.eq.s32.totalorder %s23, 0
      %p188 = por %p186, %p187
      %s189 = ssub.s32 %s24, %s36
      %s190 = ssub.s32 %s25, %s32
      %s191 = sor.u32 %s189, %s190
      %p192 = scmp.eq.s32.totalorder %s191, 0
      %s194 = sadd.s32 %s193, 1
      %s195 = scalar_select %p192, %s193, %s194
      %p198 = pneg %p192
      %p199 = scmp.eq.s32.totalorder %s17, 3
      %p200 = por %p198, %p199
      %p201 = scmp.ne.s32.totalorder %s193, %s196
      %p202 = scmp.eq.s32.totalorder %s17, 0
      %p203 = por %p201, %p202
      %p204 = scmp.ne.s32.totalorder %s193, %s196
      %p205 = scmp.eq.s32.totalorder %s22, 3
      %p206 = por %p204, %p205
      %p207 = scmp.ne.s32.totalorder %s196, %s197
      %p208 = scmp.eq.s32.totalorder %s22, 0
      %p209 = por %p207, %p208
      %p210 = scmp.ne.s32.totalorder %s196, %s197
      %p211 = scmp.eq.s32.totalorder %s23, 3
      %p212 = por %p210, %p211
      %p214 = scmp.ne.s32.totalorder %s197, %s213
      %p215 = scmp.eq.s32.totalorder %s23, 0
      %p216 = por %p214, %p215
      %p217 = scmp.le.s32.totalorder 1, %s17
      %p218 = scmp.lt.s32.totalorder %s17, 5
      %p219 = pnand %p217, %p218
      %p220 = pneg %p219
      // Predicated region
      $region9: #{tpu_custom_call.1} parent=5 // pred_check
        _
      $region10: #{tpu_custom_call.1} parent=5 // pred_check_branch
        %222 = sbr.rel (%p219) target = $region12
      $region11: #{tpu_custom_call.1} parent=5 // pred_region
        %s223 = ssub.s32 %s17, 1
        // Predicated region
        $region13: #{tpu_custom_call.1} parent=11 // pred_check
          %p224 = pneg %p76
        $region14: #{tpu_custom_call.1} parent=11 // pred_check_branch
          %226 = sbr.rel (%p224) target = $region16
        $region15: #{tpu_custom_call.1} parent=11 // pred_region
          _
        $region16: #{tpu_custom_call.1} parent=11 // pred_fallthru
          _
        // Predicated region
        $region17: #{tpu_custom_call.1} parent=11 // pred_check
          %p227 = pneg %p97
        $region18: #{tpu_custom_call.1} parent=11 // pred_check_branch
          %229 = sbr.rel (%p227) target = $region20
        $region19: #{tpu_custom_call.1} parent=11 // pred_region
          _
        $region20: #{tpu_custom_call.1} parent=11 // pred_fallthru
          _
        // Predicated region
        $region21: #{tpu_custom_call.1} parent=11 // pred_check
          %p230 = pneg %p118
        $region22: #{tpu_custom_call.1} parent=11 // pred_check_branch
          %232 = sbr.rel (%p230) target = $region24
        $region23: #{tpu_custom_call.1} parent=11 // pred_region
          _
        $region24: #{tpu_custom_call.1} parent=11 // pred_fallthru
          _
        // Predicated region
        $region25: #{tpu_custom_call.1} parent=11 // pred_check
          %p233 = pneg %p139
        $region26: #{tpu_custom_call.1} parent=11 // pred_check_branch
          %235 = sbr.rel (%p233) target = $region28
        $region27: #{tpu_custom_call.1} parent=11 // pred_region
          _
        $region28: #{tpu_custom_call.1} parent=11 // pred_fallthru
          _
        // Predicated region
        $region29: #{tpu_custom_call.1} parent=11 // pred_check
          %p236 = pneg %p160
        $region30: #{tpu_custom_call.1} parent=11 // pred_check_branch
          %238 = sbr.rel (%p236) target = $region32
        $region31: #{tpu_custom_call.1} parent=11 // pred_region
          _
        $region32: #{tpu_custom_call.1} parent=11 // pred_fallthru
          _
        // Predicated region
        $region33: #{tpu_custom_call.1} parent=11 // pred_check
          %p239 = pneg %p181
        $region34: #{tpu_custom_call.1} parent=11 // pred_check_branch
          %241 = sbr.rel (%p239) target = $region36
        $region35: #{tpu_custom_call.1} parent=11 // pred_region
          %s243 = ssub.s32 16, 16
          %244 = vsyncadd [#allocation5], %s243
          %s246 = sshll.u32 %s6, 4
          %s247 = int_to_ptr.vmem [resolvable:$true] %s246
          %249 = dma.vmem_to_smem %s247, 16, [#allocation3], [#allocation5]
        $region36: #{tpu_custom_call.1} parent=11 // pred_fallthru
          _
      $region12: #{tpu_custom_call.1} parent=5 // pred_fallthru
        _
      %p250 = scmp.lt.s32.totalorder %s17, 4
      // Predicated region
      $region37: #{tpu_custom_call.1} parent=5 // pred_check
        %p251 = pneg %p250
      $region38: #{tpu_custom_call.1} parent=5 // pred_check_branch
        %253 = sbr.rel (%p251) target = $region40
      $region39: #{tpu_custom_call.1} parent=5 // pred_region
        // Predicated region
        $region41: #{tpu_custom_call.1} parent=39 // pred_check
          %p254 = pneg %p49
        $region42: #{tpu_custom_call.1} parent=39 // pred_check_branch
          %256 = sbr.rel (%p254) target = $region44
        $region43: #{tpu_custom_call.1} parent=39 // pred_region
          %p257 = scmp.lt.s32.totalorder %s24, 1
          %s258 = scalar_select %p257, %s24, 1
          %s259 = smul.addr %s258, 32
          %s260 = smul.addr %s259, 8
          %s261 = scalar_lea.vmem %s0, %s260
        $region44: #{tpu_custom_call.1} parent=39 // pred_fallthru
          _
      $region40: #{tpu_custom_call.1} parent=5 // pred_fallthru
        _
      %p262 = scmp.le.s32.totalorder 1, %s17
      %p263 = scmp.lt.s32.totalorder %s17, 5
      %p264 = pnand %p262, %p263
      %p265 = pneg %p264
      // Predicated region
      $region45: #{tpu_custom_call.1} parent=5 // pred_check
        _
      $region46: #{tpu_custom_call.1} parent=5 // pred_check_branch
        %267 = sbr.rel (%p264) target = $region48
      $region47: #{tpu_custom_call.1} parent=5 // pred_region
        %s268 = ssub.s32 %s17, 1
        // Predicated region
        $region49: #{tpu_custom_call.1} parent=47 // pred_check
          %p269 = pneg %p181
        $region50: #{tpu_custom_call.1} parent=47 // pred_check_branch
          %271 = sbr.rel (%p269) target = $region52
        $region51: #{tpu_custom_call.1} parent=47 // pred_region
          %272 = dma.done [#allocation5], 16
        $region52: #{tpu_custom_call.1} parent=47 // pred_fallthru
          _
        %273 = sfence
        %p274 = scmp.lt.s32.totalorder %s26, 1
        %s275 = scalar_select %p274, %s26, 1
        %s276 = smul.addr %s275, 32
        %s277 = smul.addr %s276, 8
        %s278 = scalar_lea.vmem %s0, %s277
        %p279 = pneg %p55
        %p280 = pneg %p52
        %p281 = pneg %p76
        %p282 = pneg %p73
        %p283 = pneg %p97
        %p284 = pneg %p94
        %p285 = pneg %p118
        %p286 = pneg %p115
        %p287 = pneg %p139
        %p288 = pneg %p136
        %p289 = pneg %p160
        %p290 = pneg %p157
        %p291 = pneg %p181
        %p292 = pneg %p178
        %p293 = pneg %p209
        %p294 = pneg %p206
        %s295 = sand.u32 %s196, 1
        %s296 = scalar_lea.sflag [#allocation4], %s295
        %s297 = sand.u32 %s196, 1
        %s298 = scalar_lea.vmem [#allocation6], %s297
        %p299 = scmp.lt.s32.totalorder %s26, 1
        %s300 = scalar_select %p299, %s26, 1
        %s301 = smul.addr %s300, 32
        %s302 = smul.addr %s301, 8
        %s303 = scalar_lea.vmem %s0, %s302
        %v305 = vld [vmem:[%s303] sm:$0xff]
        %v306 = vld [vmem:[%s303 + $0x8] sm:$0xff]
        %v307 = vld [vmem:[%s303 + $0x10] sm:$0xff]
        %v308 = vld [vmem:[%s303 + $0x18] sm:$0xff]
        %v309 = vld [vmem:[%s303 + $0x20] sm:$0xff]
        %v310 = vld [vmem:[%s303 + $0x28] sm:$0xff]
        %v311 = vld [vmem:[%s303 + $0x30] sm:$0xff]
        %v312 = vld [vmem:[%s303 + $0x38] sm:$0xff]
        %v313 = vld [vmem:[%s303 + $0x40] sm:$0xff]
        %v314 = vld [vmem:[%s303 + $0x48] sm:$0xff]
        %v315 = vld [vmem:[%s303 + $0x50] sm:$0xff]
        %v316 = vld [vmem:[%s303 + $0x58] sm:$0xff]
        %v317 = vld [vmem:[%s303 + $0x60] sm:$0xff]
        %v318 = vld [vmem:[%s303 + $0x68] sm:$0xff]
        %v319 = vld [vmem:[%s303 + $0x70] sm:$0xff]
        %v320 = vld [vmem:[%s303 + $0x78] sm:$0xff]
        %v321 = vld [vmem:[%s303 + $0x80] sm:$0xff]
        %v322 = vld [vmem:[%s303 + $0x88] sm:$0xff]
        %v323 = vld [vmem:[%s303 + $0x90] sm:$0xff]
        %v324 = vld [vmem:[%s303 + $0x98] sm:$0xff]
        %v325 = vld [vmem:[%s303 + $0xa0] sm:$0xff]
        %v326 = vld [vmem:[%s303 + $0xa8] sm:$0xff]
        %v327 = vld [vmem:[%s303 + $0xb0] sm:$0xff]
        %v328 = vld [vmem:[%s303 + $0xb8] sm:$0xff]
        %v329 = vld [vmem:[%s303 + $0xc0] sm:$0xff]
        %v330 = vld [vmem:[%s303 + $0xc8] sm:$0xff]
        %v331 = vld [vmem:[%s303 + $0xd0] sm:$0xff]
        %v332 = vld [vmem:[%s303 + $0xd8] sm:$0xff]
        %v333 = vld [vmem:[%s303 + $0xe0] sm:$0xff]
        %v334 = vld [vmem:[%s303 + $0xe8] sm:$0xff]
        %v335 = vld [vmem:[%s303 + $0xf0] sm:$0xff]
        %v336 = vld [vmem:[%s303 + $0xf8] sm:$0xff]
        %v337 = vlaneseq
        %v338 = vshrl.u32 %v337, 7
        %v339 = vadd.s32 %v338, 8
        %v340 = vadd.s32 %v338, 16
        %v341 = vadd.s32 %v338, 24
        %v342 = vadd.s32 %v338, 32
        %v343 = vadd.s32 %v338, 40
        %v344 = vadd.s32 %v338, 48
        %v345 = vadd.s32 %v338, 56
        %v346 = vadd.s32 %v338, 64
        %v347 = vadd.s32 %v338, 72
        %v348 = vadd.s32 %v338, 80
        %v349 = vadd.s32 %v338, 88
        %v350 = vadd.s32 %v338, 96
        %v351 = vadd.s32 %v338, 104
        %v352 = vadd.s32 %v338, 112
        %v353 = vadd.s32 %v338, 120
        %v354 = vadd.s32 %v338, 128
        %v355 = vadd.s32 %v338, 136
        %v356 = vadd.s32 %v338, 144
        %v357 = vadd.s32 %v338, 152
        %v358 = vadd.s32 %v338, 160
        %v359 = vadd.s32 %v338, 168
        %v360 = vadd.s32 %v338, 176
        %v361 = vadd.s32 %v338, 184
        %v362 = vadd.s32 %v338, 192
        %v363 = vadd.s32 %v338, 200
        %v364 = vadd.s32 %v338, 208
        %v365 = vadd.s32 %v338, 216
        %v366 = vadd.s32 %v338, 224
        %v367 = vadd.s32 %v338, 232
        %v368 = vadd.s32 %v338, 240
        %v369 = vadd.s32 %v338, 248
        %vm370 = vcmp.lt.s32.totalorder %v338, 0
        %v371 = vsub.s32 0, %v338
        %v372 = vsel %vm370, %v371, %v338
        %v373 = vshrl.u32 %v372, 4
        %v374 = vand.u32 %v372, 15
        %v375 = vsub.s32 0, %v374
        %v376 = vsel %vm370, %v375, %v374
        %vm377 = vcmp.lt.s32.totalorder %v339, 0
        %v378 = vsub.s32 0, %v339
        %v379 = vsel %vm377, %v378, %v339
        %v380 = vshrl.u32 %v379, 4
        %v381 = vand.u32 %v379, 15
        %v382 = vsub.s32 0, %v381
        %v383 = vsel %vm377, %v382, %v381
        %vm384 = vcmp.lt.s32.totalorder %v340, 0
        %v385 = vsub.s32 0, %v340
        %v386 = vsel %vm384, %v385, %v340
        %v387 = vshrl.u32 %v386, 4
        %v388 = vand.u32 %v386, 15
        %v389 = vsub.s32 0, %v388
        %v390 = vsel %vm384, %v389, %v388
        %vm391 = vcmp.lt.s32.totalorder %v341, 0
        %v392 = vsub.s32 0, %v341
        %v393 = vsel %vm391, %v392, %v341
        %v394 = vshrl.u32 %v393, 4
        %v395 = vand.u32 %v393, 15
        %v396 = vsub.s32 0, %v395
        %v397 = vsel %vm391, %v396, %v395
        %vm398 = vcmp.lt.s32.totalorder %v342, 0
        %v399 = vsub.s32 0, %v342
        %v400 = vsel %vm398, %v399, %v342
        %v401 = vshrl.u32 %v400, 4
        %v402 = vand.u32 %v400, 15
        %v403 = vsub.s32 0, %v402
        %v404 = vsel %vm398, %v403, %v402
        %vm405 = vcmp.lt.s32.totalorder %v343, 0
        %v406 = vsub.s32 0, %v343
        %v407 = vsel %vm405, %v406, %v343
        %v408 = vshrl.u32 %v407, 4
        %v409 = vand.u32 %v407, 15
        %v410 = vsub.s32 0, %v409
        %v411 = vsel %vm405, %v410, %v409
        %vm412 = vcmp.lt.s32.totalorder %v344, 0
        %v413 = vsub.s32 0, %v344
        %v414 = vsel %vm412, %v413, %v344
        %v415 = vshrl.u32 %v414, 4
        %v416 = vand.u32 %v414, 15
        %v417 = vsub.s32 0, %v416
        %v418 = vsel %vm412, %v417, %v416
        %vm419 = vcmp.lt.s32.totalorder %v345, 0
        %v420 = vsub.s32 0, %v345
        %v421 = vsel %vm419, %v420, %v345
        %v422 = vshrl.u32 %v421, 4
        %v423 = vand.u32 %v421, 15
        %v424 = vsub.s32 0, %v423
        %v425 = vsel %vm419, %v424, %v423
        %vm426 = vcmp.lt.s32.totalorder %v346, 0
        %v427 = vsub.s32 0, %v346
        %v428 = vsel %vm426, %v427, %v346
        %v429 = vshrl.u32 %v428, 4
        %v430 = vand.u32 %v428, 15
        %v431 = vsub.s32 0, %v430
        %v432 = vsel %vm426, %v431, %v430
        %vm433 = vcmp.lt.s32.totalorder %v347, 0
        %v434 = vsub.s32 0, %v347
        %v435 = vsel %vm433, %v434, %v347
        %v436 = vshrl.u32 %v435, 4
        %v437 = vand.u32 %v435, 15
        %v438 = vsub.s32 0, %v437
        %v439 = vsel %vm433, %v438, %v437
        %vm440 = vcmp.lt.s32.totalorder %v348, 0
        %v441 = vsub.s32 0, %v348
        %v442 = vsel %vm440, %v441, %v348
        %v443 = vshrl.u32 %v442, 4
        %v444 = vand.u32 %v442, 15
        %v445 = vsub.s32 0, %v444
        %v446 = vsel %vm440, %v445, %v444
        %vm447 = vcmp.lt.s32.totalorder %v349, 0
        %v448 = vsub.s32 0, %v349
        %v449 = vsel %vm447, %v448, %v349
        %v450 = vshrl.u32 %v449, 4
        %v451 = vand.u32 %v449, 15
        %v452 = vsub.s32 0, %v451
        %v453 = vsel %vm447, %v452, %v451
        %vm454 = vcmp.lt.s32.totalorder %v350, 0
        %v455 = vsub.s32 0, %v350
        %v456 = vsel %vm454, %v455, %v350
        %v457 = vshrl.u32 %v456, 4
        %v458 = vand.u32 %v456, 15
        %v459 = vsub.s32 0, %v458
        %v460 = vsel %vm454, %v459, %v458
        %vm461 = vcmp.lt.s32.totalorder %v351, 0
        %v462 = vsub.s32 0, %v351
        %v463 = vsel %vm461, %v462, %v351
        %v464 = vshrl.u32 %v463, 4
        %v465 = vand.u32 %v463, 15
        %v466 = vsub.s32 0, %v465
        %v467 = vsel %vm461, %v466, %v465
        %vm468 = vcmp.lt.s32.totalorder %v352, 0
        %v469 = vsub.s32 0, %v352
        %v470 = vsel %vm468, %v469, %v352
        %v471 = vshrl.u32 %v470, 4
        %v472 = vand.u32 %v470, 15
        %v473 = vsub.s32 0, %v472
        %v474 = vsel %vm468, %v473, %v472
        %vm475 = vcmp.lt.s32.totalorder %v353, 0
        %v476 = vsub.s32 0, %v353
        %v477 = vsel %vm475, %v476, %v353
        %v478 = vshrl.u32 %v477, 4
        %v479 = vand.u32 %v477, 15
        %v480 = vsub.s32 0, %v479
        %v481 = vsel %vm475, %v480, %v479
        %vm482 = vcmp.lt.s32.totalorder %v354, 0
        %v483 = vsub.s32 0, %v354
        %v484 = vsel %vm482, %v483, %v354
        %v485 = vshrl.u32 %v484, 4
        %v486 = vand.u32 %v484, 15
        %v487 = vsub.s32 0, %v486
        %v488 = vsel %vm482, %v487, %v486
        %vm489 = vcmp.lt.s32.totalorder %v355, 0
        %v490 = vsub.s32 0, %v355
        %v491 = vsel %vm489, %v490, %v355
        %v492 = vshrl.u32 %v491, 4
        %v493 = vand.u32 %v491, 15
        %v494 = vsub.s32 0, %v493
        %v495 = vsel %vm489, %v494, %v493
        %vm496 = vcmp.lt.s32.totalorder %v356, 0
        %v497 = vsub.s32 0, %v356
        %v498 = vsel %vm496, %v497, %v356
        %v499 = vshrl.u32 %v498, 4
        %v500 = vand.u32 %v498, 15
        %v501 = vsub.s32 0, %v500
        %v502 = vsel %vm496, %v501, %v500
        %vm503 = vcmp.lt.s32.totalorder %v357, 0
        %v504 = vsub.s32 0, %v357
        %v505 = vsel %vm503, %v504, %v357
        %v506 = vshrl.u32 %v505, 4
        %v507 = vand.u32 %v505, 15
        %v508 = vsub.s32 0, %v507
        %v509 = vsel %vm503, %v508, %v507
        %vm510 = vcmp.lt.s32.totalorder %v358, 0
        %v511 = vsub.s32 0, %v358
        %v512 = vsel %vm510, %v511, %v358
        %v513 = vshrl.u32 %v512, 4
        %v514 = vand.u32 %v512, 15
        %v515 = vsub.s32 0, %v514
        %v516 = vsel %vm510, %v515, %v514
        %vm517 = vcmp.lt.s32.totalorder %v359, 0
        %v518 = vsub.s32 0, %v359
        %v519 = vsel %vm517, %v518, %v359
        %v520 = vshrl.u32 %v519, 4
        %v521 = vand.u32 %v519, 15
        %v522 = vsub.s32 0, %v521
        %v523 = vsel %vm517, %v522, %v521
        %vm524 = vcmp.lt.s32.totalorder %v360, 0
        %v525 = vsub.s32 0, %v360
        %v526 = vsel %vm524, %v525, %v360
        %v527 = vshrl.u32 %v526, 4
        %v528 = vand.u32 %v526, 15
        %v529 = vsub.s32 0, %v528
        %v530 = vsel %vm524, %v529, %v528
        %vm531 = vcmp.lt.s32.totalorder %v361, 0
        %v532 = vsub.s32 0, %v361
        %v533 = vsel %vm531, %v532, %v361
        %v534 = vshrl.u32 %v533, 4
        %v535 = vand.u32 %v533, 15
        %v536 = vsub.s32 0, %v535
        %v537 = vsel %vm531, %v536, %v535
        %vm538 = vcmp.lt.s32.totalorder %v362, 0
        %v539 = vsub.s32 0, %v362
        %v540 = vsel %vm538, %v539, %v362
        %v541 = vshrl.u32 %v540, 4
        %v542 = vand.u32 %v540, 15
        %v543 = vsub.s32 0, %v542
        %v544 = vsel %vm538, %v543, %v542
        %vm545 = vcmp.lt.s32.totalorder %v363, 0
        %v546 = vsub.s32 0, %v363
        %v547 = vsel %vm545, %v546, %v363
        %v548 = vshrl.u32 %v547, 4
        %v549 = vand.u32 %v547, 15
        %v550 = vsub.s32 0, %v549
        %v551 = vsel %vm545, %v550, %v549
        %vm552 = vcmp.lt.s32.totalorder %v364, 0
        %v553 = vsub.s32 0, %v364
        %v554 = vsel %vm552, %v553, %v364
        %v555 = vshrl.u32 %v554, 4
        %v556 = vand.u32 %v554, 15
        %v557 = vsub.s32 0, %v556
        %v558 = vsel %vm552, %v557, %v556
        %vm559 = vcmp.lt.s32.totalorder %v365, 0
        %v560 = vsub.s32 0, %v365
        %v561 = vsel %vm559, %v560, %v365
        %v562 = vshrl.u32 %v561, 4
        %v563 = vand.u32 %v561, 15
        %v564 = vsub.s32 0, %v563
        %v565 = vsel %vm559, %v564, %v563
        %vm566 = vcmp.lt.s32.totalorder %v366, 0
        %v567 = vsub.s32 0, %v366
        %v568 = vsel %vm566, %v567, %v366
        %v569 = vshrl.u32 %v568, 4
        %v570 = vand.u32 %v568, 15
        %v571 = vsub.s32 0, %v570
        %v572 = vsel %vm566, %v571, %v570
        %vm573 = vcmp.lt.s32.totalorder %v367, 0
        %v574 = vsub.s32 0, %v367
        %v575 = vsel %vm573, %v574, %v367
        %v576 = vshrl.u32 %v575, 4
        %v577 = vand.u32 %v575, 15
        %v578 = vsub.s32 0, %v577
        %v579 = vsel %vm573, %v578, %v577
        %vm580 = vcmp.lt.s32.totalorder %v368, 0
        %v581 = vsub.s32 0, %v368
        %v582 = vsel %vm580, %v581, %v368
        %v583 = vshrl.u32 %v582, 4
        %v584 = vand.u32 %v582, 15
        %v585 = vsub.s32 0, %v584
        %v586 = vsel %vm580, %v585, %v584
        %vm587 = vcmp.lt.s32.totalorder %v369, 0
        %v588 = vsub.s32 0, %v369
        %v589 = vsel %vm587, %v588, %v369
        %v590 = vshrl.u32 %v589, 4
        %v591 = vand.u32 %v589, 15
        %v592 = vsub.s32 0, %v591
        %v593 = vsel %vm587, %v592, %v591
        %vm594 = vcmp.ne.s32.totalorder %v376, 0
        %vm595 = vcmp.ne.s32.totalorder %v383, 0
        %vm596 = vcmp.ne.s32.totalorder %v390, 0
        %vm597 = vcmp.ne.s32.totalorder %v397, 0
        %vm598 = vcmp.ne.s32.totalorder %v404, 0
        %vm599 = vcmp.ne.s32.totalorder %v411, 0
        %vm600 = vcmp.ne.s32.totalorder %v418, 0
        %vm601 = vcmp.ne.s32.totalorder %v425, 0
        %vm602 = vcmp.ne.s32.totalorder %v432, 0
        %vm603 = vcmp.ne.s32.totalorder %v439, 0
        %vm604 = vcmp.ne.s32.totalorder %v446, 0
        %vm605 = vcmp.ne.s32.totalorder %v453, 0
        %vm606 = vcmp.ne.s32.totalorder %v460, 0
        %vm607 = vcmp.ne.s32.totalorder %v467, 0
        %vm608 = vcmp.ne.s32.totalorder %v474, 0
        %vm609 = vcmp.ne.s32.totalorder %v481, 0
        %vm610 = vcmp.ne.s32.totalorder %v488, 0
        %vm611 = vcmp.ne.s32.totalorder %v495, 0
        %vm612 = vcmp.ne.s32.totalorder %v502, 0
        %vm613 = vcmp.ne.s32.totalorder %v509, 0
        %vm614 = vcmp.ne.s32.totalorder %v516, 0
        %vm615 = vcmp.ne.s32.totalorder %v523, 0
        %vm616 = vcmp.ne.s32.totalorder %v530, 0
        %vm617 = vcmp.ne.s32.totalorder %v537, 0
        %vm618 = vcmp.ne.s32.totalorder %v544, 0
        %vm619 = vcmp.ne.s32.totalorder %v551, 0
        %vm620 = vcmp.ne.s32.totalorder %v558, 0
        %vm621 = vcmp.ne.s32.totalorder %v565, 0
        %vm622 = vcmp.ne.s32.totalorder %v572, 0
        %vm623 = vcmp.ne.s32.totalorder %v579, 0
        %vm624 = vcmp.ne.s32.totalorder %v586, 0
        %vm625 = vcmp.ne.s32.totalorder %v593, 0
        %vm626 = vcmp.lt.s32.totalorder %v376, 0
        %vm627 = vcmp.lt.s32.totalorder %v383, 0
        %vm628 = vcmp.lt.s32.totalorder %v390, 0
        %vm629 = vcmp.lt.s32.totalorder %v397, 0
        %vm630 = vcmp.lt.s32.totalorder %v404, 0
        %vm631 = vcmp.lt.s32.totalorder %v411, 0
        %vm632 = vcmp.lt.s32.totalorder %v418, 0
        %vm633 = vcmp.lt.s32.totalorder %v425, 0
        %vm634 = vcmp.lt.s32.totalorder %v432, 0
        %vm635 = vcmp.lt.s32.totalorder %v439, 0
        %vm636 = vcmp.lt.s32.totalorder %v446, 0
        %vm637 = vcmp.lt.s32.totalorder %v453, 0
        %vm638 = vcmp.lt.s32.totalorder %v460, 0
        %vm639 = vcmp.lt.s32.totalorder %v467, 0
        %vm640 = vcmp.lt.s32.totalorder %v474, 0
        %vm641 = vcmp.lt.s32.totalorder %v481, 0
        %vm642 = vcmp.lt.s32.totalorder %v488, 0
        %vm643 = vcmp.lt.s32.totalorder %v495, 0
        %vm644 = vcmp.lt.s32.totalorder %v502, 0
        %vm645 = vcmp.lt.s32.totalorder %v509, 0
        %vm646 = vcmp.lt.s32.totalorder %v516, 0
        %vm647 = vcmp.lt.s32.totalorder %v523, 0
        %vm648 = vcmp.lt.s32.totalorder %v530, 0
        %vm649 = vcmp.lt.s32.totalorder %v537, 0
        %vm650 = vcmp.lt.s32.totalorder %v544, 0
        %vm651 = vcmp.lt.s32.totalorder %v551, 0
        %vm652 = vcmp.lt.s32.totalorder %v558, 0
        %vm653 = vcmp.lt.s32.totalorder %v565, 0
        %vm654 = vcmp.lt.s32.totalorder %v572, 0
        %vm655 = vcmp.lt.s32.totalorder %v579, 0
        %vm656 = vcmp.lt.s32.totalorder %v586, 0
        %vm657 = vcmp.lt.s32.totalorder %v593, 0
        %vm658 = vmand %vm626, %vm594
        %vm659 = vmand %vm627, %vm595
        %vm660 = vmand %vm628, %vm596
        %vm661 = vmand %vm629, %vm597
        %vm662 = vmand %vm630, %vm598
        %vm663 = vmand %vm631, %vm599
        %vm664 = vmand %vm632, %vm600
        %vm665 = vmand %vm633, %vm601
        %vm666 = vmand %vm634, %vm602
        %vm667 = vmand %vm635, %vm603
        %vm668 = vmand %vm636, %vm604
        %vm669 = vmand %vm637, %vm605
        %vm670 = vmand %vm638, %vm606
        %vm671 = vmand %vm639, %vm607
        %vm672 = vmand %vm640, %vm608
        %vm673 = vmand %vm641, %vm609
        %vm674 = vmand %vm642, %vm610
        %vm675 = vmand %vm643, %vm611
        %vm676 = vmand %vm644, %vm612
        %vm677 = vmand %vm645, %vm613
        %vm678 = vmand %vm646, %vm614
        %vm679 = vmand %vm647, %vm615
        %vm680 = vmand %vm648, %vm616
        %vm681 = vmand %vm649, %vm617
        %vm682 = vmand %vm650, %vm618
        %vm683 = vmand %vm651, %vm619
        %vm684 = vmand %vm652, %vm620
        %vm685 = vmand %vm653, %vm621
        %vm686 = vmand %vm654, %vm622
        %vm687 = vmand %vm655, %vm623
        %vm688 = vmand %vm656, %vm624
        %vm689 = vmand %vm657, %vm625
        %v690 = vadd.s32 %v376, 16
        %v691 = vadd.s32 %v383, 16
        %v692 = vadd.s32 %v390, 16
        %v693 = vadd.s32 %v397, 16
        %v694 = vadd.s32 %v404, 16
        %v695 = vadd.s32 %v411, 16
        %v696 = vadd.s32 %v418, 16
        %v697 = vadd.s32 %v425, 16
        %v698 = vadd.s32 %v432, 16
        %v699 = vadd.s32 %v439, 16
        %v700 = vadd.s32 %v446, 16
        %v701 = vadd.s32 %v453, 16
        %v702 = vadd.s32 %v460, 16
        %v703 = vadd.s32 %v467, 16
        %v704 = vadd.s32 %v474, 16
        %v705 = vadd.s32 %v481, 16
        %v706 = vadd.s32 %v488, 16
        %v707 = vadd.s32 %v495, 16
        %v708 = vadd.s32 %v502, 16
        %v709 = vadd.s32 %v509, 16
        %v710 = vadd.s32 %v516, 16
        %v711 = vadd.s32 %v523, 16
        %v712 = vadd.s32 %v530, 16
        %v713 = vadd.s32 %v537, 16
        %v714 = vadd.s32 %v544, 16
        %v715 = vadd.s32 %v551, 16
        %v716 = vadd.s32 %v558, 16
        %v717 = vadd.s32 %v565, 16
        %v718 = vadd.s32 %v572, 16
        %v719 = vadd.s32 %v579, 16
        %v720 = vadd.s32 %v586, 16
        %v721 = vadd.s32 %v593, 16
        %v722 = vsel %vm658, %v690, %v376
        %v723 = vsel %vm659, %v691, %v383
        %v724 = vsel %vm660, %v692, %v390
        %v725 = vsel %vm661, %v693, %v397
        %v726 = vsel %vm662, %v694, %v404
        %v727 = vsel %vm663, %v695, %v411
        %v728 = vsel %vm664, %v696, %v418
        %v729 = vsel %vm665, %v697, %v425
        %v730 = vsel %vm666, %v698, %v432
        %v731 = vsel %vm667, %v699, %v439
        %v732 = vsel %vm668, %v700, %v446
        %v733 = vsel %vm669, %v701, %v453
        %v734 = vsel %vm670, %v702, %v460
        %v735 = vsel %vm671, %v703, %v467
        %v736 = vsel %vm672, %v704, %v474
        %v737 = vsel %vm673, %v705, %v481
        %v738 = vsel %vm674, %v706, %v488
        %v739 = vsel %vm675, %v707, %v495
        %v740 = vsel %vm676, %v708, %v502
        %v741 = vsel %vm677, %v709, %v509
        %v742 = vsel %vm678, %v710, %v516
        %v743 = vsel %vm679, %v711, %v523
        %v744 = vsel %vm680, %v712, %v530
        %v745 = vsel %vm681, %v713, %v537
        %v746 = vsel %vm682, %v714, %v544
        %v747 = vsel %vm683, %v715, %v551
        %v748 = vsel %vm684, %v716, %v558
        %v749 = vsel %vm685, %v717, %v565
        %v750 = vsel %vm686, %v718, %v572
        %v751 = vsel %vm687, %v719, %v579
        %v752 = vsel %vm688, %v720, %v586
        %v753 = vsel %vm689, %v721, %v593
        %vm784 = vcmask 1040384
        %v785 = vrot.slane %v305, 7
        %v786 = vrot.slane %v306, 7
        %v787 = vsel %vm784, %v785, %v786
        %v788 = vrot.slane %v307, 7
        %v789 = vsel %vm784, %v786, %v788
        %v790 = vrot.slane %v308, 7
        %v791 = vsel %vm784, %v788, %v790
        %v792 = vrot.slane %v309, 7
        %v793 = vsel %vm784, %v790, %v792
        %v794 = vrot.slane %v310, 7
        %v795 = vsel %vm784, %v792, %v794
        %v796 = vrot.slane %v311, 7
        %v797 = vsel %vm784, %v794, %v796
        %v798 = vrot.slane %v312, 7
        %v799 = vsel %vm784, %v796, %v798
        %v800 = vrot.slane %v313, 7
        %v801 = vsel %vm784, %v798, %v800
        %v802 = vrot.slane %v314, 7
        %v803 = vsel %vm784, %v800, %v802
        %v804 = vrot.slane %v315, 7
        %v805 = vsel %vm784, %v802, %v804
        %v806 = vrot.slane %v316, 7
        %v807 = vsel %vm784, %v804, %v806
        %v808 = vrot.slane %v317, 7
        %v809 = vsel %vm784, %v806, %v808
        %v810 = vrot.slane %v318, 7
        %v811 = vsel %vm784, %v808, %v810
        %v812 = vrot.slane %v319, 7
        %v813 = vsel %vm784, %v810, %v812
        %v814 = vrot.slane %v320, 7
        %v815 = vsel %vm784, %v812, %v814
        %v816 = vrot.slane %v321, 7
        %v817 = vsel %vm784, %v814, %v816
        %v818 = vrot.slane %v322, 7
        %v819 = vsel %vm784, %v816, %v818
        %v820 = vrot.slane %v323, 7
        %v821 = vsel %vm784, %v818, %v820
        %v822 = vrot.slane %v324, 7
        %v823 = vsel %vm784, %v820, %v822
        %v824 = vrot.slane %v325, 7
        %v825 = vsel %vm784, %v822, %v824
        %v826 = vrot.slane %v326, 7
        %v827 = vsel %vm784, %v824, %v826
        %v828 = vrot.slane %v327, 7
        %v829 = vsel %vm784, %v826, %v828
        %v830 = vrot.slane %v328, 7
        %v831 = vsel %vm784, %v828, %v830
        %v832 = vrot.slane %v329, 7
        %v833 = vsel %vm784, %v830, %v832
        %v834 = vrot.slane %v330, 7
        %v835 = vsel %vm784, %v832, %v834
        %v836 = vrot.slane %v331, 7
        %v837 = vsel %vm784, %v834, %v836
        %v838 = vrot.slane %v332, 7
        %v839 = vsel %vm784, %v836, %v838
        %v840 = vrot.slane %v333, 7
        %v841 = vsel %vm784, %v838, %v840
        %v842 = vrot.slane %v334, 7
        %v843 = vsel %vm784, %v840, %v842
        %v874 = vsel %vm784, 0.0, %v785
        %vm875 = vcmp.ge.s32.totalorder %v722, 1
        %vm876 = vcmp.ge.s32.totalorder %v723, 1
        %vm877 = vcmp.ge.s32.totalorder %v724, 1
        %vm878 = vcmp.ge.s32.totalorder %v725, 1
        %vm879 = vcmp.ge.s32.totalorder %v726, 1
        %vm880 = vcmp.ge.s32.totalorder %v727, 1
        %vm881 = vcmp.ge.s32.totalorder %v728, 1
        %vm882 = vcmp.ge.s32.totalorder %v729, 1
        %vm883 = vcmp.ge.s32.totalorder %v730, 1
        %vm884 = vcmp.ge.s32.totalorder %v731, 1
        %vm885 = vcmp.ge.s32.totalorder %v732, 1
        %vm886 = vcmp.ge.s32.totalorder %v733, 1
        %vm887 = vcmp.ge.s32.totalorder %v734, 1
        %vm888 = vcmp.ge.s32.totalorder %v735, 1
        %vm889 = vcmp.ge.s32.totalorder %v736, 1
        %vm890 = vcmp.ge.s32.totalorder %v737, 1
        %vm891 = vcmp.ge.s32.totalorder %v738, 1
        %vm892 = vcmp.ge.s32.totalorder %v739, 1
        %vm893 = vcmp.ge.s32.totalorder %v740, 1
        %vm894 = vcmp.ge.s32.totalorder %v741, 1
        %vm895 = vcmp.ge.s32.totalorder %v742, 1
        %vm896 = vcmp.ge.s32.totalorder %v743, 1
        %vm897 = vcmp.ge.s32.totalorder %v744, 1
        %vm898 = vcmp.ge.s32.totalorder %v745, 1
        %vm899 = vcmp.ge.s32.totalorder %v746, 1
        %vm900 = vcmp.ge.s32.totalorder %v747, 1
        %vm901 = vcmp.ge.s32.totalorder %v748, 1
        %vm902 = vcmp.ge.s32.totalorder %v749, 1
        %vm903 = vcmp.ge.s32.totalorder %v750, 1
        %vm904 = vcmp.ge.s32.totalorder %v751, 1
        %vm905 = vcmp.ge.s32.totalorder %v752, 1
        %vm906 = vcmp.ge.s32.totalorder %v753, 1
        %v907 = vsel %vm877, %v874, 0.0
        %v908 = vsel %vm878, %v787, 0.0
        %v909 = vsel %vm879, %v789, 0.0
        %v910 = vsel %vm880, %v791, 0.0
        %v911 = vsel %vm881, %v793, 0.0
        %v912 = vsel %vm882, %v795, 0.0
        %v913 = vsel %vm883, %v797, 0.0
        %v914 = vsel %vm884, %v799, 0.0
        %v915 = vsel %vm885, %v801, 0.0
        %v916 = vsel %vm886, %v803, 0.0
        %v917 = vsel %vm887, %v805, 0.0
        %v918 = vsel %vm888, %v807, 0.0
        %v919 = vsel %vm889, %v809, 0.0
        %v920 = vsel %vm890, %v811, 0.0
        %v921 = vsel %vm891, %v813, 0.0
        %v922 = vsel %vm892, %v815, 0.0
        %v923 = vsel %vm893, %v817, 0.0
        %v924 = vsel %vm894, %v819, 0.0
        %v925 = vsel %vm895, %v821, 0.0
        %v926 = vsel %vm896, %v823, 0.0
        %v927 = vsel %vm897, %v825, 0.0
        %v928 = vsel %vm898, %v827, 0.0
        %v929 = vsel %vm899, %v829, 0.0
        %v930 = vsel %vm900, %v831, 0.0
        %v931 = vsel %vm901, %v833, 0.0
        %v932 = vsel %vm902, %v835, 0.0
        %v933 = vsel %vm903, %v837, 0.0
        %v934 = vsel %vm904, %v839, 0.0
        %v935 = vsel %vm905, %v841, 0.0
        %v936 = vsel %vm906, %v843, 0.0
        %v937 = vld [vmem:[%s1] sm:$0xf]
        %s938 = scalar_lea.vmem %s1, 4
        %v939 = vld [vmem:[%s938] sm:$0xf]
        %vm940 = vcmask 31744
        %v942 = vsel %vm940, 0.0, 0
        %v944 = vsel %vm940, %v305, 0
        %v946 = vsel %vm940, %v306, 0
        %v948 = vsel %vm940, %v307, 0
        %v950 = vsel %vm940, %v308, 0
        %v952 = vsel %vm940, %v309, 0
        %v954 = vsel %vm940, %v310, 0
        %v956 = vsel %vm940, %v311, 0
        %v958 = vsel %vm940, %v312, 0
        %v960 = vsel %vm940, %v313, 0
        %v962 = vsel %vm940, %v314, 0
        %v964 = vsel %vm940, %v315, 0
        %v966 = vsel %vm940, %v316, 0
        %v968 = vsel %vm940, %v317, 0
        %v970 = vsel %vm940, %v318, 0
        %v972 = vsel %vm940, %v319, 0
        %v974 = vsel %vm940, %v320, 0
        %v976 = vsel %vm940, %v321, 0
        %v978 = vsel %vm940, %v322, 0
        %v980 = vsel %vm940, %v323, 0
        %v982 = vsel %vm940, %v324, 0
        %v984 = vsel %vm940, %v325, 0
        %v986 = vsel %vm940, %v326, 0
        %v988 = vsel %vm940, %v327, 0
        %v990 = vsel %vm940, %v328, 0
        %v992 = vsel %vm940, %v329, 0
        %v994 = vsel %vm940, %v330, 0
        %v996 = vsel %vm940, %v331, 0
        %v998 = vsel %vm940, %v332, 0
        %v1000 = vsel %vm940, %v333, 0
        %v1002 = vsel %vm940, %v334, 0
        %vm1004 = vcmask 1043456
        %v1006 = vsel %vm1004, %v939, 0
        %1008 = vmatprep.subr.mxu0 0.0
        %1009 = vmatpush1.msra.mxu0 0.0
        %1010 = vmatprep.subr.mxu0 0.0
        %1011 = vmatpush1.msra.mxu0 0.0
        %1012 = vmatprep.subr.mxu0 0.0
        %1013 = vmatpush1.msra.mxu0 0.0
        %1014 = vmatprep.subr.mxu0 0.0
        %1015 = vmatpush1.msra.mxu0 0.0
        %1016 = vmatprep.subr.mxu0 0.0
        %1017 = vmatpush1.msra.mxu0 0.0
        %1018 = vmatprep.subr.mxu0 0.0
        %1019 = vmatpush1.msra.mxu0 0.0
        %1020 = vmatprep.subr.mxu0 0.0
        %1021 = vmatpush1.msra.mxu0 0.0
        %1022 = vmatprep.subr.mxu0 0.0
        %1023 = vmatpush1.msra.mxu0 0.0
        %1024 = vmatprep.subr.mxu0 0.0
        %1025 = vmatpush1.msra.mxu0 0.0
        %1026 = vmatprep.subr.mxu0 0.0
        %1027 = vmatpush1.msra.mxu0 0.0
        %1028 = vmatprep.subr.mxu0 0.0
        %1029 = vmatpush1.msra.mxu0 0.0
        %1030 = vmatprep.subr.mxu0 0.0
        %1031 = vmatpush1.msra.mxu0 0.0
        %1032 = vmatprep.subr.mxu0 0.0
        %1033 = vmatpush1.msra.mxu0 0.0
        %1034 = vmatprep.subr.mxu0 0.0
        %1035 = vmatpush1.msra.mxu0 0.0
        %1036 = vmatprep.subr.mxu0 0.0
        %1037 = vmatpush1.msra.mxu0 0.0
        %1038 = vmatprep.subr.mxu0 0.0
        %1039 = vmatpush1.msra.mxu0 %v1006
        %1040 = vmatprep.subr.mxu0 0.0
        %1041 = vmatpush2.msra.mxu0 0.0
        %1042 = vmatprep.subr.mxu0 0.0
        %1043 = vmatpush2.msra.mxu0 0.0
        %1044 = vmatprep.subr.mxu0 0.0
        %1045 = vmatpush2.msra.mxu0 0.0
        %1046 = vmatprep.subr.mxu0 0.0
        %1047 = vmatpush2.msra.mxu0 0.0
        %1048 = vmatprep.subr.mxu0 0.0
        %1049 = vmatpush2.msra.mxu0 0.0
        %1050 = vmatprep.subr.mxu0 0.0
        %1051 = vmatpush2.msra.mxu0 0.0
        %1052 = vmatprep.subr.mxu0 0.0
        %1053 = vmatpush2.msra.mxu0 0.0
        %1054 = vmatprep.subr.mxu0 0.0
        %1055 = vmatpush2.msra.mxu0 0.0
        %1056 = vmatprep.subr.mxu0 0.0
        %1057 = vmatpush2.msra.mxu0 0.0
        %1058 = vmatprep.subr.mxu0 0.0
        %1059 = vmatpush2.msra.mxu0 0.0
        %1060 = vmatprep.subr.mxu0 0.0
        %1061 = vmatpush2.msra.mxu0 0.0
        %1062 = vmatprep.subr.mxu0 0.0
        %1063 = vmatpush2.msra.mxu0 0.0
        %1064 = vmatprep.subr.mxu0 0.0
        %1065 = vmatpush2.msra.mxu0 0.0
        %1066 = vmatprep.subr.mxu0 0.0
        %1067 = vmatpush2.msra.mxu0 0.0
        %1068 = vmatprep.subr.mxu0 0.0
        %1069 = vmatpush2.msra.mxu0 0.0
        %1070 = vmatprep.subr.mxu0 0.0
        %1071 = vmatpush2.msra.mxu0 0.0
        %1072 = vmatprep.mubr.f32.mxu0 0.0
        %1073 = vmatmul.mubr.f32.gmra.mxu0 %v942
        %v1074 = vpop.f32.mrf.mxu0
        %v1075 = vadd.f32 0.0, %v1074
        %v1076 = vpop.f32.mrf.mxu0
        %1077 = vmatprep.mubr.f32.mxu0 0.0
        %1078 = vmatmul.mubr.f32.gmra.mxu0 %v942
        %v1079 = vpop.f32.mrf.mxu0
        %v1080 = vadd.f32 0.0, %v1079
        %v1081 = vpop.f32.mrf.mxu0
        %1082 = vmatprep.mubr.f32.mxu0 0.0
        %1083 = vmatmul.mubr.f32.gmra.mxu0 %v944
        %v1084 = vpop.f32.mrf.mxu0
        %v1085 = vadd.f32 0.0, %v1084
        %v1086 = vpop.f32.mrf.mxu0
        %1087 = vmatprep.mubr.f32.mxu0 0.0
        %1088 = vmatmul.mubr.f32.gmra.mxu0 %v946
        %v1089 = vpop.f32.mrf.mxu0
        %v1090 = vadd.f32 0.0, %v1089
        %v1091 = vpop.f32.mrf.mxu0
        %1092 = vmatprep.mubr.f32.mxu0 0.0
        %1093 = vmatmul.mubr.f32.gmra.mxu0 %v948
        %v1094 = vpop.f32.mrf.mxu0
        %v1095 = vadd.f32 0.0, %v1094
        %v1096 = vpop.f32.mrf.mxu0
        %1097 = vmatprep.mubr.f32.mxu0 0.0
        %1098 = vmatmul.mubr.f32.gmra.mxu0 %v950
        %v1099 = vpop.f32.mrf.mxu0
        %v1100 = vadd.f32 0.0, %v1099
        %v1101 = vpop.f32.mrf.mxu0
        %1102 = vmatprep.mubr.f32.mxu0 0.0
        %1103 = vmatmul.mubr.f32.gmra.mxu0 %v952
        %v1104 = vpop.f32.mrf.mxu0
        %v1105 = vadd.f32 0.0, %v1104
        %v1106 = vpop.f32.mrf.mxu0
        %1107 = vmatprep.mubr.f32.mxu0 0.0
        %1108 = vmatmul.mubr.f32.gmra.mxu0 %v954
        %v1109 = vpop.f32.mrf.mxu0
        %v1110 = vadd.f32 0.0, %v1109
        %v1111 = vpop.f32.mrf.mxu0
        %1112 = vmatprep.mubr.f32.mxu0 0.0
        %1113 = vmatmul.mubr.f32.gmra.mxu0 %v956
        %v1114 = vpop.f32.mrf.mxu0
        %v1115 = vadd.f32 0.0, %v1114
        %v1116 = vpop.f32.mrf.mxu0
        %1117 = vmatprep.mubr.f32.mxu0 0.0
        %1118 = vmatmul.mubr.f32.gmra.mxu0 %v958
        %v1119 = vpop.f32.mrf.mxu0
        %v1120 = vadd.f32 0.0, %v1119
        %v1121 = vpop.f32.mrf.mxu0
        %1122 = vmatprep.mubr.f32.mxu0 0.0
        %1123 = vmatmul.mubr.f32.gmra.mxu0 %v960
        %v1124 = vpop.f32.mrf.mxu0
        %v1125 = vadd.f32 0.0, %v1124
        %v1126 = vpop.f32.mrf.mxu0
        %1127 = vmatprep.mubr.f32.mxu0 0.0
        %1128 = vmatmul.mubr.f32.gmra.mxu0 %v962
        %v1129 = vpop.f32.mrf.mxu0
        %v1130 = vadd.f32 0.0, %v1129
        %v1131 = vpop.f32.mrf.mxu0
        %1132 = vmatprep.mubr.f32.mxu0 0.0
        %1133 = vmatmul.mubr.f32.gmra.mxu0 %v964
        %v1134 = vpop.f32.mrf.mxu0
        %v1135 = vadd.f32 0.0, %v1134
        %v1136 = vpop.f32.mrf.mxu0
        %1137 = vmatprep.mubr.f32.mxu0 0.0
        %1138 = vmatmul.mubr.f32.gmra.mxu0 %v966
        %v1139 = vpop.f32.mrf.mxu0
        %v1140 = vadd.f32 0.0, %v1139
        %v1141 = vpop.f32.mrf.mxu0
        %1142 = vmatprep.mubr.f32.mxu0 0.0
        %1143 = vmatmul.mubr.f32.gmra.mxu0 %v968
        %v1144 = vpop.f32.mrf.mxu0
        %v1145 = vadd.f32 0.0, %v1144
        %v1146 = vpop.f32.mrf.mxu0
        %1147 = vmatprep.mubr.f32.mxu0 0.0
        %1148 = vmatmul.mubr.f32.gmra.mxu0 %v970
        %v1149 = vpop.f32.mrf.mxu0
        %v1150 = vadd.f32 0.0, %v1149
        %v1151 = vpop.f32.mrf.mxu0
        %1152 = vmatprep.mubr.f32.mxu0 0.0
        %1153 = vmatmul.mubr.f32.gmra.mxu0 %v972
        %v1154 = vpop.f32.mrf.mxu0
        %v1155 = vadd.f32 0.0, %v1154
        %v1156 = vpop.f32.mrf.mxu0
        %1157 = vmatprep.mubr.f32.mxu0 0.0
        %1158 = vmatmul.mubr.f32.gmra.mxu0 %v974
        %v1159 = vpop.f32.mrf.mxu0
        %v1160 = vadd.f32 0.0, %v1159
        %v1161 = vpop.f32.mrf.mxu0
        %1162 = vmatprep.mubr.f32.mxu0 0.0
        %1163 = vmatmul.mubr.f32.gmra.mxu0 %v976
        %v1164 = vpop.f32.mrf.mxu0
        %v1165 = vadd.f32 0.0, %v1164
        %v1166 = vpop.f32.mrf.mxu0
        %1167 = vmatprep.mubr.f32.mxu0 0.0
        %1168 = vmatmul.mubr.f32.gmra.mxu0 %v978
        %v1169 = vpop.f32.mrf.mxu0
        %v1170 = vadd.f32 0.0, %v1169
        %v1171 = vpop.f32.mrf.mxu0
        %1172 = vmatprep.mubr.f32.mxu0 0.0
        %1173 = vmatmul.mubr.f32.gmra.mxu0 %v980
        %v1174 = vpop.f32.mrf.mxu0
        %v1175 = vadd.f32 0.0, %v1174
        %v1176 = vpop.f32.mrf.mxu0
        %1177 = vmatprep.mubr.f32.mxu0 0.0
        %1178 = vmatmul.mubr.f32.gmra.mxu0 %v982
        %v1179 = vpop.f32.mrf.mxu0
        %v1180 = vadd.f32 0.0, %v1179
        %v1181 = vpop.f32.mrf.mxu0
        %1182 = vmatprep.mubr.f32.mxu0 0.0
        %1183 = vmatmul.mubr.f32.gmra.mxu0 %v984
        %v1184 = vpop.f32.mrf.mxu0
        %v1185 = vadd.f32 0.0, %v1184
        %v1186 = vpop.f32.mrf.mxu0
        %1187 = vmatprep.mubr.f32.mxu0 0.0
        %1188 = vmatmul.mubr.f32.gmra.mxu0 %v986
        %v1189 = vpop.f32.mrf.mxu0
        %v1190 = vadd.f32 0.0, %v1189
        %v1191 = vpop.f32.mrf.mxu0
        %1192 = vmatprep.mubr.f32.mxu0 0.0
        %1193 = vmatmul.mubr.f32.gmra.mxu0 %v988
        %v1194 = vpop.f32.mrf.mxu0
        %v1195 = vadd.f32 0.0, %v1194
        %v1196 = vpop.f32.mrf.mxu0
        %1197 = vmatprep.mubr.f32.mxu0 0.0
        %1198 = vmatmul.mubr.f32.gmra.mxu0 %v990
        %v1199 = vpop.f32.mrf.mxu0
        %v1200 = vadd.f32 0.0, %v1199
        %v1201 = vpop.f32.mrf.mxu0
        %1202 = vmatprep.mubr.f32.mxu0 0.0
        %1203 = vmatmul.mubr.f32.gmra.mxu0 %v992
        %v1204 = vpop.f32.mrf.mxu0
        %v1205 = vadd.f32 0.0, %v1204
        %v1206 = vpop.f32.mrf.mxu0
        %1207 = vmatprep.mubr.f32.mxu0 0.0
        %1208 = vmatmul.mubr.f32.gmra.mxu0 %v994
        %v1209 = vpop.f32.mrf.mxu0
        %v1210 = vadd.f32 0.0, %v1209
        %v1211 = vpop.f32.mrf.mxu0
        %1212 = vmatprep.mubr.f32.mxu0 0.0
        %1213 = vmatmul.mubr.f32.gmra.mxu0 %v996
        %v1214 = vpop.f32.mrf.mxu0
        %v1215 = vadd.f32 0.0, %v1214
        %v1216 = vpop.f32.mrf.mxu0
        %1217 = vmatprep.mubr.f32.mxu0 0.0
        %1218 = vmatmul.mubr.f32.gmra.mxu0 %v998
        %v1219 = vpop.f32.mrf.mxu0
        %v1220 = vadd.f32 0.0, %v1219
        %v1221 = vpop.f32.mrf.mxu0
        %1222 = vmatprep.mubr.f32.mxu0 0.0
        %1223 = vmatmul.mubr.f32.gmra.mxu0 %v1000
        %v1224 = vpop.f32.mrf.mxu0
        %v1225 = vadd.f32 0.0, %v1224
        %v1226 = vpop.f32.mrf.mxu0
        %1227 = vmatprep.mubr.f32.mxu0 0.0
        %1228 = vmatmul.mubr.f32.gmra.mxu0 %v1002
        %v1229 = vpop.f32.mrf.mxu0
        %v1230 = vadd.f32 0.0, %v1229
        %v1231 = vpop.f32.mrf.mxu0
        %1232 = vdwg.mxu0
        %v1234 = vsel %vm940, %v907, 0
        %v1237 = vsel %vm940, %v908, 0
        %v1240 = vsel %vm940, %v909, 0
        %v1243 = vsel %vm940, %v910, 0
        %v1246 = vsel %vm940, %v911, 0
        %v1249 = vsel %vm940, %v912, 0
        %v1252 = vsel %vm940, %v913, 0
        %v1255 = vsel %vm940, %v914, 0
        %v1258 = vsel %vm940, %v915, 0
        %v1261 = vsel %vm940, %v916, 0
        %v1264 = vsel %vm940, %v917, 0
        %v1267 = vsel %vm940, %v918, 0
        %v1270 = vsel %vm940, %v919, 0
        %v1273 = vsel %vm940, %v920, 0
        %v1276 = vsel %vm940, %v921, 0
        %v1279 = vsel %vm940, %v922, 0
        %v1282 = vsel %vm940, %v923, 0
        %v1285 = vsel %vm940, %v924, 0
        %v1288 = vsel %vm940, %v925, 0
        %v1291 = vsel %vm940, %v926, 0
        %v1294 = vsel %vm940, %v927, 0
        %v1297 = vsel %vm940, %v928, 0
        %v1300 = vsel %vm940, %v929, 0
        %v1303 = vsel %vm940, %v930, 0
        %v1306 = vsel %vm940, %v931, 0
        %v1309 = vsel %vm940, %v932, 0
        %v1312 = vsel %vm940, %v933, 0
        %v1315 = vsel %vm940, %v934, 0
        %v1318 = vsel %vm940, %v935, 0
        %v1321 = vsel %vm940, %v936, 0
        %v1324 = vsel %vm1004, %v937, 0
        %1326 = vmatprep.subr.mxu0 0.0
        %1327 = vmatpush1.msra.mxu0 0.0
        %1328 = vmatprep.subr.mxu0 0.0
        %1329 = vmatpush1.msra.mxu0 0.0
        %1330 = vmatprep.subr.mxu0 0.0
        %1331 = vmatpush1.msra.mxu0 0.0
        %1332 = vmatprep.subr.mxu0 0.0
        %1333 = vmatpush1.msra.mxu0 0.0
        %1334 = vmatprep.subr.mxu0 0.0
        %1335 = vmatpush1.msra.mxu0 0.0
        %1336 = vmatprep.subr.mxu0 0.0
        %1337 = vmatpush1.msra.mxu0 0.0
        %1338 = vmatprep.subr.mxu0 0.0
        %1339 = vmatpush1.msra.mxu0 0.0
        %1340 = vmatprep.subr.mxu0 0.0
        %1341 = vmatpush1.msra.mxu0 0.0
        %1342 = vmatprep.subr.mxu0 0.0
        %1343 = vmatpush1.msra.mxu0 0.0
        %1344 = vmatprep.subr.mxu0 0.0
        %1345 = vmatpush1.msra.mxu0 0.0
        %1346 = vmatprep.subr.mxu0 0.0
        %1347 = vmatpush1.msra.mxu0 0.0
        %1348 = vmatprep.subr.mxu0 0.0
        %1349 = vmatpush1.msra.mxu0 0.0
        %1350 = vmatprep.subr.mxu0 0.0
        %1351 = vmatpush1.msra.mxu0 0.0
        %1352 = vmatprep.subr.mxu0 0.0
        %1353 = vmatpush1.msra.mxu0 0.0
        %1354 = vmatprep.subr.mxu0 0.0
        %1355 = vmatpush1.msra.mxu0 0.0
        %1356 = vmatprep.subr.mxu0 0.0
        %1357 = vmatpush1.msra.mxu0 %v1324
        %1358 = vmatprep.subr.mxu0 0.0
        %1359 = vmatpush2.msra.mxu0 0.0
        %1360 = vmatprep.subr.mxu0 0.0
        %1361 = vmatpush2.msra.mxu0 0.0
        %1362 = vmatprep.subr.mxu0 0.0
        %1363 = vmatpush2.msra.mxu0 0.0
        %1364 = vmatprep.subr.mxu0 0.0
        %1365 = vmatpush2.msra.mxu0 0.0
        %1366 = vmatprep.subr.mxu0 0.0
        %1367 = vmatpush2.msra.mxu0 0.0
        %1368 = vmatprep.subr.mxu0 0.0
        %1369 = vmatpush2.msra.mxu0 0.0
        %1370 = vmatprep.subr.mxu0 0.0
        %1371 = vmatpush2.msra.mxu0 0.0
        %1372 = vmatprep.subr.mxu0 0.0
        %1373 = vmatpush2.msra.mxu0 0.0
        %1374 = vmatprep.subr.mxu0 0.0
        %1375 = vmatpush2.msra.mxu0 0.0
        %1376 = vmatprep.subr.mxu0 0.0
        %1377 = vmatpush2.msra.mxu0 0.0
        %1378 = vmatprep.subr.mxu0 0.0
        %1379 = vmatpush2.msra.mxu0 0.0
        %1380 = vmatprep.subr.mxu0 0.0
        %1381 = vmatpush2.msra.mxu0 0.0
        %1382 = vmatprep.subr.mxu0 0.0
        %1383 = vmatpush2.msra.mxu0 0.0
        %1384 = vmatprep.subr.mxu0 0.0
        %1385 = vmatpush2.msra.mxu0 0.0
        %1386 = vmatprep.subr.mxu0 0.0
        %1387 = vmatpush2.msra.mxu0 0.0
        %1388 = vmatprep.subr.mxu0 0.0
        %1389 = vmatpush2.msra.mxu0 0.0
        %1390 = vmatprep.mubr.f32.mxu0 0.0
        %1391 = vmatmul.mubr.f32.gmra.mxu0 %v942
        %v1392 = vpop.f32.mrf.mxu0
        %v1393 = vadd.f32 %v1075, %v1392
        %v1394 = vpop.f32.mrf.mxu0
        %1395 = vmatprep.mubr.f32.mxu0 0.0
        %1396 = vmatmul.mubr.f32.gmra.mxu0 %v942
        %v1397 = vpop.f32.mrf.mxu0
        %v1398 = vadd.f32 %v1080, %v1397
        %v1399 = vpop.f32.mrf.mxu0
        %1400 = vmatprep.mubr.f32.mxu0 0.0
        %1401 = vmatmul.mubr.f32.gmra.mxu0 %v1234
        %v1402 = vpop.f32.mrf.mxu0
        %v1403 = vadd.f32 %v1085, %v1402
        %v1404 = vpop.f32.mrf.mxu0
        %1405 = vmatprep.mubr.f32.mxu0 0.0
        %1406 = vmatmul.mubr.f32.gmra.mxu0 %v1237
        %v1407 = vpop.f32.mrf.mxu0
        %v1408 = vadd.f32 %v1090, %v1407
        %v1409 = vpop.f32.mrf.mxu0
        %1410 = vmatprep.mubr.f32.mxu0 0.0
        %1411 = vmatmul.mubr.f32.gmra.mxu0 %v1240
        %v1412 = vpop.f32.mrf.mxu0
        %v1413 = vadd.f32 %v1095, %v1412
        %v1414 = vpop.f32.mrf.mxu0
        %1415 = vmatprep.mubr.f32.mxu0 0.0
        %1416 = vmatmul.mubr.f32.gmra.mxu0 %v1243
        %v1417 = vpop.f32.mrf.mxu0
        %v1418 = vadd.f32 %v1100, %v1417
        %v1419 = vpop.f32.mrf.mxu0
        %1420 = vmatprep.mubr.f32.mxu0 0.0
        %1421 = vmatmul.mubr.f32.gmra.mxu0 %v1246
        %v1422 = vpop.f32.mrf.mxu0
        %v1423 = vadd.f32 %v1105, %v1422
        %v1424 = vpop.f32.mrf.mxu0
        %1425 = vmatprep.mubr.f32.mxu0 0.0
        %1426 = vmatmul.mubr.f32.gmra.mxu0 %v1249
        %v1427 = vpop.f32.mrf.mxu0
        %v1428 = vadd.f32 %v1110, %v1427
        %v1429 = vpop.f32.mrf.mxu0
        %1430 = vmatprep.mubr.f32.mxu0 0.0
        %1431 = vmatmul.mubr.f32.gmra.mxu0 %v1252
        %v1432 = vpop.f32.mrf.mxu0
        %v1433 = vadd.f32 %v1115, %v1432
        %v1434 = vpop.f32.mrf.mxu0
        %1435 = vmatprep.mubr.f32.mxu0 0.0
        %1436 = vmatmul.mubr.f32.gmra.mxu0 %v1255
        %v1437 = vpop.f32.mrf.mxu0
        %v1438 = vadd.f32 %v1120, %v1437
        %v1439 = vpop.f32.mrf.mxu0
        %1440 = vmatprep.mubr.f32.mxu0 0.0
        %1441 = vmatmul.mubr.f32.gmra.mxu0 %v1258
        %v1442 = vpop.f32.mrf.mxu0
        %v1443 = vadd.f32 %v1125, %v1442
        %v1444 = vpop.f32.mrf.mxu0
        %1445 = vmatprep.mubr.f32.mxu0 0.0
        %1446 = vmatmul.mubr.f32.gmra.mxu0 %v1261
        %v1447 = vpop.f32.mrf.mxu0
        %v1448 = vadd.f32 %v1130, %v1447
        %v1449 = vpop.f32.mrf.mxu0
        %1450 = vmatprep.mubr.f32.mxu0 0.0
        %1451 = vmatmul.mubr.f32.gmra.mxu0 %v1264
        %v1452 = vpop.f32.mrf.mxu0
        %v1453 = vadd.f32 %v1135, %v1452
        %v1454 = vpop.f32.mrf.mxu0
        %1455 = vmatprep.mubr.f32.mxu0 0.0
        %1456 = vmatmul.mubr.f32.gmra.mxu0 %v1267
        %v1457 = vpop.f32.mrf.mxu0
        %v1458 = vadd.f32 %v1140, %v1457
        %v1459 = vpop.f32.mrf.mxu0
        %1460 = vmatprep.mubr.f32.mxu0 0.0
        %1461 = vmatmul.mubr.f32.gmra.mxu0 %v1270
        %v1462 = vpop.f32.mrf.mxu0
        %v1463 = vadd.f32 %v1145, %v1462
        %v1464 = vpop.f32.mrf.mxu0
        %1465 = vmatprep.mubr.f32.mxu0 0.0
        %1466 = vmatmul.mubr.f32.gmra.mxu0 %v1273
        %v1467 = vpop.f32.mrf.mxu0
        %v1468 = vadd.f32 %v1150, %v1467
        %v1469 = vpop.f32.mrf.mxu0
        %1470 = vmatprep.mubr.f32.mxu0 0.0
        %1471 = vmatmul.mubr.f32.gmra.mxu0 %v1276
        %v1472 = vpop.f32.mrf.mxu0
        %v1473 = vadd.f32 %v1155, %v1472
        %v1474 = vpop.f32.mrf.mxu0
        %1475 = vmatprep.mubr.f32.mxu0 0.0
        %1476 = vmatmul.mubr.f32.gmra.mxu0 %v1279
        %v1477 = vpop.f32.mrf.mxu0
        %v1478 = vadd.f32 %v1160, %v1477
        %v1479 = vpop.f32.mrf.mxu0
        %1480 = vmatprep.mubr.f32.mxu0 0.0
        %1481 = vmatmul.mubr.f32.gmra.mxu0 %v1282
        %v1482 = vpop.f32.mrf.mxu0
        %v1483 = vadd.f32 %v1165, %v1482
        %v1484 = vpop.f32.mrf.mxu0
        %1485 = vmatprep.mubr.f32.mxu0 0.0
        %1486 = vmatmul.mubr.f32.gmra.mxu0 %v1285
        %v1487 = vpop.f32.mrf.mxu0
        %v1488 = vadd.f32 %v1170, %v1487
        %v1489 = vpop.f32.mrf.mxu0
        %1490 = vmatprep.mubr.f32.mxu0 0.0
        %1491 = vmatmul.mubr.f32.gmra.mxu0 %v1288
        %v1492 = vpop.f32.mrf.mxu0
        %v1493 = vadd.f32 %v1175, %v1492
        %v1494 = vpop.f32.mrf.mxu0
        %1495 = vmatprep.mubr.f32.mxu0 0.0
        %1496 = vmatmul.mubr.f32.gmra.mxu0 %v1291
        %v1497 = vpop.f32.mrf.mxu0
        %v1498 = vadd.f32 %v1180, %v1497
        %v1499 = vpop.f32.mrf.mxu0
        %1500 = vmatprep.mubr.f32.mxu0 0.0
        %1501 = vmatmul.mubr.f32.gmra.mxu0 %v1294
        %v1502 = vpop.f32.mrf.mxu0
        %v1503 = vadd.f32 %v1185, %v1502
        %v1504 = vpop.f32.mrf.mxu0
        %1505 = vmatprep.mubr.f32.mxu0 0.0
        %1506 = vmatmul.mubr.f32.gmra.mxu0 %v1297
        %v1507 = vpop.f32.mrf.mxu0
        %v1508 = vadd.f32 %v1190, %v1507
        %v1509 = vpop.f32.mrf.mxu0
        %1510 = vmatprep.mubr.f32.mxu0 0.0
        %1511 = vmatmul.mubr.f32.gmra.mxu0 %v1300
        %v1512 = vpop.f32.mrf.mxu0
        %v1513 = vadd.f32 %v1195, %v1512
        %v1514 = vpop.f32.mrf.mxu0
        %1515 = vmatprep.mubr.f32.mxu0 0.0
        %1516 = vmatmul.mubr.f32.gmra.mxu0 %v1303
        %v1517 = vpop.f32.mrf.mxu0
        %v1518 = vadd.f32 %v1200, %v1517
        %v1519 = vpop.f32.mrf.mxu0
        %1520 = vmatprep.mubr.f32.mxu0 0.0
        %1521 = vmatmul.mubr.f32.gmra.mxu0 %v1306
        %v1522 = vpop.f32.mrf.mxu0
        %v1523 = vadd.f32 %v1205, %v1522
        %v1524 = vpop.f32.mrf.mxu0
        %1525 = vmatprep.mubr.f32.mxu0 0.0
        %1526 = vmatmul.mubr.f32.gmra.mxu0 %v1309
        %v1527 = vpop.f32.mrf.mxu0
        %v1528 = vadd.f32 %v1210, %v1527
        %v1529 = vpop.f32.mrf.mxu0
        %1530 = vmatprep.mubr.f32.mxu0 0.0
        %1531 = vmatmul.mubr.f32.gmra.mxu0 %v1312
        %v1532 = vpop.f32.mrf.mxu0
        %v1533 = vadd.f32 %v1215, %v1532
        %v1534 = vpop.f32.mrf.mxu0
        %1535 = vmatprep.mubr.f32.mxu0 0.0
        %1536 = vmatmul.mubr.f32.gmra.mxu0 %v1315
        %v1537 = vpop.f32.mrf.mxu0
        %v1538 = vadd.f32 %v1220, %v1537
        %v1539 = vpop.f32.mrf.mxu0
        %1540 = vmatprep.mubr.f32.mxu0 0.0
        %1541 = vmatmul.mubr.f32.gmra.mxu0 %v1318
        %v1542 = vpop.f32.mrf.mxu0
        %v1543 = vadd.f32 %v1225, %v1542
        %v1544 = vpop.f32.mrf.mxu0
        %1545 = vmatprep.mubr.f32.mxu0 0.0
        %1546 = vmatmul.mubr.f32.gmra.mxu0 %v1321
        %v1547 = vpop.f32.mrf.mxu0
        %v1548 = vadd.f32 %v1230, %v1547
        %v1549 = vpop.f32.mrf.mxu0
        %1550 = vdwg.mxu0
        %vm1552 = vcmask 1046528
        %v1553 = vrot.slane %v305, 1
        %v1554 = vrot.slane %v306, 1
        %v1555 = vsel %vm1552, %v1553, %v1554
        %v1556 = vrot.slane %v307, 1
        %v1557 = vsel %vm1552, %v1554, %v1556
        %v1558 = vrot.slane %v308, 1
        %v1559 = vsel %vm1552, %v1556, %v1558
        %v1560 = vrot.slane %v309, 1
        %v1561 = vsel %vm1552, %v1558, %v1560
        %v1562 = vrot.slane %v310, 1
        %v1563 = vsel %vm1552, %v1560, %v1562
        %v1564 = vrot.slane %v311, 1
        %v1565 = vsel %vm1552, %v1562, %v1564
        %v1566 = vrot.slane %v312, 1
        %v1567 = vsel %vm1552, %v1564, %v1566
        %v1568 = vrot.slane %v313, 1
        %v1569 = vsel %vm1552, %v1566, %v1568
        %v1570 = vrot.slane %v314, 1
        %v1571 = vsel %vm1552, %v1568, %v1570
        %v1572 = vrot.slane %v315, 1
        %v1573 = vsel %vm1552, %v1570, %v1572
        %v1574 = vrot.slane %v316, 1
        %v1575 = vsel %vm1552, %v1572, %v1574
        %v1576 = vrot.slane %v317, 1
        %v1577 = vsel %vm1552, %v1574, %v1576
        %v1578 = vrot.slane %v318, 1
        %v1579 = vsel %vm1552, %v1576, %v1578
        %v1580 = vrot.slane %v319, 1
        %v1581 = vsel %vm1552, %v1578, %v1580
        %v1582 = vrot.slane %v320, 1
        %v1583 = vsel %vm1552, %v1580, %v1582
        %v1584 = vrot.slane %v321, 1
        %v1585 = vsel %vm1552, %v1582, %v1584
        %v1586 = vrot.slane %v322, 1
        %v1587 = vsel %vm1552, %v1584, %v1586
        %v1588 = vrot.slane %v323, 1
        %v1589 = vsel %vm1552, %v1586, %v1588
        %v1590 = vrot.slane %v324, 1
        %v1591 = vsel %vm1552, %v1588, %v1590
        %v1592 = vrot.slane %v325, 1
        %v1593 = vsel %vm1552, %v1590, %v1592
        %v1594 = vrot.slane %v326, 1
        %v1595 = vsel %vm1552, %v1592, %v1594
        %v1596 = vrot.slane %v327, 1
        %v1597 = vsel %vm1552, %v1594, %v1596
        %v1598 = vrot.slane %v328, 1
        %v1599 = vsel %vm1552, %v1596, %v1598
        %v1600 = vrot.slane %v329, 1
        %v1601 = vsel %vm1552, %v1598, %v1600
        %v1602 = vrot.slane %v330, 1
        %v1603 = vsel %vm1552, %v1600, %v1602
        %v1604 = vrot.slane %v331, 1
        %v1605 = vsel %vm1552, %v1602, %v1604
        %v1606 = vrot.slane %v332, 1
        %v1607 = vsel %vm1552, %v1604, %v1606
        %v1608 = vrot.slane %v333, 1
        %v1609 = vsel %vm1552, %v1606, %v1608
        %v1610 = vrot.slane %v334, 1
        %v1611 = vsel %vm1552, %v1608, %v1610
        %v1612 = vrot.slane %v335, 1
        %v1613 = vsel %vm1552, %v1610, %v1612
        %v1645 = vsel %vm1552, 0.0, %v1553
        %vm1646 = vcmp.le.s32.totalorder %v722, 14
        %vm1647 = vcmp.le.s32.totalorder %v723, 14
        %vm1648 = vcmp.le.s32.totalorder %v724, 14
        %vm1649 = vcmp.le.s32.totalorder %v725, 14
        %vm1650 = vcmp.le.s32.totalorder %v726, 14
        %vm1651 = vcmp.le.s32.totalorder %v727, 14
        %vm1652 = vcmp.le.s32.totalorder %v728, 14
        %vm1653 = vcmp.le.s32.totalorder %v729, 14
        %vm1654 = vcmp.le.s32.totalorder %v730, 14
        %vm1655 = vcmp.le.s32.totalorder %v731, 14
        %vm1656 = vcmp.le.s32.totalorder %v732, 14
        %vm1657 = vcmp.le.s32.totalorder %v733, 14
        %vm1658 = vcmp.le.s32.totalorder %v734, 14
        %vm1659 = vcmp.le.s32.totalorder %v735, 14
        %vm1660 = vcmp.le.s32.totalorder %v736, 14
        %vm1661 = vcmp.le.s32.totalorder %v737, 14
        %vm1662 = vcmp.le.s32.totalorder %v738, 14
        %vm1663 = vcmp.le.s32.totalorder %v739, 14
        %vm1664 = vcmp.le.s32.totalorder %v740, 14
        %vm1665 = vcmp.le.s32.totalorder %v741, 14
        %vm1666 = vcmp.le.s32.totalorder %v742, 14
        %vm1667 = vcmp.le.s32.totalorder %v743, 14
        %vm1668 = vcmp.le.s32.totalorder %v744, 14
        %vm1669 = vcmp.le.s32.totalorder %v745, 14
        %vm1670 = vcmp.le.s32.totalorder %v746, 14
        %vm1671 = vcmp.le.s32.totalorder %v747, 14
        %vm1672 = vcmp.le.s32.totalorder %v748, 14
        %vm1673 = vcmp.le.s32.totalorder %v749, 14
        %vm1674 = vcmp.le.s32.totalorder %v750, 14
        %vm1675 = vcmp.le.s32.totalorder %v751, 14
        %vm1676 = vcmp.le.s32.totalorder %v752, 14
        %vm1677 = vcmp.le.s32.totalorder %v753, 14
        %v1678 = vsel %vm1647, %v1645, 0.0
        %v1679 = vsel %vm1648, %v1555, 0.0
        %v1680 = vsel %vm1649, %v1557, 0.0
        %v1681 = vsel %vm1650, %v1559, 0.0
        %v1682 = vsel %vm1651, %v1561, 0.0
        %v1683 = vsel %vm1652, %v1563, 0.0
        %v1684 = vsel %vm1653, %v1565, 0.0
        %v1685 = vsel %vm1654, %v1567, 0.0
        %v1686 = vsel %vm1655, %v1569, 0.0
        %v1687 = vsel %vm1656, %v1571, 0.0
        %v1688 = vsel %vm1657, %v1573, 0.0
        %v1689 = vsel %vm1658, %v1575, 0.0
        %v1690 = vsel %vm1659, %v1577, 0.0
        %v1691 = vsel %vm1660, %v1579, 0.0
        %v1692 = vsel %vm1661, %v1581, 0.0
        %v1693 = vsel %vm1662, %v1583, 0.0
        %v1694 = vsel %vm1663, %v1585, 0.0
        %v1695 = vsel %vm1664, %v1587, 0.0
        %v1696 = vsel %vm1665, %v1589, 0.0
        %v1697 = vsel %vm1666, %v1591, 0.0
        %v1698 = vsel %vm1667, %v1593, 0.0
        %v1699 = vsel %vm1668, %v1595, 0.0
        %v1700 = vsel %vm1669, %v1597, 0.0
        %v1701 = vsel %vm1670, %v1599, 0.0
        %v1702 = vsel %vm1671, %v1601, 0.0
        %v1703 = vsel %vm1672, %v1603, 0.0
        %v1704 = vsel %vm1673, %v1605, 0.0
        %v1705 = vsel %vm1674, %v1607, 0.0
        %v1706 = vsel %vm1675, %v1609, 0.0
        %v1707 = vsel %vm1676, %v1611, 0.0
        %v1708 = vsel %vm1677, %v1613, 0.0
        %s1709 = scalar_lea.vmem %s1, 8
        %v1710 = vld [vmem:[%s1709] sm:$0xf]
        %v1712 = vsel %vm940, %v1678, 0
        %v1715 = vsel %vm940, %v1679, 0
        %v1718 = vsel %vm940, %v1680, 0
        %v1721 = vsel %vm940, %v1681, 0
        %v1724 = vsel %vm940, %v1682, 0
        %v1727 = vsel %vm940, %v1683, 0
        %v1730 = vsel %vm940, %v1684, 0
        %v1733 = vsel %vm940, %v1685, 0
        %v1736 = vsel %vm940, %v1686, 0
        %v1739 = vsel %vm940, %v1687, 0
        %v1742 = vsel %vm940, %v1688, 0
        %v1745 = vsel %vm940, %v1689, 0
        %v1748 = vsel %vm940, %v1690, 0
        %v1751 = vsel %vm940, %v1691, 0
        %v1754 = vsel %vm940, %v1692, 0
        %v1757 = vsel %vm940, %v1693, 0
        %v1760 = vsel %vm940, %v1694, 0
        %v1763 = vsel %vm940, %v1695, 0
        %v1766 = vsel %vm940, %v1696, 0
        %v1769 = vsel %vm940, %v1697, 0
        %v1772 = vsel %vm940, %v1698, 0
        %v1775 = vsel %vm940, %v1699, 0
        %v1778 = vsel %vm940, %v1700, 0
        %v1781 = vsel %vm940, %v1701, 0
        %v1784 = vsel %vm940, %v1702, 0
        %v1787 = vsel %vm940, %v1703, 0
        %v1790 = vsel %vm940, %v1704, 0
        %v1793 = vsel %vm940, %v1705, 0
        %v1796 = vsel %vm940, %v1706, 0
        %v1799 = vsel %vm940, %v1707, 0
        %v1802 = vsel %vm940, %v1708, 0
        %v1805 = vsel %vm1004, %v1710, 0
        %1807 = vmatprep.subr.mxu0 0.0
        %1808 = vmatpush1.msra.mxu0 0.0
        %1809 = vmatprep.subr.mxu0 0.0
        %1810 = vmatpush1.msra.mxu0 0.0
        %1811 = vmatprep.subr.mxu0 0.0
        %1812 = vmatpush1.msra.mxu0 0.0
        %1813 = vmatprep.subr.mxu0 0.0
        %1814 = vmatpush1.msra.mxu0 0.0
        %1815 = vmatprep.subr.mxu0 0.0
        %1816 = vmatpush1.msra.mxu0 0.0
        %1817 = vmatprep.subr.mxu0 0.0
        %1818 = vmatpush1.msra.mxu0 0.0
        %1819 = vmatprep.subr.mxu0 0.0
        %1820 = vmatpush1.msra.mxu0 0.0
        %1821 = vmatprep.subr.mxu0 0.0
        %1822 = vmatpush1.msra.mxu0 0.0
        %1823 = vmatprep.subr.mxu0 0.0
        %1824 = vmatpush1.msra.mxu0 0.0
        %1825 = vmatprep.subr.mxu0 0.0
        %1826 = vmatpush1.msra.mxu0 0.0
        %1827 = vmatprep.subr.mxu0 0.0
        %1828 = vmatpush1.msra.mxu0 0.0
        %1829 = vmatprep.subr.mxu0 0.0
        %1830 = vmatpush1.msra.mxu0 0.0
        %1831 = vmatprep.subr.mxu0 0.0
        %1832 = vmatpush1.msra.mxu0 0.0
        %1833 = vmatprep.subr.mxu0 0.0
        %1834 = vmatpush1.msra.mxu0 0.0
        %1835 = vmatprep.subr.mxu0 0.0
        %1836 = vmatpush1.msra.mxu0 0.0
        %1837 = vmatprep.subr.mxu0 0.0
        %1838 = vmatpush1.msra.mxu0 %v1805
        %1839 = vmatprep.subr.mxu0 0.0
        %1840 = vmatpush2.msra.mxu0 0.0
        %1841 = vmatprep.subr.mxu0 0.0
        %1842 = vmatpush2.msra.mxu0 0.0
        %1843 = vmatprep.subr.mxu0 0.0
        %1844 = vmatpush2.msra.mxu0 0.0
        %1845 = vmatprep.subr.mxu0 0.0
        %1846 = vmatpush2.msra.mxu0 0.0
        %1847 = vmatprep.subr.mxu0 0.0
        %1848 = vmatpush2.msra.mxu0 0.0
        %1849 = vmatprep.subr.mxu0 0.0
        %1850 = vmatpush2.msra.mxu0 0.0
        %1851 = vmatprep.subr.mxu0 0.0
        %1852 = vmatpush2.msra.mxu0 0.0
        %1853 = vmatprep.subr.mxu0 0.0
        %1854 = vmatpush2.msra.mxu0 0.0
        %1855 = vmatprep.subr.mxu0 0.0
        %1856 = vmatpush2.msra.mxu0 0.0
        %1857 = vmatprep.subr.mxu0 0.0
        %1858 = vmatpush2.msra.mxu0 0.0
        %1859 = vmatprep.subr.mxu0 0.0
        %1860 = vmatpush2.msra.mxu0 0.0
        %1861 = vmatprep.subr.mxu0 0.0
        %1862 = vmatpush2.msra.mxu0 0.0
        %1863 = vmatprep.subr.mxu0 0.0
        %1864 = vmatpush2.msra.mxu0 0.0
        %1865 = vmatprep.subr.mxu0 0.0
        %1866 = vmatpush2.msra.mxu0 0.0
        %1867 = vmatprep.subr.mxu0 0.0
        %1868 = vmatpush2.msra.mxu0 0.0
        %1869 = vmatprep.subr.mxu0 0.0
        %1870 = vmatpush2.msra.mxu0 0.0
        %1871 = vmatprep.mubr.f32.mxu0 0.0
        %1872 = vmatmul.mubr.f32.gmra.mxu0 %v942
        %v1873 = vpop.f32.mrf.mxu0
        %v1874 = vadd.f32 0.0, %v1873
        %v1875 = vpop.f32.mrf.mxu0
        %1876 = vmatprep.mubr.f32.mxu0 0.0
        %1877 = vmatmul.mubr.f32.gmra.mxu0 %v1712
        %v1878 = vpop.f32.mrf.mxu0
        %v1879 = vadd.f32 0.0, %v1878
        %v1880 = vpop.f32.mrf.mxu0
        %1881 = vmatprep.mubr.f32.mxu0 0.0
        %1882 = vmatmul.mubr.f32.gmra.mxu0 %v1715
        %v1883 = vpop.f32.mrf.mxu0
        %v1884 = vadd.f32 0.0, %v1883
        %v1885 = vpop.f32.mrf.mxu0
        %1886 = vmatprep.mubr.f32.mxu0 0.0
        %1887 = vmatmul.mubr.f32.gmra.mxu0 %v1718
        %v1888 = vpop.f32.mrf.mxu0
        %v1889 = vadd.f32 0.0, %v1888
        %v1890 = vpop.f32.mrf.mxu0
        %1891 = vmatprep.mubr.f32.mxu0 0.0
        %1892 = vmatmul.mubr.f32.gmra.mxu0 %v1721
        %v1893 = vpop.f32.mrf.mxu0
        %v1894 = vadd.f32 0.0, %v1893
        %v1895 = vpop.f32.mrf.mxu0
        %1896 = vmatprep.mubr.f32.mxu0 0.0
        %1897 = vmatmul.mubr.f32.gmra.mxu0 %v1724
        %v1898 = vpop.f32.mrf.mxu0
        %v1899 = vadd.f32 0.0, %v1898
        %v1900 = vpop.f32.mrf.mxu0
        %1901 = vmatprep.mubr.f32.mxu0 0.0
        %1902 = vmatmul.mubr.f32.gmra.mxu0 %v1727
        %v1903 = vpop.f32.mrf.mxu0
        %v1904 = vadd.f32 0.0, %v1903
        %v1905 = vpop.f32.mrf.mxu0
        %1906 = vmatprep.mubr.f32.mxu0 0.0
        %1907 = vmatmul.mubr.f32.gmra.mxu0 %v1730
        %v1908 = vpop.f32.mrf.mxu0
        %v1909 = vadd.f32 0.0, %v1908
        %v1910 = vpop.f32.mrf.mxu0
        %1911 = vmatprep.mubr.f32.mxu0 0.0
        %1912 = vmatmul.mubr.f32.gmra.mxu0 %v1733
        %v1913 = vpop.f32.mrf.mxu0
        %v1914 = vadd.f32 0.0, %v1913
        %v1915 = vpop.f32.mrf.mxu0
        %1916 = vmatprep.mubr.f32.mxu0 0.0
        %1917 = vmatmul.mubr.f32.gmra.mxu0 %v1736
        %v1918 = vpop.f32.mrf.mxu0
        %v1919 = vadd.f32 0.0, %v1918
        %v1920 = vpop.f32.mrf.mxu0
        %1921 = vmatprep.mubr.f32.mxu0 0.0
        %1922 = vmatmul.mubr.f32.gmra.mxu0 %v1739
        %v1923 = vpop.f32.mrf.mxu0
        %v1924 = vadd.f32 0.0, %v1923
        %v1925 = vpop.f32.mrf.mxu0
        %1926 = vmatprep.mubr.f32.mxu0 0.0
        %1927 = vmatmul.mubr.f32.gmra.mxu0 %v1742
        %v1928 = vpop.f32.mrf.mxu0
        %v1929 = vadd.f32 0.0, %v1928
        %v1930 = vpop.f32.mrf.mxu0
        %1931 = vmatprep.mubr.f32.mxu0 0.0
        %1932 = vmatmul.mubr.f32.gmra.mxu0 %v1745
        %v1933 = vpop.f32.mrf.mxu0
        %v1934 = vadd.f32 0.0, %v1933
        %v1935 = vpop.f32.mrf.mxu0
        %1936 = vmatprep.mubr.f32.mxu0 0.0
        %1937 = vmatmul.mubr.f32.gmra.mxu0 %v1748
        %v1938 = vpop.f32.mrf.mxu0
        %v1939 = vadd.f32 0.0, %v1938
        %v1940 = vpop.f32.mrf.mxu0
        %1941 = vmatprep.mubr.f32.mxu0 0.0
        %1942 = vmatmul.mubr.f32.gmra.mxu0 %v1751
        %v1943 = vpop.f32.mrf.mxu0
        %v1944 = vadd.f32 0.0, %v1943
        %v1945 = vpop.f32.mrf.mxu0
        %1946 = vmatprep.mubr.f32.mxu0 0.0
        %1947 = vmatmul.mubr.f32.gmra.mxu0 %v1754
        %v1948 = vpop.f32.mrf.mxu0
        %v1949 = vadd.f32 0.0, %v1948
        %v1950 = vpop.f32.mrf.mxu0
        %1951 = vmatprep.mubr.f32.mxu0 0.0
        %1952 = vmatmul.mubr.f32.gmra.mxu0 %v1757
        %v1953 = vpop.f32.mrf.mxu0
        %v1954 = vadd.f32 0.0, %v1953
        %v1955 = vpop.f32.mrf.mxu0
        %1956 = vmatprep.mubr.f32.mxu0 0.0
        %1957 = vmatmul.mubr.f32.gmra.mxu0 %v1760
        %v1958 = vpop.f32.mrf.mxu0
        %v1959 = vadd.f32 0.0, %v1958
        %v1960 = vpop.f32.mrf.mxu0
        %1961 = vmatprep.mubr.f32.mxu0 0.0
        %1962 = vmatmul.mubr.f32.gmra.mxu0 %v1763
        %v1963 = vpop.f32.mrf.mxu0
        %v1964 = vadd.f32 0.0, %v1963
        %v1965 = vpop.f32.mrf.mxu0
        %1966 = vmatprep.mubr.f32.mxu0 0.0
        %1967 = vmatmul.mubr.f32.gmra.mxu0 %v1766
        %v1968 = vpop.f32.mrf.mxu0
        %v1969 = vadd.f32 0.0, %v1968
        %v1970 = vpop.f32.mrf.mxu0
        %1971 = vmatprep.mubr.f32.mxu0 0.0
        %1972 = vmatmul.mubr.f32.gmra.mxu0 %v1769
        %v1973 = vpop.f32.mrf.mxu0
        %v1974 = vadd.f32 0.0, %v1973
        %v1975 = vpop.f32.mrf.mxu0
        %1976 = vmatprep.mubr.f32.mxu0 0.0
        %1977 = vmatmul.mubr.f32.gmra.mxu0 %v1772
        %v1978 = vpop.f32.mrf.mxu0
        %v1979 = vadd.f32 0.0, %v1978
        %v1980 = vpop.f32.mrf.mxu0
        %1981 = vmatprep.mubr.f32.mxu0 0.0
        %1982 = vmatmul.mubr.f32.gmra.mxu0 %v1775
        %v1983 = vpop.f32.mrf.mxu0
        %v1984 = vadd.f32 0.0, %v1983
        %v1985 = vpop.f32.mrf.mxu0
        %1986 = vmatprep.mubr.f32.mxu0 0.0
        %1987 = vmatmul.mubr.f32.gmra.mxu0 %v1778
        %v1988 = vpop.f32.mrf.mxu0
        %v1989 = vadd.f32 0.0, %v1988
        %v1990 = vpop.f32.mrf.mxu0
        %1991 = vmatprep.mubr.f32.mxu0 0.0
        %1992 = vmatmul.mubr.f32.gmra.mxu0 %v1781
        %v1993 = vpop.f32.mrf.mxu0
        %v1994 = vadd.f32 0.0, %v1993
        %v1995 = vpop.f32.mrf.mxu0
        %1996 = vmatprep.mubr.f32.mxu0 0.0
        %1997 = vmatmul.mubr.f32.gmra.mxu0 %v1784
        %v1998 = vpop.f32.mrf.mxu0
        %v1999 = vadd.f32 0.0, %v1998
        %v2000 = vpop.f32.mrf.mxu0
        %2001 = vmatprep.mubr.f32.mxu0 0.0
        %2002 = vmatmul.mubr.f32.gmra.mxu0 %v1787
        %v2003 = vpop.f32.mrf.mxu0
        %v2004 = vadd.f32 0.0, %v2003
        %v2005 = vpop.f32.mrf.mxu0
        %2006 = vmatprep.mubr.f32.mxu0 0.0
        %2007 = vmatmul.mubr.f32.gmra.mxu0 %v1790
        %v2008 = vpop.f32.mrf.mxu0
        %v2009 = vadd.f32 0.0, %v2008
        %v2010 = vpop.f32.mrf.mxu0
        %2011 = vmatprep.mubr.f32.mxu0 0.0
        %2012 = vmatmul.mubr.f32.gmra.mxu0 %v1793
        %v2013 = vpop.f32.mrf.mxu0
        %v2014 = vadd.f32 0.0, %v2013
        %v2015 = vpop.f32.mrf.mxu0
        %2016 = vmatprep.mubr.f32.mxu0 0.0
        %2017 = vmatmul.mubr.f32.gmra.mxu0 %v1796
        %v2018 = vpop.f32.mrf.mxu0
        %v2019 = vadd.f32 0.0, %v2018
        %v2020 = vpop.f32.mrf.mxu0
        %2021 = vmatprep.mubr.f32.mxu0 0.0
        %2022 = vmatmul.mubr.f32.gmra.mxu0 %v1799
        %v2023 = vpop.f32.mrf.mxu0
        %v2024 = vadd.f32 0.0, %v2023
        %v2025 = vpop.f32.mrf.mxu0
        %2026 = vmatprep.mubr.f32.mxu0 0.0
        %2027 = vmatmul.mubr.f32.gmra.mxu0 %v1802
        %v2028 = vpop.f32.mrf.mxu0
        %v2029 = vadd.f32 0.0, %v2028
        %v2030 = vpop.f32.mrf.mxu0
        %2031 = vdwg.mxu0
        %v2032 = vadd.f32 %v1393, %v1874
        %v2033 = vadd.f32 %v1398, %v1879
        %v2034 = vadd.f32 %v1403, %v1884
        %v2035 = vadd.f32 %v1408, %v1889
        %v2036 = vadd.f32 %v1413, %v1894
        %v2037 = vadd.f32 %v1418, %v1899
        %v2038 = vadd.f32 %v1423, %v1904
        %v2039 = vadd.f32 %v1428, %v1909
        %v2040 = vadd.f32 %v1433, %v1914
        %v2041 = vadd.f32 %v1438, %v1919
        %v2042 = vadd.f32 %v1443, %v1924
        %v2043 = vadd.f32 %v1448, %v1929
        %v2044 = vadd.f32 %v1453, %v1934
        %v2045 = vadd.f32 %v1458, %v1939
        %v2046 = vadd.f32 %v1463, %v1944
        %v2047 = vadd.f32 %v1468, %v1949
        %v2048 = vadd.f32 %v1473, %v1954
        %v2049 = vadd.f32 %v1478, %v1959
        %v2050 = vadd.f32 %v1483, %v1964
        %v2051 = vadd.f32 %v1488, %v1969
        %v2052 = vadd.f32 %v1493, %v1974
        %v2053 = vadd.f32 %v1498, %v1979
        %v2054 = vadd.f32 %v1503, %v1984
        %v2055 = vadd.f32 %v1508, %v1989
        %v2056 = vadd.f32 %v1513, %v1994
        %v2057 = vadd.f32 %v1518, %v1999
        %v2058 = vadd.f32 %v1523, %v2004
        %v2059 = vadd.f32 %v1528, %v2009
        %v2060 = vadd.f32 %v1533, %v2014
        %v2061 = vadd.f32 %v1538, %v2019
        %v2062 = vadd.f32 %v1543, %v2024
        %v2063 = vadd.f32 %v1548, %v2029
        %v2065 = vrot.slane %v335, 7
        %v2066 = vsel %vm784, %v842, %v2065
        %v2067 = vrot.slane %v336, 7
        %v2068 = vsel %vm784, %v2065, %v2067
        %v2071 = vsel %vm875, %v874, 0.0
        %v2072 = vsel %vm876, %v787, 0.0
        %v2073 = vsel %vm877, %v789, 0.0
        %v2074 = vsel %vm878, %v791, 0.0
        %v2075 = vsel %vm879, %v793, 0.0
        %v2076 = vsel %vm880, %v795, 0.0
        %v2077 = vsel %vm881, %v797, 0.0
        %v2078 = vsel %vm882, %v799, 0.0
        %v2079 = vsel %vm883, %v801, 0.0
        %v2080 = vsel %vm884, %v803, 0.0
        %v2081 = vsel %vm885, %v805, 0.0
        %v2082 = vsel %vm886, %v807, 0.0
        %v2083 = vsel %vm887, %v809, 0.0
        %v2084 = vsel %vm888, %v811, 0.0
        %v2085 = vsel %vm889, %v813, 0.0
        %v2086 = vsel %vm890, %v815, 0.0
        %v2087 = vsel %vm891, %v817, 0.0
        %v2088 = vsel %vm892, %v819, 0.0
        %v2089 = vsel %vm893, %v821, 0.0
        %v2090 = vsel %vm894, %v823, 0.0
        %v2091 = vsel %vm895, %v825, 0.0
        %v2092 = vsel %vm896, %v827, 0.0
        %v2093 = vsel %vm897, %v829, 0.0
        %v2094 = vsel %vm898, %v831, 0.0
        %v2095 = vsel %vm899, %v833, 0.0
        %v2096 = vsel %vm900, %v835, 0.0
        %v2097 = vsel %vm901, %v837, 0.0
        %v2098 = vsel %vm902, %v839, 0.0
        %v2099 = vsel %vm903, %v841, 0.0
        %v2100 = vsel %vm904, %v843, 0.0
        %v2101 = vsel %vm905, %v2066, 0.0
        %v2102 = vsel %vm906, %v2068, 0.0
        %s2103 = scalar_lea.vmem %s1, 12
        %v2104 = vld [vmem:[%s2103] sm:$0xf]
        %v2106 = vsel %vm940, %v2071, 0
        %v2109 = vsel %vm940, %v2072, 0
        %v2112 = vsel %vm940, %v2073, 0
        %v2115 = vsel %vm940, %v2074, 0
        %v2118 = vsel %vm940, %v2075, 0
        %v2121 = vsel %vm940, %v2076, 0
        %v2124 = vsel %vm940, %v2077, 0
        %v2127 = vsel %vm940, %v2078, 0
        %v2130 = vsel %vm940, %v2079, 0
        %v2133 = vsel %vm940, %v2080, 0
        %v2136 = vsel %vm940, %v2081, 0
        %v2139 = vsel %vm940, %v2082, 0
        %v2142 = vsel %vm940, %v2083, 0
        %v2145 = vsel %vm940, %v2084, 0
        %v2148 = vsel %vm940, %v2085, 0
        %v2151 = vsel %vm940, %v2086, 0
        %v2154 = vsel %vm940, %v2087, 0
        %v2157 = vsel %vm940, %v2088, 0
        %v2160 = vsel %vm940, %v2089, 0
        %v2163 = vsel %vm940, %v2090, 0
        %v2166 = vsel %vm940, %v2091, 0
        %v2169 = vsel %vm940, %v2092, 0
        %v2172 = vsel %vm940, %v2093, 0
        %v2175 = vsel %vm940, %v2094, 0
        %v2178 = vsel %vm940, %v2095, 0
        %v2181 = vsel %vm940, %v2096, 0
        %v2184 = vsel %vm940, %v2097, 0
        %v2187 = vsel %vm940, %v2098, 0
        %v2190 = vsel %vm940, %v2099, 0
        %v2193 = vsel %vm940, %v2100, 0
        %v2196 = vsel %vm940, %v2101, 0
        %v2199 = vsel %vm940, %v2102, 0
        %v2202 = vsel %vm1004, %v2104, 0
        %2204 = vmatprep.subr.mxu0 0.0
        %2205 = vmatpush1.msra.mxu0 0.0
        %2206 = vmatprep.subr.mxu0 0.0
        %2207 = vmatpush1.msra.mxu0 0.0
        %2208 = vmatprep.subr.mxu0 0.0
        %2209 = vmatpush1.msra.mxu0 0.0
        %2210 = vmatprep.subr.mxu0 0.0
        %2211 = vmatpush1.msra.mxu0 0.0
        %2212 = vmatprep.subr.mxu0 0.0
        %2213 = vmatpush1.msra.mxu0 0.0
        %2214 = vmatprep.subr.mxu0 0.0
        %2215 = vmatpush1.msra.mxu0 0.0
        %2216 = vmatprep.subr.mxu0 0.0
        %2217 = vmatpush1.msra.mxu0 0.0
        %2218 = vmatprep.subr.mxu0 0.0
        %2219 = vmatpush1.msra.mxu0 0.0
        %2220 = vmatprep.subr.mxu0 0.0
        %2221 = vmatpush1.msra.mxu0 0.0
        %2222 = vmatprep.subr.mxu0 0.0
        %2223 = vmatpush1.msra.mxu0 0.0
        %2224 = vmatprep.subr.mxu0 0.0
        %2225 = vmatpush1.msra.mxu0 0.0
        %2226 = vmatprep.subr.mxu0 0.0
        %2227 = vmatpush1.msra.mxu0 0.0
        %2228 = vmatprep.subr.mxu0 0.0
        %2229 = vmatpush1.msra.mxu0 0.0
        %2230 = vmatprep.subr.mxu0 0.0
        %2231 = vmatpush1.msra.mxu0 0.0
        %2232 = vmatprep.subr.mxu0 0.0
        %2233 = vmatpush1.msra.mxu0 0.0
        %2234 = vmatprep.subr.mxu0 0.0
        %2235 = vmatpush1.msra.mxu0 %v2202
        %2236 = vmatprep.subr.mxu0 0.0
        %2237 = vmatpush2.msra.mxu0 0.0
        %2238 = vmatprep.subr.mxu0 0.0
        %2239 = vmatpush2.msra.mxu0 0.0
        %2240 = vmatprep.subr.mxu0 0.0
        %2241 = vmatpush2.msra.mxu0 0.0
        %2242 = vmatprep.subr.mxu0 0.0
        %2243 = vmatpush2.msra.mxu0 0.0
        %2244 = vmatprep.subr.mxu0 0.0
        %2245 = vmatpush2.msra.mxu0 0.0
        %2246 = vmatprep.subr.mxu0 0.0
        %2247 = vmatpush2.msra.mxu0 0.0
        %2248 = vmatprep.subr.mxu0 0.0
        %2249 = vmatpush2.msra.mxu0 0.0
        %2250 = vmatprep.subr.mxu0 0.0
        %2251 = vmatpush2.msra.mxu0 0.0
        %2252 = vmatprep.subr.mxu0 0.0
        %2253 = vmatpush2.msra.mxu0 0.0
        %2254 = vmatprep.subr.mxu0 0.0
        %2255 = vmatpush2.msra.mxu0 0.0
        %2256 = vmatprep.subr.mxu0 0.0
        %2257 = vmatpush2.msra.mxu0 0.0
        %2258 = vmatprep.subr.mxu0 0.0
        %2259 = vmatpush2.msra.mxu0 0.0
        %2260 = vmatprep.subr.mxu0 0.0
        %2261 = vmatpush2.msra.mxu0 0.0
        %2262 = vmatprep.subr.mxu0 0.0
        %2263 = vmatpush2.msra.mxu0 0.0
        %2264 = vmatprep.subr.mxu0 0.0
        %2265 = vmatpush2.msra.mxu0 0.0
        %2266 = vmatprep.subr.mxu0 0.0
        %2267 = vmatpush2.msra.mxu0 0.0
        %2268 = vmatprep.mubr.f32.mxu0 0.0
        %2269 = vmatmul.mubr.f32.gmra.mxu0 %v2106
        %v2270 = vpop.f32.mrf.mxu0
        %v2271 = vadd.f32 0.0, %v2270
        %v2272 = vpop.f32.mrf.mxu0
        %2273 = vmatprep.mubr.f32.mxu0 0.0
        %2274 = vmatmul.mubr.f32.gmra.mxu0 %v2109
        %v2275 = vpop.f32.mrf.mxu0
        %v2276 = vadd.f32 0.0, %v2275
        %v2277 = vpop.f32.mrf.mxu0
        %2278 = vmatprep.mubr.f32.mxu0 0.0
        %2279 = vmatmul.mubr.f32.gmra.mxu0 %v2112
        %v2280 = vpop.f32.mrf.mxu0
        %v2281 = vadd.f32 0.0, %v2280
        %v2282 = vpop.f32.mrf.mxu0
        %2283 = vmatprep.mubr.f32.mxu0 0.0
        %2284 = vmatmul.mubr.f32.gmra.mxu0 %v2115
        %v2285 = vpop.f32.mrf.mxu0
        %v2286 = vadd.f32 0.0, %v2285
        %v2287 = vpop.f32.mrf.mxu0
        %2288 = vmatprep.mubr.f32.mxu0 0.0
        %2289 = vmatmul.mubr.f32.gmra.mxu0 %v2118
        %v2290 = vpop.f32.mrf.mxu0
        %v2291 = vadd.f32 0.0, %v2290
        %v2292 = vpop.f32.mrf.mxu0
        %2293 = vmatprep.mubr.f32.mxu0 0.0
        %2294 = vmatmul.mubr.f32.gmra.mxu0 %v2121
        %v2295 = vpop.f32.mrf.mxu0
        %v2296 = vadd.f32 0.0, %v2295
        %v2297 = vpop.f32.mrf.mxu0
        %2298 = vmatprep.mubr.f32.mxu0 0.0
        %2299 = vmatmul.mubr.f32.gmra.mxu0 %v2124
        %v2300 = vpop.f32.mrf.mxu0
        %v2301 = vadd.f32 0.0, %v2300
        %v2302 = vpop.f32.mrf.mxu0
        %2303 = vmatprep.mubr.f32.mxu0 0.0
        %2304 = vmatmul.mubr.f32.gmra.mxu0 %v2127
        %v2305 = vpop.f32.mrf.mxu0
        %v2306 = vadd.f32 0.0, %v2305
        %v2307 = vpop.f32.mrf.mxu0
        %2308 = vmatprep.mubr.f32.mxu0 0.0
        %2309 = vmatmul.mubr.f32.gmra.mxu0 %v2130
        %v2310 = vpop.f32.mrf.mxu0
        %v2311 = vadd.f32 0.0, %v2310
        %v2312 = vpop.f32.mrf.mxu0
        %2313 = vmatprep.mubr.f32.mxu0 0.0
        %2314 = vmatmul.mubr.f32.gmra.mxu0 %v2133
        %v2315 = vpop.f32.mrf.mxu0
        %v2316 = vadd.f32 0.0, %v2315
        %v2317 = vpop.f32.mrf.mxu0
        %2318 = vmatprep.mubr.f32.mxu0 0.0
        %2319 = vmatmul.mubr.f32.gmra.mxu0 %v2136
        %v2320 = vpop.f32.mrf.mxu0
        %v2321 = vadd.f32 0.0, %v2320
        %v2322 = vpop.f32.mrf.mxu0
        %2323 = vmatprep.mubr.f32.mxu0 0.0
        %2324 = vmatmul.mubr.f32.gmra.mxu0 %v2139
        %v2325 = vpop.f32.mrf.mxu0
        %v2326 = vadd.f32 0.0, %v2325
        %v2327 = vpop.f32.mrf.mxu0
        %2328 = vmatprep.mubr.f32.mxu0 0.0
        %2329 = vmatmul.mubr.f32.gmra.mxu0 %v2142
        %v2330 = vpop.f32.mrf.mxu0
        %v2331 = vadd.f32 0.0, %v2330
        %v2332 = vpop.f32.mrf.mxu0
        %2333 = vmatprep.mubr.f32.mxu0 0.0
        %2334 = vmatmul.mubr.f32.gmra.mxu0 %v2145
        %v2335 = vpop.f32.mrf.mxu0
        %v2336 = vadd.f32 0.0, %v2335
        %v2337 = vpop.f32.mrf.mxu0
        %2338 = vmatprep.mubr.f32.mxu0 0.0
        %2339 = vmatmul.mubr.f32.gmra.mxu0 %v2148
        %v2340 = vpop.f32.mrf.mxu0
        %v2341 = vadd.f32 0.0, %v2340
        %v2342 = vpop.f32.mrf.mxu0
        %2343 = vmatprep.mubr.f32.mxu0 0.0
        %2344 = vmatmul.mubr.f32.gmra.mxu0 %v2151
        %v2345 = vpop.f32.mrf.mxu0
        %v2346 = vadd.f32 0.0, %v2345
        %v2347 = vpop.f32.mrf.mxu0
        %2348 = vmatprep.mubr.f32.mxu0 0.0
        %2349 = vmatmul.mubr.f32.gmra.mxu0 %v2154
        %v2350 = vpop.f32.mrf.mxu0
        %v2351 = vadd.f32 0.0, %v2350
        %v2352 = vpop.f32.mrf.mxu0
        %2353 = vmatprep.mubr.f32.mxu0 0.0
        %2354 = vmatmul.mubr.f32.gmra.mxu0 %v2157
        %v2355 = vpop.f32.mrf.mxu0
        %v2356 = vadd.f32 0.0, %v2355
        %v2357 = vpop.f32.mrf.mxu0
        %2358 = vmatprep.mubr.f32.mxu0 0.0
        %2359 = vmatmul.mubr.f32.gmra.mxu0 %v2160
        %v2360 = vpop.f32.mrf.mxu0
        %v2361 = vadd.f32 0.0, %v2360
        %v2362 = vpop.f32.mrf.mxu0
        %2363 = vmatprep.mubr.f32.mxu0 0.0
        %2364 = vmatmul.mubr.f32.gmra.mxu0 %v2163
        %v2365 = vpop.f32.mrf.mxu0
        %v2366 = vadd.f32 0.0, %v2365
        %v2367 = vpop.f32.mrf.mxu0
        %2368 = vmatprep.mubr.f32.mxu0 0.0
        %2369 = vmatmul.mubr.f32.gmra.mxu0 %v2166
        %v2370 = vpop.f32.mrf.mxu0
        %v2371 = vadd.f32 0.0, %v2370
        %v2372 = vpop.f32.mrf.mxu0
        %2373 = vmatprep.mubr.f32.mxu0 0.0
        %2374 = vmatmul.mubr.f32.gmra.mxu0 %v2169
        %v2375 = vpop.f32.mrf.mxu0
        %v2376 = vadd.f32 0.0, %v2375
        %v2377 = vpop.f32.mrf.mxu0
        %2378 = vmatprep.mubr.f32.mxu0 0.0
        %2379 = vmatmul.mubr.f32.gmra.mxu0 %v2172
        %v2380 = vpop.f32.mrf.mxu0
        %v2381 = vadd.f32 0.0, %v2380
        %v2382 = vpop.f32.mrf.mxu0
        %2383 = vmatprep.mubr.f32.mxu0 0.0
        %2384 = vmatmul.mubr.f32.gmra.mxu0 %v2175
        %v2385 = vpop.f32.mrf.mxu0
        %v2386 = vadd.f32 0.0, %v2385
        %v2387 = vpop.f32.mrf.mxu0
        %2388 = vmatprep.mubr.f32.mxu0 0.0
        %2389 = vmatmul.mubr.f32.gmra.mxu0 %v2178
        %v2390 = vpop.f32.mrf.mxu0
        %v2391 = vadd.f32 0.0, %v2390
        %v2392 = vpop.f32.mrf.mxu0
        %2393 = vmatprep.mubr.f32.mxu0 0.0
        %2394 = vmatmul.mubr.f32.gmra.mxu0 %v2181
        %v2395 = vpop.f32.mrf.mxu0
        %v2396 = vadd.f32 0.0, %v2395
        %v2397 = vpop.f32.mrf.mxu0
        %2398 = vmatprep.mubr.f32.mxu0 0.0
        %2399 = vmatmul.mubr.f32.gmra.mxu0 %v2184
        %v2400 = vpop.f32.mrf.mxu0
        %v2401 = vadd.f32 0.0, %v2400
        %v2402 = vpop.f32.mrf.mxu0
        %2403 = vmatprep.mubr.f32.mxu0 0.0
        %2404 = vmatmul.mubr.f32.gmra.mxu0 %v2187
        %v2405 = vpop.f32.mrf.mxu0
        %v2406 = vadd.f32 0.0, %v2405
        %v2407 = vpop.f32.mrf.mxu0
        %2408 = vmatprep.mubr.f32.mxu0 0.0
        %2409 = vmatmul.mubr.f32.gmra.mxu0 %v2190
        %v2410 = vpop.f32.mrf.mxu0
        %v2411 = vadd.f32 0.0, %v2410
        %v2412 = vpop.f32.mrf.mxu0
        %2413 = vmatprep.mubr.f32.mxu0 0.0
        %2414 = vmatmul.mubr.f32.gmra.mxu0 %v2193
        %v2415 = vpop.f32.mrf.mxu0
        %v2416 = vadd.f32 0.0, %v2415
        %v2417 = vpop.f32.mrf.mxu0
        %2418 = vmatprep.mubr.f32.mxu0 0.0
        %2419 = vmatmul.mubr.f32.gmra.mxu0 %v2196
        %v2420 = vpop.f32.mrf.mxu0
        %v2421 = vadd.f32 0.0, %v2420
        %v2422 = vpop.f32.mrf.mxu0
        %2423 = vmatprep.mubr.f32.mxu0 0.0
        %2424 = vmatmul.mubr.f32.gmra.mxu0 %v2199
        %v2425 = vpop.f32.mrf.mxu0
        %v2426 = vadd.f32 0.0, %v2425
        %v2427 = vpop.f32.mrf.mxu0
        %2428 = vdwg.mxu0
        %v2429 = vadd.f32 %v2032, %v2271
        %v2430 = vadd.f32 %v2033, %v2276
        %v2431 = vadd.f32 %v2034, %v2281
        %v2432 = vadd.f32 %v2035, %v2286
        %v2433 = vadd.f32 %v2036, %v2291
        %v2434 = vadd.f32 %v2037, %v2296
        %v2435 = vadd.f32 %v2038, %v2301
        %v2436 = vadd.f32 %v2039, %v2306
        %v2437 = vadd.f32 %v2040, %v2311
        %v2438 = vadd.f32 %v2041, %v2316
        %v2439 = vadd.f32 %v2042, %v2321
        %v2440 = vadd.f32 %v2043, %v2326
        %v2441 = vadd.f32 %v2044, %v2331
        %v2442 = vadd.f32 %v2045, %v2336
        %v2443 = vadd.f32 %v2046, %v2341
        %v2444 = vadd.f32 %v2047, %v2346
        %v2445 = vadd.f32 %v2048, %v2351
        %v2446 = vadd.f32 %v2049, %v2356
        %v2447 = vadd.f32 %v2050, %v2361
        %v2448 = vadd.f32 %v2051, %v2366
        %v2449 = vadd.f32 %v2052, %v2371
        %v2450 = vadd.f32 %v2053, %v2376
        %v2451 = vadd.f32 %v2054, %v2381
        %v2452 = vadd.f32 %v2055, %v2386
        %v2453 = vadd.f32 %v2056, %v2391
        %v2454 = vadd.f32 %v2057, %v2396
        %v2455 = vadd.f32 %v2058, %v2401
        %v2456 = vadd.f32 %v2059, %v2406
        %v2457 = vadd.f32 %v2060, %v2411
        %v2458 = vadd.f32 %v2061, %v2416
        %v2459 = vadd.f32 %v2062, %v2421
        %v2460 = vadd.f32 %v2063, %v2426
        %s2461 = scalar_lea.vmem %s1, 16
        %v2462 = vld [vmem:[%s2461] sm:$0xf]
        %v2463 = vsel %vm940, %v335, 0
        %v2465 = vsel %vm940, %v336, 0
        %v2468 = vsel %vm1004, %v2462, 0
        %2470 = vmatprep.subr.mxu0 0.0
        %2471 = vmatpush1.msra.mxu0 0.0
        %2472 = vmatprep.subr.mxu0 0.0
        %2473 = vmatpush1.msra.mxu0 0.0
        %2474 = vmatprep.subr.mxu0 0.0
        %2475 = vmatpush1.msra.mxu0 0.0
        %2476 = vmatprep.subr.mxu0 0.0
        %2477 = vmatpush1.msra.mxu0 0.0
        %2478 = vmatprep.subr.mxu0 0.0
        %2479 = vmatpush1.msra.mxu0 0.0
        %2480 = vmatprep.subr.mxu0 0.0
        %2481 = vmatpush1.msra.mxu0 0.0
        %2482 = vmatprep.subr.mxu0 0.0
        %2483 = vmatpush1.msra.mxu0 0.0
        %2484 = vmatprep.subr.mxu0 0.0
        %2485 = vmatpush1.msra.mxu0 0.0
        %2486 = vmatprep.subr.mxu0 0.0
        %2487 = vmatpush1.msra.mxu0 0.0
        %2488 = vmatprep.subr.mxu0 0.0
        %2489 = vmatpush1.msra.mxu0 0.0
        %2490 = vmatprep.subr.mxu0 0.0
        %2491 = vmatpush1.msra.mxu0 0.0
        %2492 = vmatprep.subr.mxu0 0.0
        %2493 = vmatpush1.msra.mxu0 0.0
        %2494 = vmatprep.subr.mxu0 0.0
        %2495 = vmatpush1.msra.mxu0 0.0
        %2496 = vmatprep.subr.mxu0 0.0
        %2497 = vmatpush1.msra.mxu0 0.0
        %2498 = vmatprep.subr.mxu0 0.0
        %2499 = vmatpush1.msra.mxu0 0.0
        %2500 = vmatprep.subr.mxu0 0.0
        %2501 = vmatpush1.msra.mxu0 %v2468
        %2502 = vmatprep.subr.mxu0 0.0
        %2503 = vmatpush2.msra.mxu0 0.0
        %2504 = vmatprep.subr.mxu0 0.0
        %2505 = vmatpush2.msra.mxu0 0.0
        %2506 = vmatprep.subr.mxu0 0.0
        %2507 = vmatpush2.msra.mxu0 0.0
        %2508 = vmatprep.subr.mxu0 0.0
        %2509 = vmatpush2.msra.mxu0 0.0
        %2510 = vmatprep.subr.mxu0 0.0
        %2511 = vmatpush2.msra.mxu0 0.0
        %2512 = vmatprep.subr.mxu0 0.0
        %2513 = vmatpush2.msra.mxu0 0.0
        %2514 = vmatprep.subr.mxu0 0.0
        %2515 = vmatpush2.msra.mxu0 0.0
        %2516 = vmatprep.subr.mxu0 0.0
        %2517 = vmatpush2.msra.mxu0 0.0
        %2518 = vmatprep.subr.mxu0 0.0
        %2519 = vmatpush2.msra.mxu0 0.0
        %2520 = vmatprep.subr.mxu0 0.0
        %2521 = vmatpush2.msra.mxu0 0.0
        %2522 = vmatprep.subr.mxu0 0.0
        %2523 = vmatpush2.msra.mxu0 0.0
        %2524 = vmatprep.subr.mxu0 0.0
        %2525 = vmatpush2.msra.mxu0 0.0
        %2526 = vmatprep.subr.mxu0 0.0
        %2527 = vmatpush2.msra.mxu0 0.0
        %2528 = vmatprep.subr.mxu0 0.0
        %2529 = vmatpush2.msra.mxu0 0.0
        %2530 = vmatprep.subr.mxu0 0.0
        %2531 = vmatpush2.msra.mxu0 0.0
        %2532 = vmatprep.subr.mxu0 0.0
        %2533 = vmatpush2.msra.mxu0 0.0
        %2534 = vmatprep.mubr.f32.mxu0 0.0
        %2535 = vmatmul.mubr.f32.gmra.mxu0 %v944
        %v2536 = vpop.f32.mrf.mxu0
        %v2537 = vadd.f32 0.0, %v2536
        %v2538 = vpop.f32.mrf.mxu0
        %2539 = vmatprep.mubr.f32.mxu0 0.0
        %2540 = vmatmul.mubr.f32.gmra.mxu0 %v946
        %v2541 = vpop.f32.mrf.mxu0
        %v2542 = vadd.f32 0.0, %v2541
        %v2543 = vpop.f32.mrf.mxu0
        %2544 = vmatprep.mubr.f32.mxu0 0.0
        %2545 = vmatmul.mubr.f32.gmra.mxu0 %v948
        %v2546 = vpop.f32.mrf.mxu0
        %v2547 = vadd.f32 0.0, %v2546
        %v2548 = vpop.f32.mrf.mxu0
        %2549 = vmatprep.mubr.f32.mxu0 0.0
        %2550 = vmatmul.mubr.f32.gmra.mxu0 %v950
        %v2551 = vpop.f32.mrf.mxu0
        %v2552 = vadd.f32 0.0, %v2551
        %v2553 = vpop.f32.mrf.mxu0
        %2554 = vmatprep.mubr.f32.mxu0 0.0
        %2555 = vmatmul.mubr.f32.gmra.mxu0 %v952
        %v2556 = vpop.f32.mrf.mxu0
        %v2557 = vadd.f32 0.0, %v2556
        %v2558 = vpop.f32.mrf.mxu0
        %2559 = vmatprep.mubr.f32.mxu0 0.0
        %2560 = vmatmul.mubr.f32.gmra.mxu0 %v954
        %v2561 = vpop.f32.mrf.mxu0
        %v2562 = vadd.f32 0.0, %v2561
        %v2563 = vpop.f32.mrf.mxu0
        %2564 = vmatprep.mubr.f32.mxu0 0.0
        %2565 = vmatmul.mubr.f32.gmra.mxu0 %v956
        %v2566 = vpop.f32.mrf.mxu0
        %v2567 = vadd.f32 0.0, %v2566
        %v2568 = vpop.f32.mrf.mxu0
        %2569 = vmatprep.mubr.f32.mxu0 0.0
        %2570 = vmatmul.mubr.f32.gmra.mxu0 %v958
        %v2571 = vpop.f32.mrf.mxu0
        %v2572 = vadd.f32 0.0, %v2571
        %v2573 = vpop.f32.mrf.mxu0
        %2574 = vmatprep.mubr.f32.mxu0 0.0
        %2575 = vmatmul.mubr.f32.gmra.mxu0 %v960
        %v2576 = vpop.f32.mrf.mxu0
        %v2577 = vadd.f32 0.0, %v2576
        %v2578 = vpop.f32.mrf.mxu0
        %2579 = vmatprep.mubr.f32.mxu0 0.0
        %2580 = vmatmul.mubr.f32.gmra.mxu0 %v962
        %v2581 = vpop.f32.mrf.mxu0
        %v2582 = vadd.f32 0.0, %v2581
        %v2583 = vpop.f32.mrf.mxu0
        %2584 = vmatprep.mubr.f32.mxu0 0.0
        %2585 = vmatmul.mubr.f32.gmra.mxu0 %v964
        %v2586 = vpop.f32.mrf.mxu0
        %v2587 = vadd.f32 0.0, %v2586
        %v2588 = vpop.f32.mrf.mxu0
        %2589 = vmatprep.mubr.f32.mxu0 0.0
        %2590 = vmatmul.mubr.f32.gmra.mxu0 %v966
        %v2591 = vpop.f32.mrf.mxu0
        %v2592 = vadd.f32 0.0, %v2591
        %v2593 = vpop.f32.mrf.mxu0
        %2594 = vmatprep.mubr.f32.mxu0 0.0
        %2595 = vmatmul.mubr.f32.gmra.mxu0 %v968
        %v2596 = vpop.f32.mrf.mxu0
        %v2597 = vadd.f32 0.0, %v2596
        %v2598 = vpop.f32.mrf.mxu0
        %2599 = vmatprep.mubr.f32.mxu0 0.0
        %2600 = vmatmul.mubr.f32.gmra.mxu0 %v970
        %v2601 = vpop.f32.mrf.mxu0
        %v2602 = vadd.f32 0.0, %v2601
        %v2603 = vpop.f32.mrf.mxu0
        %2604 = vmatprep.mubr.f32.mxu0 0.0
        %2605 = vmatmul.mubr.f32.gmra.mxu0 %v972
        %v2606 = vpop.f32.mrf.mxu0
        %v2607 = vadd.f32 0.0, %v2606
        %v2608 = vpop.f32.mrf.mxu0
        %2609 = vmatprep.mubr.f32.mxu0 0.0
        %2610 = vmatmul.mubr.f32.gmra.mxu0 %v974
        %v2611 = vpop.f32.mrf.mxu0
        %v2612 = vadd.f32 0.0, %v2611
        %v2613 = vpop.f32.mrf.mxu0
        %2614 = vmatprep.mubr.f32.mxu0 0.0
        %2615 = vmatmul.mubr.f32.gmra.mxu0 %v976
        %v2616 = vpop.f32.mrf.mxu0
        %v2617 = vadd.f32 0.0, %v2616
        %v2618 = vpop.f32.mrf.mxu0
        %2619 = vmatprep.mubr.f32.mxu0 0.0
        %2620 = vmatmul.mubr.f32.gmra.mxu0 %v978
        %v2621 = vpop.f32.mrf.mxu0
        %v2622 = vadd.f32 0.0, %v2621
        %v2623 = vpop.f32.mrf.mxu0
        %2624 = vmatprep.mubr.f32.mxu0 0.0
        %2625 = vmatmul.mubr.f32.gmra.mxu0 %v980
        %v2626 = vpop.f32.mrf.mxu0
        %v2627 = vadd.f32 0.0, %v2626
        %v2628 = vpop.f32.mrf.mxu0
        %2629 = vmatprep.mubr.f32.mxu0 0.0
        %2630 = vmatmul.mubr.f32.gmra.mxu0 %v982
        %v2631 = vpop.f32.mrf.mxu0
        %v2632 = vadd.f32 0.0, %v2631
        %v2633 = vpop.f32.mrf.mxu0
        %2634 = vmatprep.mubr.f32.mxu0 0.0
        %2635 = vmatmul.mubr.f32.gmra.mxu0 %v984
        %v2636 = vpop.f32.mrf.mxu0
        %v2637 = vadd.f32 0.0, %v2636
        %v2638 = vpop.f32.mrf.mxu0
        %2639 = vmatprep.mubr.f32.mxu0 0.0
        %2640 = vmatmul.mubr.f32.gmra.mxu0 %v986
        %v2641 = vpop.f32.mrf.mxu0
        %v2642 = vadd.f32 0.0, %v2641
        %v2643 = vpop.f32.mrf.mxu0
        %2644 = vmatprep.mubr.f32.mxu0 0.0
        %2645 = vmatmul.mubr.f32.gmra.mxu0 %v988
        %v2646 = vpop.f32.mrf.mxu0
        %v2647 = vadd.f32 0.0, %v2646
        %v2648 = vpop.f32.mrf.mxu0
        %2649 = vmatprep.mubr.f32.mxu0 0.0
        %2650 = vmatmul.mubr.f32.gmra.mxu0 %v990
        %v2651 = vpop.f32.mrf.mxu0
        %v2652 = vadd.f32 0.0, %v2651
        %v2653 = vpop.f32.mrf.mxu0
        %2654 = vmatprep.mubr.f32.mxu0 0.0
        %2655 = vmatmul.mubr.f32.gmra.mxu0 %v992
        %v2656 = vpop.f32.mrf.mxu0
        %v2657 = vadd.f32 0.0, %v2656
        %v2658 = vpop.f32.mrf.mxu0
        %2659 = vmatprep.mubr.f32.mxu0 0.0
        %2660 = vmatmul.mubr.f32.gmra.mxu0 %v994
        %v2661 = vpop.f32.mrf.mxu0
        %v2662 = vadd.f32 0.0, %v2661
        %v2663 = vpop.f32.mrf.mxu0
        %2664 = vmatprep.mubr.f32.mxu0 0.0
        %2665 = vmatmul.mubr.f32.gmra.mxu0 %v996
        %v2666 = vpop.f32.mrf.mxu0
        %v2667 = vadd.f32 0.0, %v2666
        %v2668 = vpop.f32.mrf.mxu0
        %2669 = vmatprep.mubr.f32.mxu0 0.0
        %2670 = vmatmul.mubr.f32.gmra.mxu0 %v998
        %v2671 = vpop.f32.mrf.mxu0
        %v2672 = vadd.f32 0.0, %v2671
        %v2673 = vpop.f32.mrf.mxu0
        %2674 = vmatprep.mubr.f32.mxu0 0.0
        %2675 = vmatmul.mubr.f32.gmra.mxu0 %v1000
        %v2676 = vpop.f32.mrf.mxu0
        %v2677 = vadd.f32 0.0, %v2676
        %v2678 = vpop.f32.mrf.mxu0
        %2679 = vmatprep.mubr.f32.mxu0 0.0
        %2680 = vmatmul.mubr.f32.gmra.mxu0 %v1002
        %v2681 = vpop.f32.mrf.mxu0
        %v2682 = vadd.f32 0.0, %v2681
        %v2683 = vpop.f32.mrf.mxu0
        %2684 = vmatprep.mubr.f32.mxu0 0.0
        %2685 = vmatmul.mubr.f32.gmra.mxu0 %v2463
        %v2686 = vpop.f32.mrf.mxu0
        %v2687 = vadd.f32 0.0, %v2686
        %v2688 = vpop.f32.mrf.mxu0
        %2689 = vmatprep.mubr.f32.mxu0 0.0
        %2690 = vmatmul.mubr.f32.gmra.mxu0 %v2465
        %v2691 = vpop.f32.mrf.mxu0
        %v2692 = vadd.f32 0.0, %v2691
        %v2693 = vpop.f32.mrf.mxu0
        %2694 = vdwg.mxu0
        %v2695 = vadd.f32 %v2429, %v2537
        %v2696 = vadd.f32 %v2430, %v2542
        %v2697 = vadd.f32 %v2431, %v2547
        %v2698 = vadd.f32 %v2432, %v2552
        %v2699 = vadd.f32 %v2433, %v2557
        %v2700 = vadd.f32 %v2434, %v2562
        %v2701 = vadd.f32 %v2435, %v2567
        %v2702 = vadd.f32 %v2436, %v2572
        %v2703 = vadd.f32 %v2437, %v2577
        %v2704 = vadd.f32 %v2438, %v2582
        %v2705 = vadd.f32 %v2439, %v2587
        %v2706 = vadd.f32 %v2440, %v2592
        %v2707 = vadd.f32 %v2441, %v2597
        %v2708 = vadd.f32 %v2442, %v2602
        %v2709 = vadd.f32 %v2443, %v2607
        %v2710 = vadd.f32 %v2444, %v2612
        %v2711 = vadd.f32 %v2445, %v2617
        %v2712 = vadd.f32 %v2446, %v2622
        %v2713 = vadd.f32 %v2447, %v2627
        %v2714 = vadd.f32 %v2448, %v2632
        %v2715 = vadd.f32 %v2449, %v2637
        %v2716 = vadd.f32 %v2450, %v2642
        %v2717 = vadd.f32 %v2451, %v2647
        %v2718 = vadd.f32 %v2452, %v2652
        %v2719 = vadd.f32 %v2453, %v2657
        %v2720 = vadd.f32 %v2454, %v2662
        %v2721 = vadd.f32 %v2455, %v2667
        %v2722 = vadd.f32 %v2456, %v2672
        %v2723 = vadd.f32 %v2457, %v2677
        %v2724 = vadd.f32 %v2458, %v2682
        %v2725 = vadd.f32 %v2459, %v2687
        %v2726 = vadd.f32 %v2460, %v2692
        %v2727 = vrot.slane %v336, 1
        %v2728 = vsel %vm1552, %v1612, %v2727
        %v2731 = vsel %vm1552, %v2727, 0.0
        %v2732 = vsel %vm1646, %v1555, 0.0
        %v2733 = vsel %vm1647, %v1557, 0.0
        %v2734 = vsel %vm1648, %v1559, 0.0
        %v2735 = vsel %vm1649, %v1561, 0.0
        %v2736 = vsel %vm1650, %v1563, 0.0
        %v2737 = vsel %vm1651, %v1565, 0.0
        %v2738 = vsel %vm1652, %v1567, 0.0
        %v2739 = vsel %vm1653, %v1569, 0.0
        %v2740 = vsel %vm1654, %v1571, 0.0
        %v2741 = vsel %vm1655, %v1573, 0.0
        %v2742 = vsel %vm1656, %v1575, 0.0
        %v2743 = vsel %vm1657, %v1577, 0.0
        %v2744 = vsel %vm1658, %v1579, 0.0
        %v2745 = vsel %vm1659, %v1581, 0.0
        %v2746 = vsel %vm1660, %v1583, 0.0
        %v2747 = vsel %vm1661, %v1585, 0.0
        %v2748 = vsel %vm1662, %v1587, 0.0
        %v2749 = vsel %vm1663, %v1589, 0.0
        %v2750 = vsel %vm1664, %v1591, 0.0
        %v2751 = vsel %vm1665, %v1593, 0.0
        %v2752 = vsel %vm1666, %v1595, 0.0
        %v2753 = vsel %vm1667, %v1597, 0.0
        %v2754 = vsel %vm1668, %v1599, 0.0
        %v2755 = vsel %vm1669, %v1601, 0.0
        %v2756 = vsel %vm1670, %v1603, 0.0
        %v2757 = vsel %vm1671, %v1605, 0.0
        %v2758 = vsel %vm1672, %v1607, 0.0
        %v2759 = vsel %vm1673, %v1609, 0.0
        %v2760 = vsel %vm1674, %v1611, 0.0
        %v2761 = vsel %vm1675, %v1613, 0.0
        %v2762 = vsel %vm1676, %v2728, 0.0
        %v2763 = vsel %vm1677, %v2731, 0.0
        %s2764 = scalar_lea.vmem %s1, 20
        %v2765 = vld [vmem:[%s2764] sm:$0xf]
        %v2767 = vsel %vm940, %v2732, 0
        %v2770 = vsel %vm940, %v2733, 0
        %v2773 = vsel %vm940, %v2734, 0
        %v2776 = vsel %vm940, %v2735, 0
        %v2779 = vsel %vm940, %v2736, 0
        %v2782 = vsel %vm940, %v2737, 0
        %v2785 = vsel %vm940, %v2738, 0
        %v2788 = vsel %vm940, %v2739, 0
        %v2791 = vsel %vm940, %v2740, 0
        %v2794 = vsel %vm940, %v2741, 0
        %v2797 = vsel %vm940, %v2742, 0
        %v2800 = vsel %vm940, %v2743, 0
        %v2803 = vsel %vm940, %v2744, 0
        %v2806 = vsel %vm940, %v2745, 0
        %v2809 = vsel %vm940, %v2746, 0
        %v2812 = vsel %vm940, %v2747, 0
        %v2815 = vsel %vm940, %v2748, 0
        %v2818 = vsel %vm940, %v2749, 0
        %v2821 = vsel %vm940, %v2750, 0
        %v2824 = vsel %vm940, %v2751, 0
        %v2827 = vsel %vm940, %v2752, 0
        %v2830 = vsel %vm940, %v2753, 0
        %v2833 = vsel %vm940, %v2754, 0
        %v2836 = vsel %vm940, %v2755, 0
        %v2839 = vsel %vm940, %v2756, 0
        %v2842 = vsel %vm940, %v2757, 0
        %v2845 = vsel %vm940, %v2758, 0
        %v2848 = vsel %vm940, %v2759, 0
        %v2851 = vsel %vm940, %v2760, 0
        %v2854 = vsel %vm940, %v2761, 0
        %v2857 = vsel %vm940, %v2762, 0
        %v2860 = vsel %vm940, %v2763, 0
        %v2863 = vsel %vm1004, %v2765, 0
        %2865 = vmatprep.subr.mxu0 0.0
        %2866 = vmatpush1.msra.mxu0 0.0
        %2867 = vmatprep.subr.mxu0 0.0
        %2868 = vmatpush1.msra.mxu0 0.0
        %2869 = vmatprep.subr.mxu0 0.0
        %2870 = vmatpush1.msra.mxu0 0.0
        %2871 = vmatprep.subr.mxu0 0.0
        %2872 = vmatpush1.msra.mxu0 0.0
        %2873 = vmatprep.subr.mxu0 0.0
        %2874 = vmatpush1.msra.mxu0 0.0
        %2875 = vmatprep.subr.mxu0 0.0
        %2876 = vmatpush1.msra.mxu0 0.0
        %2877 = vmatprep.subr.mxu0 0.0
        %2878 = vmatpush1.msra.mxu0 0.0
        %2879 = vmatprep.subr.mxu0 0.0
        %2880 = vmatpush1.msra.mxu0 0.0
        %2881 = vmatprep.subr.mxu0 0.0
        %2882 = vmatpush1.msra.mxu0 0.0
        %2883 = vmatprep.subr.mxu0 0.0
        %2884 = vmatpush1.msra.mxu0 0.0
        %2885 = vmatprep.subr.mxu0 0.0
        %2886 = vmatpush1.msra.mxu0 0.0
        %2887 = vmatprep.subr.mxu0 0.0
        %2888 = vmatpush1.msra.mxu0 0.0
        %2889 = vmatprep.subr.mxu0 0.0
        %2890 = vmatpush1.msra.mxu0 0.0
        %2891 = vmatprep.subr.mxu0 0.0
        %2892 = vmatpush1.msra.mxu0 0.0
        %2893 = vmatprep.subr.mxu0 0.0
        %2894 = vmatpush1.msra.mxu0 0.0
        %2895 = vmatprep.subr.mxu0 0.0
        %2896 = vmatpush1.msra.mxu0 %v2863
        %2897 = vmatprep.subr.mxu0 0.0
        %2898 = vmatpush2.msra.mxu0 0.0
        %2899 = vmatprep.subr.mxu0 0.0
        %2900 = vmatpush2.msra.mxu0 0.0
        %2901 = vmatprep.subr.mxu0 0.0
        %2902 = vmatpush2.msra.mxu0 0.0
        %2903 = vmatprep.subr.mxu0 0.0
        %2904 = vmatpush2.msra.mxu0 0.0
        %2905 = vmatprep.subr.mxu0 0.0
        %2906 = vmatpush2.msra.mxu0 0.0
        %2907 = vmatprep.subr.mxu0 0.0
        %2908 = vmatpush2.msra.mxu0 0.0
        %2909 = vmatprep.subr.mxu0 0.0
        %2910 = vmatpush2.msra.mxu0 0.0
        %2911 = vmatprep.subr.mxu0 0.0
        %2912 = vmatpush2.msra.mxu0 0.0
        %2913 = vmatprep.subr.mxu0 0.0
        %2914 = vmatpush2.msra.mxu0 0.0
        %2915 = vmatprep.subr.mxu0 0.0
        %2916 = vmatpush2.msra.mxu0 0.0
        %2917 = vmatprep.subr.mxu0 0.0
        %2918 = vmatpush2.msra.mxu0 0.0
        %2919 = vmatprep.subr.mxu0 0.0
        %2920 = vmatpush2.msra.mxu0 0.0
        %2921 = vmatprep.subr.mxu0 0.0
        %2922 = vmatpush2.msra.mxu0 0.0
        %2923 = vmatprep.subr.mxu0 0.0
        %2924 = vmatpush2.msra.mxu0 0.0
        %2925 = vmatprep.subr.mxu0 0.0
        %2926 = vmatpush2.msra.mxu0 0.0
        %2927 = vmatprep.subr.mxu0 0.0
        %2928 = vmatpush2.msra.mxu0 0.0
        %2929 = vmatprep.mubr.f32.mxu0 0.0
        %2930 = vmatmul.mubr.f32.gmra.mxu0 %v2767
        %v2931 = vpop.f32.mrf.mxu0
        %v2932 = vadd.f32 0.0, %v2931
        %v2933 = vpop.f32.mrf.mxu0
        %2934 = vmatprep.mubr.f32.mxu0 0.0
        %2935 = vmatmul.mubr.f32.gmra.mxu0 %v2770
        %v2936 = vpop.f32.mrf.mxu0
        %v2937 = vadd.f32 0.0, %v2936
        %v2938 = vpop.f32.mrf.mxu0
        %2939 = vmatprep.mubr.f32.mxu0 0.0
        %2940 = vmatmul.mubr.f32.gmra.mxu0 %v2773
        %v2941 = vpop.f32.mrf.mxu0
        %v2942 = vadd.f32 0.0, %v2941
        %v2943 = vpop.f32.mrf.mxu0
        %2944 = vmatprep.mubr.f32.mxu0 0.0
        %2945 = vmatmul.mubr.f32.gmra.mxu0 %v2776
        %v2946 = vpop.f32.mrf.mxu0
        %v2947 = vadd.f32 0.0, %v2946
        %v2948 = vpop.f32.mrf.mxu0
        %2949 = vmatprep.mubr.f32.mxu0 0.0
        %2950 = vmatmul.mubr.f32.gmra.mxu0 %v2779
        %v2951 = vpop.f32.mrf.mxu0
        %v2952 = vadd.f32 0.0, %v2951
        %v2953 = vpop.f32.mrf.mxu0
        %2954 = vmatprep.mubr.f32.mxu0 0.0
        %2955 = vmatmul.mubr.f32.gmra.mxu0 %v2782
        %v2956 = vpop.f32.mrf.mxu0
        %v2957 = vadd.f32 0.0, %v2956
        %v2958 = vpop.f32.mrf.mxu0
        %2959 = vmatprep.mubr.f32.mxu0 0.0
        %2960 = vmatmul.mubr.f32.gmra.mxu0 %v2785
        %v2961 = vpop.f32.mrf.mxu0
        %v2962 = vadd.f32 0.0, %v2961
        %v2963 = vpop.f32.mrf.mxu0
        %2964 = vmatprep.mubr.f32.mxu0 0.0
        %2965 = vmatmul.mubr.f32.gmra.mxu0 %v2788
        %v2966 = vpop.f32.mrf.mxu0
        %v2967 = vadd.f32 0.0, %v2966
        %v2968 = vpop.f32.mrf.mxu0
        %2969 = vmatprep.mubr.f32.mxu0 0.0
        %2970 = vmatmul.mubr.f32.gmra.mxu0 %v2791
        %v2971 = vpop.f32.mrf.mxu0
        %v2972 = vadd.f32 0.0, %v2971
        %v2973 = vpop.f32.mrf.mxu0
        %2974 = vmatprep.mubr.f32.mxu0 0.0
        %2975 = vmatmul.mubr.f32.gmra.mxu0 %v2794
        %v2976 = vpop.f32.mrf.mxu0
        %v2977 = vadd.f32 0.0, %v2976
        %v2978 = vpop.f32.mrf.mxu0
        %2979 = vmatprep.mubr.f32.mxu0 0.0
        %2980 = vmatmul.mubr.f32.gmra.mxu0 %v2797
        %v2981 = vpop.f32.mrf.mxu0
        %v2982 = vadd.f32 0.0, %v2981
        %v2983 = vpop.f32.mrf.mxu0
        %2984 = vmatprep.mubr.f32.mxu0 0.0
        %2985 = vmatmul.mubr.f32.gmra.mxu0 %v2800
        %v2986 = vpop.f32.mrf.mxu0
        %v2987 = vadd.f32 0.0, %v2986
        %v2988 = vpop.f32.mrf.mxu0
        %2989 = vmatprep.mubr.f32.mxu0 0.0
        %2990 = vmatmul.mubr.f32.gmra.mxu0 %v2803
        %v2991 = vpop.f32.mrf.mxu0
        %v2992 = vadd.f32 0.0, %v2991
        %v2993 = vpop.f32.mrf.mxu0
        %2994 = vmatprep.mubr.f32.mxu0 0.0
        %2995 = vmatmul.mubr.f32.gmra.mxu0 %v2806
        %v2996 = vpop.f32.mrf.mxu0
        %v2997 = vadd.f32 0.0, %v2996
        %v2998 = vpop.f32.mrf.mxu0
        %2999 = vmatprep.mubr.f32.mxu0 0.0
        %3000 = vmatmul.mubr.f32.gmra.mxu0 %v2809
        %v3001 = vpop.f32.mrf.mxu0
        %v3002 = vadd.f32 0.0, %v3001
        %v3003 = vpop.f32.mrf.mxu0
        %3004 = vmatprep.mubr.f32.mxu0 0.0
        %3005 = vmatmul.mubr.f32.gmra.mxu0 %v2812
        %v3006 = vpop.f32.mrf.mxu0
        %v3007 = vadd.f32 0.0, %v3006
        %v3008 = vpop.f32.mrf.mxu0
        %3009 = vmatprep.mubr.f32.mxu0 0.0
        %3010 = vmatmul.mubr.f32.gmra.mxu0 %v2815
        %v3011 = vpop.f32.mrf.mxu0
        %v3012 = vadd.f32 0.0, %v3011
        %v3013 = vpop.f32.mrf.mxu0
        %3014 = vmatprep.mubr.f32.mxu0 0.0
        %3015 = vmatmul.mubr.f32.gmra.mxu0 %v2818
        %v3016 = vpop.f32.mrf.mxu0
        %v3017 = vadd.f32 0.0, %v3016
        %v3018 = vpop.f32.mrf.mxu0
        %3019 = vmatprep.mubr.f32.mxu0 0.0
        %3020 = vmatmul.mubr.f32.gmra.mxu0 %v2821
        %v3021 = vpop.f32.mrf.mxu0
        %v3022 = vadd.f32 0.0, %v3021
        %v3023 = vpop.f32.mrf.mxu0
        %3024 = vmatprep.mubr.f32.mxu0 0.0
        %3025 = vmatmul.mubr.f32.gmra.mxu0 %v2824
        %v3026 = vpop.f32.mrf.mxu0
        %v3027 = vadd.f32 0.0, %v3026
        %v3028 = vpop.f32.mrf.mxu0
        %3029 = vmatprep.mubr.f32.mxu0 0.0
        %3030 = vmatmul.mubr.f32.gmra.mxu0 %v2827
        %v3031 = vpop.f32.mrf.mxu0
        %v3032 = vadd.f32 0.0, %v3031
        %v3033 = vpop.f32.mrf.mxu0
        %3034 = vmatprep.mubr.f32.mxu0 0.0
        %3035 = vmatmul.mubr.f32.gmra.mxu0 %v2830
        %v3036 = vpop.f32.mrf.mxu0
        %v3037 = vadd.f32 0.0, %v3036
        %v3038 = vpop.f32.mrf.mxu0
        %3039 = vmatprep.mubr.f32.mxu0 0.0
        %3040 = vmatmul.mubr.f32.gmra.mxu0 %v2833
        %v3041 = vpop.f32.mrf.mxu0
        %v3042 = vadd.f32 0.0, %v3041
        %v3043 = vpop.f32.mrf.mxu0
        %3044 = vmatprep.mubr.f32.mxu0 0.0
        %3045 = vmatmul.mubr.f32.gmra.mxu0 %v2836
        %v3046 = vpop.f32.mrf.mxu0
        %v3047 = vadd.f32 0.0, %v3046
        %v3048 = vpop.f32.mrf.mxu0
        %3049 = vmatprep.mubr.f32.mxu0 0.0
        %3050 = vmatmul.mubr.f32.gmra.mxu0 %v2839
        %v3051 = vpop.f32.mrf.mxu0
        %v3052 = vadd.f32 0.0, %v3051
        %v3053 = vpop.f32.mrf.mxu0
        %3054 = vmatprep.mubr.f32.mxu0 0.0
        %3055 = vmatmul.mubr.f32.gmra.mxu0 %v2842
        %v3056 = vpop.f32.mrf.mxu0
        %v3057 = vadd.f32 0.0, %v3056
        %v3058 = vpop.f32.mrf.mxu0
        %3059 = vmatprep.mubr.f32.mxu0 0.0
        %3060 = vmatmul.mubr.f32.gmra.mxu0 %v2845
        %v3061 = vpop.f32.mrf.mxu0
        %v3062 = vadd.f32 0.0, %v3061
        %v3063 = vpop.f32.mrf.mxu0
        %3064 = vmatprep.mubr.f32.mxu0 0.0
        %3065 = vmatmul.mubr.f32.gmra.mxu0 %v2848
        %v3066 = vpop.f32.mrf.mxu0
        %v3067 = vadd.f32 0.0, %v3066
        %v3068 = vpop.f32.mrf.mxu0
        %3069 = vmatprep.mubr.f32.mxu0 0.0
        %3070 = vmatmul.mubr.f32.gmra.mxu0 %v2851
        %v3071 = vpop.f32.mrf.mxu0
        %v3072 = vadd.f32 0.0, %v3071
        %v3073 = vpop.f32.mrf.mxu0
        %3074 = vmatprep.mubr.f32.mxu0 0.0
        %3075 = vmatmul.mubr.f32.gmra.mxu0 %v2854
        %v3076 = vpop.f32.mrf.mxu0
        %v3077 = vadd.f32 0.0, %v3076
        %v3078 = vpop.f32.mrf.mxu0
        %3079 = vmatprep.mubr.f32.mxu0 0.0
        %3080 = vmatmul.mubr.f32.gmra.mxu0 %v2857
        %v3081 = vpop.f32.mrf.mxu0
        %v3082 = vadd.f32 0.0, %v3081
        %v3083 = vpop.f32.mrf.mxu0
        %3084 = vmatprep.mubr.f32.mxu0 0.0
        %3085 = vmatmul.mubr.f32.gmra.mxu0 %v2860
        %v3086 = vpop.f32.mrf.mxu0
        %v3087 = vadd.f32 0.0, %v3086
        %v3088 = vpop.f32.mrf.mxu0
        %3089 = vdwg.mxu0
        %v3090 = vadd.f32 %v2695, %v2932
        %v3091 = vadd.f32 %v2696, %v2937
        %v3092 = vadd.f32 %v2697, %v2942
        %v3093 = vadd.f32 %v2698, %v2947
        %v3094 = vadd.f32 %v2699, %v2952
        %v3095 = vadd.f32 %v2700, %v2957
        %v3096 = vadd.f32 %v2701, %v2962
        %v3097 = vadd.f32 %v2702, %v2967
        %v3098 = vadd.f32 %v2703, %v2972
        %v3099 = vadd.f32 %v2704, %v2977
        %v3100 = vadd.f32 %v2705, %v2982
        %v3101 = vadd.f32 %v2706, %v2987
        %v3102 = vadd.f32 %v2707, %v2992
        %v3103 = vadd.f32 %v2708, %v2997
        %v3104 = vadd.f32 %v2709, %v3002
        %v3105 = vadd.f32 %v2710, %v3007
        %v3106 = vadd.f32 %v2711, %v3012
        %v3107 = vadd.f32 %v2712, %v3017
        %v3108 = vadd.f32 %v2713, %v3022
        %v3109 = vadd.f32 %v2714, %v3027
        %v3110 = vadd.f32 %v2715, %v3032
        %v3111 = vadd.f32 %v2716, %v3037
        %v3112 = vadd.f32 %v2717, %v3042
        %v3113 = vadd.f32 %v2718, %v3047
        %v3114 = vadd.f32 %v2719, %v3052
        %v3115 = vadd.f32 %v2720, %v3057
        %v3116 = vadd.f32 %v2721, %v3062
        %v3117 = vadd.f32 %v2722, %v3067
        %v3118 = vadd.f32 %v2723, %v3072
        %v3119 = vadd.f32 %v2724, %v3077
        %v3120 = vadd.f32 %v2725, %v3082
        %v3121 = vadd.f32 %v2726, %v3087
        %v3123 = vsel %vm784, %v2067, 0.0
        %v3124 = vsel %vm875, %v789, 0.0
        %v3125 = vsel %vm876, %v791, 0.0
        %v3126 = vsel %vm877, %v793, 0.0
        %v3127 = vsel %vm878, %v795, 0.0
        %v3128 = vsel %vm879, %v797, 0.0
        %v3129 = vsel %vm880, %v799, 0.0
        %v3130 = vsel %vm881, %v801, 0.0
        %v3131 = vsel %vm882, %v803, 0.0
        %v3132 = vsel %vm883, %v805, 0.0
        %v3133 = vsel %vm884, %v807, 0.0
        %v3134 = vsel %vm885, %v809, 0.0
        %v3135 = vsel %vm886, %v811, 0.0
        %v3136 = vsel %vm887, %v813, 0.0
        %v3137 = vsel %vm888, %v815, 0.0
        %v3138 = vsel %vm889, %v817, 0.0
        %v3139 = vsel %vm890, %v819, 0.0
        %v3140 = vsel %vm891, %v821, 0.0
        %v3141 = vsel %vm892, %v823, 0.0
        %v3142 = vsel %vm893, %v825, 0.0
        %v3143 = vsel %vm894, %v827, 0.0
        %v3144 = vsel %vm895, %v829, 0.0
        %v3145 = vsel %vm896, %v831, 0.0
        %v3146 = vsel %vm897, %v833, 0.0
        %v3147 = vsel %vm898, %v835, 0.0
        %v3148 = vsel %vm899, %v837, 0.0
        %v3149 = vsel %vm900, %v839, 0.0
        %v3150 = vsel %vm901, %v841, 0.0
        %v3151 = vsel %vm902, %v843, 0.0
        %v3152 = vsel %vm903, %v2066, 0.0
        %v3153 = vsel %vm904, %v2068, 0.0
        %v3154 = vsel %vm905, %v3123, 0.0
        %s3155 = scalar_lea.vmem %s1, 24
        %v3156 = vld [vmem:[%s3155] sm:$0xf]
        %v3158 = vsel %vm940, %v3124, 0
        %v3161 = vsel %vm940, %v3125, 0
        %v3164 = vsel %vm940, %v3126, 0
        %v3167 = vsel %vm940, %v3127, 0
        %v3170 = vsel %vm940, %v3128, 0
        %v3173 = vsel %vm940, %v3129, 0
        %v3176 = vsel %vm940, %v3130, 0
        %v3179 = vsel %vm940, %v3131, 0
        %v3182 = vsel %vm940, %v3132, 0
        %v3185 = vsel %vm940, %v3133, 0
        %v3188 = vsel %vm940, %v3134, 0
        %v3191 = vsel %vm940, %v3135, 0
        %v3194 = vsel %vm940, %v3136, 0
        %v3197 = vsel %vm940, %v3137, 0
        %v3200 = vsel %vm940, %v3138, 0
        %v3203 = vsel %vm940, %v3139, 0
        %v3206 = vsel %vm940, %v3140, 0
        %v3209 = vsel %vm940, %v3141, 0
        %v3212 = vsel %vm940, %v3142, 0
        %v3215 = vsel %vm940, %v3143, 0
        %v3218 = vsel %vm940, %v3144, 0
        %v3221 = vsel %vm940, %v3145, 0
        %v3224 = vsel %vm940, %v3146, 0
        %v3227 = vsel %vm940, %v3147, 0
        %v3230 = vsel %vm940, %v3148, 0
        %v3233 = vsel %vm940, %v3149, 0
        %v3236 = vsel %vm940, %v3150, 0
        %v3239 = vsel %vm940, %v3151, 0
        %v3242 = vsel %vm940, %v3152, 0
        %v3245 = vsel %vm940, %v3153, 0
        %v3248 = vsel %vm940, %v3154, 0
        %v3251 = vsel %vm1004, %v3156, 0
        %3253 = vmatprep.subr.mxu0 0.0
        %3254 = vmatpush1.msra.mxu0 0.0
        %3255 = vmatprep.subr.mxu0 0.0
        %3256 = vmatpush1.msra.mxu0 0.0
        %3257 = vmatprep.subr.mxu0 0.0
        %3258 = vmatpush1.msra.mxu0 0.0
        %3259 = vmatprep.subr.mxu0 0.0
        %3260 = vmatpush1.msra.mxu0 0.0
        %3261 = vmatprep.subr.mxu0 0.0
        %3262 = vmatpush1.msra.mxu0 0.0
        %3263 = vmatprep.subr.mxu0 0.0
        %3264 = vmatpush1.msra.mxu0 0.0
        %3265 = vmatprep.subr.mxu0 0.0
        %3266 = vmatpush1.msra.mxu0 0.0
        %3267 = vmatprep.subr.mxu0 0.0
        %3268 = vmatpush1.msra.mxu0 0.0
        %3269 = vmatprep.subr.mxu0 0.0
        %3270 = vmatpush1.msra.mxu0 0.0
        %3271 = vmatprep.subr.mxu0 0.0
        %3272 = vmatpush1.msra.mxu0 0.0
        %3273 = vmatprep.subr.mxu0 0.0
        %3274 = vmatpush1.msra.mxu0 0.0
        %3275 = vmatprep.subr.mxu0 0.0
        %3276 = vmatpush1.msra.mxu0 0.0
        %3277 = vmatprep.subr.mxu0 0.0
        %3278 = vmatpush1.msra.mxu0 0.0
        %3279 = vmatprep.subr.mxu0 0.0
        %3280 = vmatpush1.msra.mxu0 0.0
        %3281 = vmatprep.subr.mxu0 0.0
        %3282 = vmatpush1.msra.mxu0 0.0
        %3283 = vmatprep.subr.mxu0 0.0
        %3284 = vmatpush1.msra.mxu0 %v3251
        %3285 = vmatprep.subr.mxu0 0.0
        %3286 = vmatpush2.msra.mxu0 0.0
        %3287 = vmatprep.subr.mxu0 0.0
        %3288 = vmatpush2.msra.mxu0 0.0
        %3289 = vmatprep.subr.mxu0 0.0
        %3290 = vmatpush2.msra.mxu0 0.0
        %3291 = vmatprep.subr.mxu0 0.0
        %3292 = vmatpush2.msra.mxu0 0.0
        %3293 = vmatprep.subr.mxu0 0.0
        %3294 = vmatpush2.msra.mxu0 0.0
        %3295 = vmatprep.subr.mxu0 0.0
        %3296 = vmatpush2.msra.mxu0 0.0
        %3297 = vmatprep.subr.mxu0 0.0
        %3298 = vmatpush2.msra.mxu0 0.0
        %3299 = vmatprep.subr.mxu0 0.0
        %3300 = vmatpush2.msra.mxu0 0.0
        %3301 = vmatprep.subr.mxu0 0.0
        %3302 = vmatpush2.msra.mxu0 0.0
        %3303 = vmatprep.subr.mxu0 0.0
        %3304 = vmatpush2.msra.mxu0 0.0
        %3305 = vmatprep.subr.mxu0 0.0
        %3306 = vmatpush2.msra.mxu0 0.0
        %3307 = vmatprep.subr.mxu0 0.0
        %3308 = vmatpush2.msra.mxu0 0.0
        %3309 = vmatprep.subr.mxu0 0.0
        %3310 = vmatpush2.msra.mxu0 0.0
        %3311 = vmatprep.subr.mxu0 0.0
        %3312 = vmatpush2.msra.mxu0 0.0
        %3313 = vmatprep.subr.mxu0 0.0
        %3314 = vmatpush2.msra.mxu0 0.0
        %3315 = vmatprep.subr.mxu0 0.0
        %3316 = vmatpush2.msra.mxu0 0.0
        %3317 = vmatprep.mubr.f32.mxu0 0.0
        %3318 = vmatmul.mubr.f32.gmra.mxu0 %v3158
        %v3319 = vpop.f32.mrf.mxu0
        %v3320 = vadd.f32 0.0, %v3319
        %v3321 = vpop.f32.mrf.mxu0
        %3322 = vmatprep.mubr.f32.mxu0 0.0
        %3323 = vmatmul.mubr.f32.gmra.mxu0 %v3161
        %v3324 = vpop.f32.mrf.mxu0
        %v3325 = vadd.f32 0.0, %v3324
        %v3326 = vpop.f32.mrf.mxu0
        %3327 = vmatprep.mubr.f32.mxu0 0.0
        %3328 = vmatmul.mubr.f32.gmra.mxu0 %v3164
        %v3329 = vpop.f32.mrf.mxu0
        %v3330 = vadd.f32 0.0, %v3329
        %v3331 = vpop.f32.mrf.mxu0
        %3332 = vmatprep.mubr.f32.mxu0 0.0
        %3333 = vmatmul.mubr.f32.gmra.mxu0 %v3167
        %v3334 = vpop.f32.mrf.mxu0
        %v3335 = vadd.f32 0.0, %v3334
        %v3336 = vpop.f32.mrf.mxu0
        %3337 = vmatprep.mubr.f32.mxu0 0.0
        %3338 = vmatmul.mubr.f32.gmra.mxu0 %v3170
        %v3339 = vpop.f32.mrf.mxu0
        %v3340 = vadd.f32 0.0, %v3339
        %v3341 = vpop.f32.mrf.mxu0
        %3342 = vmatprep.mubr.f32.mxu0 0.0
        %3343 = vmatmul.mubr.f32.gmra.mxu0 %v3173
        %v3344 = vpop.f32.mrf.mxu0
        %v3345 = vadd.f32 0.0, %v3344
        %v3346 = vpop.f32.mrf.mxu0
        %3347 = vmatprep.mubr.f32.mxu0 0.0
        %3348 = vmatmul.mubr.f32.gmra.mxu0 %v3176
        %v3349 = vpop.f32.mrf.mxu0
        %v3350 = vadd.f32 0.0, %v3349
        %v3351 = vpop.f32.mrf.mxu0
        %3352 = vmatprep.mubr.f32.mxu0 0.0
        %3353 = vmatmul.mubr.f32.gmra.mxu0 %v3179
        %v3354 = vpop.f32.mrf.mxu0
        %v3355 = vadd.f32 0.0, %v3354
        %v3356 = vpop.f32.mrf.mxu0
        %3357 = vmatprep.mubr.f32.mxu0 0.0
        %3358 = vmatmul.mubr.f32.gmra.mxu0 %v3182
        %v3359 = vpop.f32.mrf.mxu0
        %v3360 = vadd.f32 0.0, %v3359
        %v3361 = vpop.f32.mrf.mxu0
        %3362 = vmatprep.mubr.f32.mxu0 0.0
        %3363 = vmatmul.mubr.f32.gmra.mxu0 %v3185
        %v3364 = vpop.f32.mrf.mxu0
        %v3365 = vadd.f32 0.0, %v3364
        %v3366 = vpop.f32.mrf.mxu0
        %3367 = vmatprep.mubr.f32.mxu0 0.0
        %3368 = vmatmul.mubr.f32.gmra.mxu0 %v3188
        %v3369 = vpop.f32.mrf.mxu0
        %v3370 = vadd.f32 0.0, %v3369
        %v3371 = vpop.f32.mrf.mxu0
        %3372 = vmatprep.mubr.f32.mxu0 0.0
        %3373 = vmatmul.mubr.f32.gmra.mxu0 %v3191
        %v3374 = vpop.f32.mrf.mxu0
        %v3375 = vadd.f32 0.0, %v3374
        %v3376 = vpop.f32.mrf.mxu0
        %3377 = vmatprep.mubr.f32.mxu0 0.0
        %3378 = vmatmul.mubr.f32.gmra.mxu0 %v3194
        %v3379 = vpop.f32.mrf.mxu0
        %v3380 = vadd.f32 0.0, %v3379
        %v3381 = vpop.f32.mrf.mxu0
        %3382 = vmatprep.mubr.f32.mxu0 0.0
        %3383 = vmatmul.mubr.f32.gmra.mxu0 %v3197
        %v3384 = vpop.f32.mrf.mxu0
        %v3385 = vadd.f32 0.0, %v3384
        %v3386 = vpop.f32.mrf.mxu0
        %3387 = vmatprep.mubr.f32.mxu0 0.0
        %3388 = vmatmul.mubr.f32.gmra.mxu0 %v3200
        %v3389 = vpop.f32.mrf.mxu0
        %v3390 = vadd.f32 0.0, %v3389
        %v3391 = vpop.f32.mrf.mxu0
        %3392 = vmatprep.mubr.f32.mxu0 0.0
        %3393 = vmatmul.mubr.f32.gmra.mxu0 %v3203
        %v3394 = vpop.f32.mrf.mxu0
        %v3395 = vadd.f32 0.0, %v3394
        %v3396 = vpop.f32.mrf.mxu0
        %3397 = vmatprep.mubr.f32.mxu0 0.0
        %3398 = vmatmul.mubr.f32.gmra.mxu0 %v3206
        %v3399 = vpop.f32.mrf.mxu0
        %v3400 = vadd.f32 0.0, %v3399
        %v3401 = vpop.f32.mrf.mxu0
        %3402 = vmatprep.mubr.f32.mxu0 0.0
        %3403 = vmatmul.mubr.f32.gmra.mxu0 %v3209
        %v3404 = vpop.f32.mrf.mxu0
        %v3405 = vadd.f32 0.0, %v3404
        %v3406 = vpop.f32.mrf.mxu0
        %3407 = vmatprep.mubr.f32.mxu0 0.0
        %3408 = vmatmul.mubr.f32.gmra.mxu0 %v3212
        %v3409 = vpop.f32.mrf.mxu0
        %v3410 = vadd.f32 0.0, %v3409
        %v3411 = vpop.f32.mrf.mxu0
        %3412 = vmatprep.mubr.f32.mxu0 0.0
        %3413 = vmatmul.mubr.f32.gmra.mxu0 %v3215
        %v3414 = vpop.f32.mrf.mxu0
        %v3415 = vadd.f32 0.0, %v3414
        %v3416 = vpop.f32.mrf.mxu0
        %3417 = vmatprep.mubr.f32.mxu0 0.0
        %3418 = vmatmul.mubr.f32.gmra.mxu0 %v3218
        %v3419 = vpop.f32.mrf.mxu0
        %v3420 = vadd.f32 0.0, %v3419
        %v3421 = vpop.f32.mrf.mxu0
        %3422 = vmatprep.mubr.f32.mxu0 0.0
        %3423 = vmatmul.mubr.f32.gmra.mxu0 %v3221
        %v3424 = vpop.f32.mrf.mxu0
        %v3425 = vadd.f32 0.0, %v3424
        %v3426 = vpop.f32.mrf.mxu0
        %3427 = vmatprep.mubr.f32.mxu0 0.0
        %3428 = vmatmul.mubr.f32.gmra.mxu0 %v3224
        %v3429 = vpop.f32.mrf.mxu0
        %v3430 = vadd.f32 0.0, %v3429
        %v3431 = vpop.f32.mrf.mxu0
        %3432 = vmatprep.mubr.f32.mxu0 0.0
        %3433 = vmatmul.mubr.f32.gmra.mxu0 %v3227
        %v3434 = vpop.f32.mrf.mxu0
        %v3435 = vadd.f32 0.0, %v3434
        %v3436 = vpop.f32.mrf.mxu0
        %3437 = vmatprep.mubr.f32.mxu0 0.0
        %3438 = vmatmul.mubr.f32.gmra.mxu0 %v3230
        %v3439 = vpop.f32.mrf.mxu0
        %v3440 = vadd.f32 0.0, %v3439
        %v3441 = vpop.f32.mrf.mxu0
        %3442 = vmatprep.mubr.f32.mxu0 0.0
        %3443 = vmatmul.mubr.f32.gmra.mxu0 %v3233
        %v3444 = vpop.f32.mrf.mxu0
        %v3445 = vadd.f32 0.0, %v3444
        %v3446 = vpop.f32.mrf.mxu0
        %3447 = vmatprep.mubr.f32.mxu0 0.0
        %3448 = vmatmul.mubr.f32.gmra.mxu0 %v3236
        %v3449 = vpop.f32.mrf.mxu0
        %v3450 = vadd.f32 0.0, %v3449
        %v3451 = vpop.f32.mrf.mxu0
        %3452 = vmatprep.mubr.f32.mxu0 0.0
        %3453 = vmatmul.mubr.f32.gmra.mxu0 %v3239
        %v3454 = vpop.f32.mrf.mxu0
        %v3455 = vadd.f32 0.0, %v3454
        %v3456 = vpop.f32.mrf.mxu0
        %3457 = vmatprep.mubr.f32.mxu0 0.0
        %3458 = vmatmul.mubr.f32.gmra.mxu0 %v3242
        %v3459 = vpop.f32.mrf.mxu0
        %v3460 = vadd.f32 0.0, %v3459
        %v3461 = vpop.f32.mrf.mxu0
        %3462 = vmatprep.mubr.f32.mxu0 0.0
        %3463 = vmatmul.mubr.f32.gmra.mxu0 %v3245
        %v3464 = vpop.f32.mrf.mxu0
        %v3465 = vadd.f32 0.0, %v3464
        %v3466 = vpop.f32.mrf.mxu0
        %3467 = vmatprep.mubr.f32.mxu0 0.0
        %3468 = vmatmul.mubr.f32.gmra.mxu0 %v3248
        %v3469 = vpop.f32.mrf.mxu0
        %v3470 = vadd.f32 0.0, %v3469
        %v3471 = vpop.f32.mrf.mxu0
        %3472 = vmatprep.mubr.f32.mxu0 0.0
        %3473 = vmatmul.mubr.f32.gmra.mxu0 %v942
        %v3474 = vpop.f32.mrf.mxu0
        %v3475 = vadd.f32 0.0, %v3474
        %v3476 = vpop.f32.mrf.mxu0
        %3477 = vdwg.mxu0
        %v3478 = vadd.f32 %v3090, %v3320
        %v3479 = vadd.f32 %v3091, %v3325
        %v3480 = vadd.f32 %v3092, %v3330
        %v3481 = vadd.f32 %v3093, %v3335
        %v3482 = vadd.f32 %v3094, %v3340
        %v3483 = vadd.f32 %v3095, %v3345
        %v3484 = vadd.f32 %v3096, %v3350
        %v3485 = vadd.f32 %v3097, %v3355
        %v3486 = vadd.f32 %v3098, %v3360
        %v3487 = vadd.f32 %v3099, %v3365
        %v3488 = vadd.f32 %v3100, %v3370
        %v3489 = vadd.f32 %v3101, %v3375
        %v3490 = vadd.f32 %v3102, %v3380
        %v3491 = vadd.f32 %v3103, %v3385
        %v3492 = vadd.f32 %v3104, %v3390
        %v3493 = vadd.f32 %v3105, %v3395
        %v3494 = vadd.f32 %v3106, %v3400
        %v3495 = vadd.f32 %v3107, %v3405
        %v3496 = vadd.f32 %v3108, %v3410
        %v3497 = vadd.f32 %v3109, %v3415
        %v3498 = vadd.f32 %v3110, %v3420
        %v3499 = vadd.f32 %v3111, %v3425
        %v3500 = vadd.f32 %v3112, %v3430
        %v3501 = vadd.f32 %v3113, %v3435
        %v3502 = vadd.f32 %v3114, %v3440
        %v3503 = vadd.f32 %v3115, %v3445
        %v3504 = vadd.f32 %v3116, %v3450
        %v3505 = vadd.f32 %v3117, %v3455
        %v3506 = vadd.f32 %v3118, %v3460
        %v3507 = vadd.f32 %v3119, %v3465
        %v3508 = vadd.f32 %v3120, %v3470
        %v3509 = vadd.f32 %v3121, %v3475
        %s3510 = scalar_lea.vmem %s1, 28
        %v3511 = vld [vmem:[%s3510] sm:$0xf]
        %v3513 = vsel %vm1004, %v3511, 0
        %3515 = vmatprep.subr.mxu0 0.0
        %3516 = vmatpush1.msra.mxu0 0.0
        %3517 = vmatprep.subr.mxu0 0.0
        %3518 = vmatpush1.msra.mxu0 0.0
        %3519 = vmatprep.subr.mxu0 0.0
        %3520 = vmatpush1.msra.mxu0 0.0
        %3521 = vmatprep.subr.mxu0 0.0
        %3522 = vmatpush1.msra.mxu0 0.0
        %3523 = vmatprep.subr.mxu0 0.0
        %3524 = vmatpush1.msra.mxu0 0.0
        %3525 = vmatprep.subr.mxu0 0.0
        %3526 = vmatpush1.msra.mxu0 0.0
        %3527 = vmatprep.subr.mxu0 0.0
        %3528 = vmatpush1.msra.mxu0 0.0
        %3529 = vmatprep.subr.mxu0 0.0
        %3530 = vmatpush1.msra.mxu0 0.0
        %3531 = vmatprep.subr.mxu0 0.0
        %3532 = vmatpush1.msra.mxu0 0.0
        %3533 = vmatprep.subr.mxu0 0.0
        %3534 = vmatpush1.msra.mxu0 0.0
        %3535 = vmatprep.subr.mxu0 0.0
        %3536 = vmatpush1.msra.mxu0 0.0
        %3537 = vmatprep.subr.mxu0 0.0
        %3538 = vmatpush1.msra.mxu0 0.0
        %3539 = vmatprep.subr.mxu0 0.0
        %3540 = vmatpush1.msra.mxu0 0.0
        %3541 = vmatprep.subr.mxu0 0.0
        %3542 = vmatpush1.msra.mxu0 0.0
        %3543 = vmatprep.subr.mxu0 0.0
        %3544 = vmatpush1.msra.mxu0 0.0
        %3545 = vmatprep.subr.mxu0 0.0
        %3546 = vmatpush1.msra.mxu0 %v3513
        %3547 = vmatprep.subr.mxu0 0.0
        %3548 = vmatpush2.msra.mxu0 0.0
        %3549 = vmatprep.subr.mxu0 0.0
        %3550 = vmatpush2.msra.mxu0 0.0
        %3551 = vmatprep.subr.mxu0 0.0
        %3552 = vmatpush2.msra.mxu0 0.0
        %3553 = vmatprep.subr.mxu0 0.0
        %3554 = vmatpush2.msra.mxu0 0.0
        %3555 = vmatprep.subr.mxu0 0.0
        %3556 = vmatpush2.msra.mxu0 0.0
        %3557 = vmatprep.subr.mxu0 0.0
        %3558 = vmatpush2.msra.mxu0 0.0
        %3559 = vmatprep.subr.mxu0 0.0
        %3560 = vmatpush2.msra.mxu0 0.0
        %3561 = vmatprep.subr.mxu0 0.0
        %3562 = vmatpush2.msra.mxu0 0.0
        %3563 = vmatprep.subr.mxu0 0.0
        %3564 = vmatpush2.msra.mxu0 0.0
        %3565 = vmatprep.subr.mxu0 0.0
        %3566 = vmatpush2.msra.mxu0 0.0
        %3567 = vmatprep.subr.mxu0 0.0
        %3568 = vmatpush2.msra.mxu0 0.0
        %3569 = vmatprep.subr.mxu0 0.0
        %3570 = vmatpush2.msra.mxu0 0.0
        %3571 = vmatprep.subr.mxu0 0.0
        %3572 = vmatpush2.msra.mxu0 0.0
        %3573 = vmatprep.subr.mxu0 0.0
        %3574 = vmatpush2.msra.mxu0 0.0
        %3575 = vmatprep.subr.mxu0 0.0
        %3576 = vmatpush2.msra.mxu0 0.0
        %3577 = vmatprep.subr.mxu0 0.0
        %3578 = vmatpush2.msra.mxu0 0.0
        %3579 = vmatprep.mubr.f32.mxu0 0.0
        %3580 = vmatmul.mubr.f32.gmra.mxu0 %v948
        %v3581 = vpop.f32.mrf.mxu0
        %v3582 = vadd.f32 0.0, %v3581
        %v3583 = vpop.f32.mrf.mxu0
        %3584 = vmatprep.mubr.f32.mxu0 0.0
        %3585 = vmatmul.mubr.f32.gmra.mxu0 %v950
        %v3586 = vpop.f32.mrf.mxu0
        %v3587 = vadd.f32 0.0, %v3586
        %v3588 = vpop.f32.mrf.mxu0
        %3589 = vmatprep.mubr.f32.mxu0 0.0
        %3590 = vmatmul.mubr.f32.gmra.mxu0 %v952
        %v3591 = vpop.f32.mrf.mxu0
        %v3592 = vadd.f32 0.0, %v3591
        %v3593 = vpop.f32.mrf.mxu0
        %3594 = vmatprep.mubr.f32.mxu0 0.0
        %3595 = vmatmul.mubr.f32.gmra.mxu0 %v954
        %v3596 = vpop.f32.mrf.mxu0
        %v3597 = vadd.f32 0.0, %v3596
        %v3598 = vpop.f32.mrf.mxu0
        %3599 = vmatprep.mubr.f32.mxu0 0.0
        %3600 = vmatmul.mubr.f32.gmra.mxu0 %v956
        %v3601 = vpop.f32.mrf.mxu0
        %v3602 = vadd.f32 0.0, %v3601
        %v3603 = vpop.f32.mrf.mxu0
        %3604 = vmatprep.mubr.f32.mxu0 0.0
        %3605 = vmatmul.mubr.f32.gmra.mxu0 %v958
        %v3606 = vpop.f32.mrf.mxu0
        %v3607 = vadd.f32 0.0, %v3606
        %v3608 = vpop.f32.mrf.mxu0
        %3609 = vmatprep.mubr.f32.mxu0 0.0
        %3610 = vmatmul.mubr.f32.gmra.mxu0 %v960
        %v3611 = vpop.f32.mrf.mxu0
        %v3612 = vadd.f32 0.0, %v3611
        %v3613 = vpop.f32.mrf.mxu0
        %3614 = vmatprep.mubr.f32.mxu0 0.0
        %3615 = vmatmul.mubr.f32.gmra.mxu0 %v962
        %v3616 = vpop.f32.mrf.mxu0
        %v3617 = vadd.f32 0.0, %v3616
        %v3618 = vpop.f32.mrf.mxu0
        %3619 = vmatprep.mubr.f32.mxu0 0.0
        %3620 = vmatmul.mubr.f32.gmra.mxu0 %v964
        %v3621 = vpop.f32.mrf.mxu0
        %v3622 = vadd.f32 0.0, %v3621
        %v3623 = vpop.f32.mrf.mxu0
        %3624 = vmatprep.mubr.f32.mxu0 0.0
        %3625 = vmatmul.mubr.f32.gmra.mxu0 %v966
        %v3626 = vpop.f32.mrf.mxu0
        %v3627 = vadd.f32 0.0, %v3626
        %v3628 = vpop.f32.mrf.mxu0
        %3629 = vmatprep.mubr.f32.mxu0 0.0
        %3630 = vmatmul.mubr.f32.gmra.mxu0 %v968
        %v3631 = vpop.f32.mrf.mxu0
        %v3632 = vadd.f32 0.0, %v3631
        %v3633 = vpop.f32.mrf.mxu0
        %3634 = vmatprep.mubr.f32.mxu0 0.0
        %3635 = vmatmul.mubr.f32.gmra.mxu0 %v970
        %v3636 = vpop.f32.mrf.mxu0
        %v3637 = vadd.f32 0.0, %v3636
        %v3638 = vpop.f32.mrf.mxu0
        %3639 = vmatprep.mubr.f32.mxu0 0.0
        %3640 = vmatmul.mubr.f32.gmra.mxu0 %v972
        %v3641 = vpop.f32.mrf.mxu0
        %v3642 = vadd.f32 0.0, %v3641
        %v3643 = vpop.f32.mrf.mxu0
        %3644 = vmatprep.mubr.f32.mxu0 0.0
        %3645 = vmatmul.mubr.f32.gmra.mxu0 %v974
        %v3646 = vpop.f32.mrf.mxu0
        %v3647 = vadd.f32 0.0, %v3646
        %v3648 = vpop.f32.mrf.mxu0
        %3649 = vmatprep.mubr.f32.mxu0 0.0
        %3650 = vmatmul.mubr.f32.gmra.mxu0 %v976
        %v3651 = vpop.f32.mrf.mxu0
        %v3652 = vadd.f32 0.0, %v3651
        %v3653 = vpop.f32.mrf.mxu0
        %3654 = vmatprep.mubr.f32.mxu0 0.0
        %3655 = vmatmul.mubr.f32.gmra.mxu0 %v978
        %v3656 = vpop.f32.mrf.mxu0
        %v3657 = vadd.f32 0.0, %v3656
        %v3658 = vpop.f32.mrf.mxu0
        %3659 = vmatprep.mubr.f32.mxu0 0.0
        %3660 = vmatmul.mubr.f32.gmra.mxu0 %v980
        %v3661 = vpop.f32.mrf.mxu0
        %v3662 = vadd.f32 0.0, %v3661
        %v3663 = vpop.f32.mrf.mxu0
        %3664 = vmatprep.mubr.f32.mxu0 0.0
        %3665 = vmatmul.mubr.f32.gmra.mxu0 %v982
        %v3666 = vpop.f32.mrf.mxu0
        %v3667 = vadd.f32 0.0, %v3666
        %v3668 = vpop.f32.mrf.mxu0
        %3669 = vmatprep.mubr.f32.mxu0 0.0
        %3670 = vmatmul.mubr.f32.gmra.mxu0 %v984
        %v3671 = vpop.f32.mrf.mxu0
        %v3672 = vadd.f32 0.0, %v3671
        %v3673 = vpop.f32.mrf.mxu0
        %3674 = vmatprep.mubr.f32.mxu0 0.0
        %3675 = vmatmul.mubr.f32.gmra.mxu0 %v986
        %v3676 = vpop.f32.mrf.mxu0
        %v3677 = vadd.f32 0.0, %v3676
        %v3678 = vpop.f32.mrf.mxu0
        %3679 = vmatprep.mubr.f32.mxu0 0.0
        %3680 = vmatmul.mubr.f32.gmra.mxu0 %v988
        %v3681 = vpop.f32.mrf.mxu0
        %v3682 = vadd.f32 0.0, %v3681
        %v3683 = vpop.f32.mrf.mxu0
        %3684 = vmatprep.mubr.f32.mxu0 0.0
        %3685 = vmatmul.mubr.f32.gmra.mxu0 %v990
        %v3686 = vpop.f32.mrf.mxu0
        %v3687 = vadd.f32 0.0, %v3686
        %v3688 = vpop.f32.mrf.mxu0
        %3689 = vmatprep.mubr.f32.mxu0 0.0
        %3690 = vmatmul.mubr.f32.gmra.mxu0 %v992
        %v3691 = vpop.f32.mrf.mxu0
        %v3692 = vadd.f32 0.0, %v3691
        %v3693 = vpop.f32.mrf.mxu0
        %3694 = vmatprep.mubr.f32.mxu0 0.0
        %3695 = vmatmul.mubr.f32.gmra.mxu0 %v994
        %v3696 = vpop.f32.mrf.mxu0
        %v3697 = vadd.f32 0.0, %v3696
        %v3698 = vpop.f32.mrf.mxu0
        %3699 = vmatprep.mubr.f32.mxu0 0.0
        %3700 = vmatmul.mubr.f32.gmra.mxu0 %v996
        %v3701 = vpop.f32.mrf.mxu0
        %v3702 = vadd.f32 0.0, %v3701
        %v3703 = vpop.f32.mrf.mxu0
        %3704 = vmatprep.mubr.f32.mxu0 0.0
        %3705 = vmatmul.mubr.f32.gmra.mxu0 %v998
        %v3706 = vpop.f32.mrf.mxu0
        %v3707 = vadd.f32 0.0, %v3706
        %v3708 = vpop.f32.mrf.mxu0
        %3709 = vmatprep.mubr.f32.mxu0 0.0
        %3710 = vmatmul.mubr.f32.gmra.mxu0 %v1000
        %v3711 = vpop.f32.mrf.mxu0
        %v3712 = vadd.f32 0.0, %v3711
        %v3713 = vpop.f32.mrf.mxu0
        %3714 = vmatprep.mubr.f32.mxu0 0.0
        %3715 = vmatmul.mubr.f32.gmra.mxu0 %v1002
        %v3716 = vpop.f32.mrf.mxu0
        %v3717 = vadd.f32 0.0, %v3716
        %v3718 = vpop.f32.mrf.mxu0
        %3719 = vmatprep.mubr.f32.mxu0 0.0
        %3720 = vmatmul.mubr.f32.gmra.mxu0 %v2463
        %v3721 = vpop.f32.mrf.mxu0
        %v3722 = vadd.f32 0.0, %v3721
        %v3723 = vpop.f32.mrf.mxu0
        %3724 = vmatprep.mubr.f32.mxu0 0.0
        %3725 = vmatmul.mubr.f32.gmra.mxu0 %v2465
        %v3726 = vpop.f32.mrf.mxu0
        %v3727 = vadd.f32 0.0, %v3726
        %v3728 = vpop.f32.mrf.mxu0
        %3729 = vmatprep.mubr.f32.mxu0 0.0
        %3730 = vmatmul.mubr.f32.gmra.mxu0 %v942
        %v3731 = vpop.f32.mrf.mxu0
        %v3732 = vadd.f32 0.0, %v3731
        %v3733 = vpop.f32.mrf.mxu0
        %3734 = vmatprep.mubr.f32.mxu0 0.0
        %3735 = vmatmul.mubr.f32.gmra.mxu0 %v942
        %v3736 = vpop.f32.mrf.mxu0
        %v3737 = vadd.f32 0.0, %v3736
        %v3738 = vpop.f32.mrf.mxu0
        %3739 = vdwg.mxu0
        %v3740 = vadd.f32 %v3478, %v3582
        %v3741 = vadd.f32 %v3479, %v3587
        %v3742 = vadd.f32 %v3480, %v3592
        %v3743 = vadd.f32 %v3481, %v3597
        %v3744 = vadd.f32 %v3482, %v3602
        %v3745 = vadd.f32 %v3483, %v3607
        %v3746 = vadd.f32 %v3484, %v3612
        %v3747 = vadd.f32 %v3485, %v3617
        %v3748 = vadd.f32 %v3486, %v3622
        %v3749 = vadd.f32 %v3487, %v3627
        %v3750 = vadd.f32 %v3488, %v3632
        %v3751 = vadd.f32 %v3489, %v3637
        %v3752 = vadd.f32 %v3490, %v3642
        %v3753 = vadd.f32 %v3491, %v3647
        %v3754 = vadd.f32 %v3492, %v3652
        %v3755 = vadd.f32 %v3493, %v3657
        %v3756 = vadd.f32 %v3494, %v3662
        %v3757 = vadd.f32 %v3495, %v3667
        %v3758 = vadd.f32 %v3496, %v3672
        %v3759 = vadd.f32 %v3497, %v3677
        %v3760 = vadd.f32 %v3498, %v3682
        %v3761 = vadd.f32 %v3499, %v3687
        %v3762 = vadd.f32 %v3500, %v3692
        %v3763 = vadd.f32 %v3501, %v3697
        %v3764 = vadd.f32 %v3502, %v3702
        %v3765 = vadd.f32 %v3503, %v3707
        %v3766 = vadd.f32 %v3504, %v3712
        %v3767 = vadd.f32 %v3505, %v3717
        %v3768 = vadd.f32 %v3506, %v3722
        %v3769 = vadd.f32 %v3507, %v3727
        %v3770 = vadd.f32 %v3508, %v3732
        %v3771 = vadd.f32 %v3509, %v3737
        %v3772 = vsel %vm1646, %v1559, 0.0
        %v3773 = vsel %vm1647, %v1561, 0.0
        %v3774 = vsel %vm1648, %v1563, 0.0
        %v3775 = vsel %vm1649, %v1565, 0.0
        %v3776 = vsel %vm1650, %v1567, 0.0
        %v3777 = vsel %vm1651, %v1569, 0.0
        %v3778 = vsel %vm1652, %v1571, 0.0
        %v3779 = vsel %vm1653, %v1573, 0.0
        %v3780 = vsel %vm1654, %v1575, 0.0
        %v3781 = vsel %vm1655, %v1577, 0.0
        %v3782 = vsel %vm1656, %v1579, 0.0
        %v3783 = vsel %vm1657, %v1581, 0.0
        %v3784 = vsel %vm1658, %v1583, 0.0
        %v3785 = vsel %vm1659, %v1585, 0.0
        %v3786 = vsel %vm1660, %v1587, 0.0
        %v3787 = vsel %vm1661, %v1589, 0.0
        %v3788 = vsel %vm1662, %v1591, 0.0
        %v3789 = vsel %vm1663, %v1593, 0.0
        %v3790 = vsel %vm1664, %v1595, 0.0
        %v3791 = vsel %vm1665, %v1597, 0.0
        %v3792 = vsel %vm1666, %v1599, 0.0
        %v3793 = vsel %vm1667, %v1601, 0.0
        %v3794 = vsel %vm1668, %v1603, 0.0
        %v3795 = vsel %vm1669, %v1605, 0.0
        %v3796 = vsel %vm1670, %v1607, 0.0
        %v3797 = vsel %vm1671, %v1609, 0.0
        %v3798 = vsel %vm1672, %v1611, 0.0
        %v3799 = vsel %vm1673, %v1613, 0.0
        %v3800 = vsel %vm1674, %v2728, 0.0
        %v3801 = vsel %vm1675, %v2731, 0.0
        %s3802 = scalar_lea.vmem %s1, 32
        %v3803 = vld [vmem:[%s3802] sm:$0xf]
        %v3805 = vsel %vm940, %v3772, 0
        %v3808 = vsel %vm940, %v3773, 0
        %v3811 = vsel %vm940, %v3774, 0
        %v3814 = vsel %vm940, %v3775, 0
        %v3817 = vsel %vm940, %v3776, 0
        %v3820 = vsel %vm940, %v3777, 0
        %v3823 = vsel %vm940, %v3778, 0
        %v3826 = vsel %vm940, %v3779, 0
        %v3829 = vsel %vm940, %v3780, 0
        %v3832 = vsel %vm940, %v3781, 0
        %v3835 = vsel %vm940, %v3782, 0
        %v3838 = vsel %vm940, %v3783, 0
        %v3841 = vsel %vm940, %v3784, 0
        %v3844 = vsel %vm940, %v3785, 0
        %v3847 = vsel %vm940, %v3786, 0
        %v3850 = vsel %vm940, %v3787, 0
        %v3853 = vsel %vm940, %v3788, 0
        %v3856 = vsel %vm940, %v3789, 0
        %v3859 = vsel %vm940, %v3790, 0
        %v3862 = vsel %vm940, %v3791, 0
        %v3865 = vsel %vm940, %v3792, 0
        %v3868 = vsel %vm940, %v3793, 0
        %v3871 = vsel %vm940, %v3794, 0
        %v3874 = vsel %vm940, %v3795, 0
        %v3877 = vsel %vm940, %v3796, 0
        %v3880 = vsel %vm940, %v3797, 0
        %v3883 = vsel %vm940, %v3798, 0
        %v3886 = vsel %vm940, %v3799, 0
        %v3889 = vsel %vm940, %v3800, 0
        %v3892 = vsel %vm940, %v3801, 0
        %v3895 = vsel %vm1004, %v3803, 0
        %3897 = vmatprep.subr.mxu0 0.0
        %3898 = vmatpush1.msra.mxu0 0.0
        %3899 = vmatprep.subr.mxu0 0.0
        %3900 = vmatpush1.msra.mxu0 0.0
        %3901 = vmatprep.subr.mxu0 0.0
        %3902 = vmatpush1.msra.mxu0 0.0
        %3903 = vmatprep.subr.mxu0 0.0
        %3904 = vmatpush1.msra.mxu0 0.0
        %3905 = vmatprep.subr.mxu0 0.0
        %3906 = vmatpush1.msra.mxu0 0.0
        %3907 = vmatprep.subr.mxu0 0.0
        %3908 = vmatpush1.msra.mxu0 0.0
        %3909 = vmatprep.subr.mxu0 0.0
        %3910 = vmatpush1.msra.mxu0 0.0
        %3911 = vmatprep.subr.mxu0 0.0
        %3912 = vmatpush1.msra.mxu0 0.0
        %3913 = vmatprep.subr.mxu0 0.0
        %3914 = vmatpush1.msra.mxu0 0.0
        %3915 = vmatprep.subr.mxu0 0.0
        %3916 = vmatpush1.msra.mxu0 0.0
        %3917 = vmatprep.subr.mxu0 0.0
        %3918 = vmatpush1.msra.mxu0 0.0
        %3919 = vmatprep.subr.mxu0 0.0
        %3920 = vmatpush1.msra.mxu0 0.0
        %3921 = vmatprep.subr.mxu0 0.0
        %3922 = vmatpush1.msra.mxu0 0.0
        %3923 = vmatprep.subr.mxu0 0.0
        %3924 = vmatpush1.msra.mxu0 0.0
        %3925 = vmatprep.subr.mxu0 0.0
        %3926 = vmatpush1.msra.mxu0 0.0
        %3927 = vmatprep.subr.mxu0 0.0
        %3928 = vmatpush1.msra.mxu0 %v3895
        %3929 = vmatprep.subr.mxu0 0.0
        %3930 = vmatpush2.msra.mxu0 0.0
        %3931 = vmatprep.subr.mxu0 0.0
        %3932 = vmatpush2.msra.mxu0 0.0
        %3933 = vmatprep.subr.mxu0 0.0
        %3934 = vmatpush2.msra.mxu0 0.0
        %3935 = vmatprep.subr.mxu0 0.0
        %3936 = vmatpush2.msra.mxu0 0.0
        %3937 = vmatprep.subr.mxu0 0.0
        %3938 = vmatpush2.msra.mxu0 0.0
        %3939 = vmatprep.subr.mxu0 0.0
        %3940 = vmatpush2.msra.mxu0 0.0
        %3941 = vmatprep.subr.mxu0 0.0
        %3942 = vmatpush2.msra.mxu0 0.0
        %3943 = vmatprep.subr.mxu0 0.0
        %3944 = vmatpush2.msra.mxu0 0.0
        %3945 = vmatprep.subr.mxu0 0.0
        %3946 = vmatpush2.msra.mxu0 0.0
        %3947 = vmatprep.subr.mxu0 0.0
        %3948 = vmatpush2.msra.mxu0 0.0
        %3949 = vmatprep.subr.mxu0 0.0
        %3950 = vmatpush2.msra.mxu0 0.0
        %3951 = vmatprep.subr.mxu0 0.0
        %3952 = vmatpush2.msra.mxu0 0.0
        %3953 = vmatprep.subr.mxu0 0.0
        %3954 = vmatpush2.msra.mxu0 0.0
        %3955 = vmatprep.subr.mxu0 0.0
        %3956 = vmatpush2.msra.mxu0 0.0
        %3957 = vmatprep.subr.mxu0 0.0
        %3958 = vmatpush2.msra.mxu0 0.0
        %3959 = vmatprep.subr.mxu0 0.0
        %3960 = vmatpush2.msra.mxu0 0.0
        %3961 = vmatprep.mubr.f32.mxu0 0.0
        %3962 = vmatmul.mubr.f32.gmra.mxu0 %v3805
        %v3963 = vpop.f32.mrf.mxu0
        %v3964 = vadd.f32 0.0, %v3963
        %v3965 = vpop.f32.mrf.mxu0
        %3966 = vmatprep.mubr.f32.mxu0 0.0
        %3967 = vmatmul.mubr.f32.gmra.mxu0 %v3808
        %v3968 = vpop.f32.mrf.mxu0
        %v3969 = vadd.f32 0.0, %v3968
        %v3970 = vpop.f32.mrf.mxu0
        %3971 = vmatprep.mubr.f32.mxu0 0.0
        %3972 = vmatmul.mubr.f32.gmra.mxu0 %v3811
        %v3973 = vpop.f32.mrf.mxu0
        %v3974 = vadd.f32 0.0, %v3973
        %v3975 = vpop.f32.mrf.mxu0
        %3976 = vmatprep.mubr.f32.mxu0 0.0
        %3977 = vmatmul.mubr.f32.gmra.mxu0 %v3814
        %v3978 = vpop.f32.mrf.mxu0
        %v3979 = vadd.f32 0.0, %v3978
        %v3980 = vpop.f32.mrf.mxu0
        %3981 = vmatprep.mubr.f32.mxu0 0.0
        %3982 = vmatmul.mubr.f32.gmra.mxu0 %v3817
        %v3983 = vpop.f32.mrf.mxu0
        %v3984 = vadd.f32 0.0, %v3983
        %v3985 = vpop.f32.mrf.mxu0
        %3986 = vmatprep.mubr.f32.mxu0 0.0
        %3987 = vmatmul.mubr.f32.gmra.mxu0 %v3820
        %v3988 = vpop.f32.mrf.mxu0
        %v3989 = vadd.f32 0.0, %v3988
        %v3990 = vpop.f32.mrf.mxu0
        %3991 = vmatprep.mubr.f32.mxu0 0.0
        %3992 = vmatmul.mubr.f32.gmra.mxu0 %v3823
        %v3993 = vpop.f32.mrf.mxu0
        %v3994 = vadd.f32 0.0, %v3993
        %v3995 = vpop.f32.mrf.mxu0
        %3996 = vmatprep.mubr.f32.mxu0 0.0
        %3997 = vmatmul.mubr.f32.gmra.mxu0 %v3826
        %v3998 = vpop.f32.mrf.mxu0
        %v3999 = vadd.f32 0.0, %v3998
        %v4000 = vpop.f32.mrf.mxu0
        %4001 = vmatprep.mubr.f32.mxu0 0.0
        %4002 = vmatmul.mubr.f32.gmra.mxu0 %v3829
        %v4003 = vpop.f32.mrf.mxu0
        %v4004 = vadd.f32 0.0, %v4003
        %v4005 = vpop.f32.mrf.mxu0
        %4006 = vmatprep.mubr.f32.mxu0 0.0
        %4007 = vmatmul.mubr.f32.gmra.mxu0 %v3832
        %v4008 = vpop.f32.mrf.mxu0
        %v4009 = vadd.f32 0.0, %v4008
        %v4010 = vpop.f32.mrf.mxu0
        %4011 = vmatprep.mubr.f32.mxu0 0.0
        %4012 = vmatmul.mubr.f32.gmra.mxu0 %v3835
        %v4013 = vpop.f32.mrf.mxu0
        %v4014 = vadd.f32 0.0, %v4013
        %v4015 = vpop.f32.mrf.mxu0
        %4016 = vmatprep.mubr.f32.mxu0 0.0
        %4017 = vmatmul.mubr.f32.gmra.mxu0 %v3838
        %v4018 = vpop.f32.mrf.mxu0
        %v4019 = vadd.f32 0.0, %v4018
        %v4020 = vpop.f32.mrf.mxu0
        %4021 = vmatprep.mubr.f32.mxu0 0.0
        %4022 = vmatmul.mubr.f32.gmra.mxu0 %v3841
        %v4023 = vpop.f32.mrf.mxu0
        %v4024 = vadd.f32 0.0, %v4023
        %v4025 = vpop.f32.mrf.mxu0
        %4026 = vmatprep.mubr.f32.mxu0 0.0
        %4027 = vmatmul.mubr.f32.gmra.mxu0 %v3844
        %v4028 = vpop.f32.mrf.mxu0
        %v4029 = vadd.f32 0.0, %v4028
        %v4030 = vpop.f32.mrf.mxu0
        %4031 = vmatprep.mubr.f32.mxu0 0.0
        %4032 = vmatmul.mubr.f32.gmra.mxu0 %v3847
        %v4033 = vpop.f32.mrf.mxu0
        %v4034 = vadd.f32 0.0, %v4033
        %v4035 = vpop.f32.mrf.mxu0
        %4036 = vmatprep.mubr.f32.mxu0 0.0
        %4037 = vmatmul.mubr.f32.gmra.mxu0 %v3850
        %v4038 = vpop.f32.mrf.mxu0
        %v4039 = vadd.f32 0.0, %v4038
        %v4040 = vpop.f32.mrf.mxu0
        %4041 = vmatprep.mubr.f32.mxu0 0.0
        %4042 = vmatmul.mubr.f32.gmra.mxu0 %v3853
        %v4043 = vpop.f32.mrf.mxu0
        %v4044 = vadd.f32 0.0, %v4043
        %v4045 = vpop.f32.mrf.mxu0
        %4046 = vmatprep.mubr.f32.mxu0 0.0
        %4047 = vmatmul.mubr.f32.gmra.mxu0 %v3856
        %v4048 = vpop.f32.mrf.mxu0
        %v4049 = vadd.f32 0.0, %v4048
        %v4050 = vpop.f32.mrf.mxu0
        %4051 = vmatprep.mubr.f32.mxu0 0.0
        %4052 = vmatmul.mubr.f32.gmra.mxu0 %v3859
        %v4053 = vpop.f32.mrf.mxu0
        %v4054 = vadd.f32 0.0, %v4053
        %v4055 = vpop.f32.mrf.mxu0
        %4056 = vmatprep.mubr.f32.mxu0 0.0
        %4057 = vmatmul.mubr.f32.gmra.mxu0 %v3862
        %v4058 = vpop.f32.mrf.mxu0
        %v4059 = vadd.f32 0.0, %v4058
        %v4060 = vpop.f32.mrf.mxu0
        %4061 = vmatprep.mubr.f32.mxu0 0.0
        %4062 = vmatmul.mubr.f32.gmra.mxu0 %v3865
        %v4063 = vpop.f32.mrf.mxu0
        %v4064 = vadd.f32 0.0, %v4063
        %v4065 = vpop.f32.mrf.mxu0
        %4066 = vmatprep.mubr.f32.mxu0 0.0
        %4067 = vmatmul.mubr.f32.gmra.mxu0 %v3868
        %v4068 = vpop.f32.mrf.mxu0
        %v4069 = vadd.f32 0.0, %v4068
        %v4070 = vpop.f32.mrf.mxu0
        %4071 = vmatprep.mubr.f32.mxu0 0.0
        %4072 = vmatmul.mubr.f32.gmra.mxu0 %v3871
        %v4073 = vpop.f32.mrf.mxu0
        %v4074 = vadd.f32 0.0, %v4073
        %v4075 = vpop.f32.mrf.mxu0
        %4076 = vmatprep.mubr.f32.mxu0 0.0
        %4077 = vmatmul.mubr.f32.gmra.mxu0 %v3874
        %v4078 = vpop.f32.mrf.mxu0
        %v4079 = vadd.f32 0.0, %v4078
        %v4080 = vpop.f32.mrf.mxu0
        %4081 = vmatprep.mubr.f32.mxu0 0.0
        %4082 = vmatmul.mubr.f32.gmra.mxu0 %v3877
        %v4083 = vpop.f32.mrf.mxu0
        %v4084 = vadd.f32 0.0, %v4083
        %v4085 = vpop.f32.mrf.mxu0
        %4086 = vmatprep.mubr.f32.mxu0 0.0
        %4087 = vmatmul.mubr.f32.gmra.mxu0 %v3880
        %v4088 = vpop.f32.mrf.mxu0
        %v4089 = vadd.f32 0.0, %v4088
        %v4090 = vpop.f32.mrf.mxu0
        %4091 = vmatprep.mubr.f32.mxu0 0.0
        %4092 = vmatmul.mubr.f32.gmra.mxu0 %v3883
        %v4093 = vpop.f32.mrf.mxu0
        %v4094 = vadd.f32 0.0, %v4093
        %v4095 = vpop.f32.mrf.mxu0
        %4096 = vmatprep.mubr.f32.mxu0 0.0
        %4097 = vmatmul.mubr.f32.gmra.mxu0 %v3886
        %v4098 = vpop.f32.mrf.mxu0
        %v4099 = vadd.f32 0.0, %v4098
        %v4100 = vpop.f32.mrf.mxu0
        %4101 = vmatprep.mubr.f32.mxu0 0.0
        %4102 = vmatmul.mubr.f32.gmra.mxu0 %v3889
        %v4103 = vpop.f32.mrf.mxu0
        %v4104 = vadd.f32 0.0, %v4103
        %v4105 = vpop.f32.mrf.mxu0
        %4106 = vmatprep.mubr.f32.mxu0 0.0
        %4107 = vmatmul.mubr.f32.gmra.mxu0 %v3892
        %v4108 = vpop.f32.mrf.mxu0
        %v4109 = vadd.f32 0.0, %v4108
        %v4110 = vpop.f32.mrf.mxu0
        %4111 = vmatprep.mubr.f32.mxu0 0.0
        %4112 = vmatmul.mubr.f32.gmra.mxu0 %v942
        %v4113 = vpop.f32.mrf.mxu0
        %v4114 = vadd.f32 0.0, %v4113
        %v4115 = vpop.f32.mrf.mxu0
        %4116 = vmatprep.mubr.f32.mxu0 0.0
        %4117 = vmatmul.mubr.f32.gmra.mxu0 %v942
        %v4118 = vpop.f32.mrf.mxu0
        %v4119 = vadd.f32 0.0, %v4118
        %v4120 = vpop.f32.mrf.mxu0
        %4121 = vdwg.mxu0
        %v4122 = vadd.f32 %v3740, %v3964
        %v4123 = vadd.f32 %v3741, %v3969
        %v4124 = vadd.f32 %v3742, %v3974
        %v4125 = vadd.f32 %v3743, %v3979
        %v4126 = vadd.f32 %v3744, %v3984
        %v4127 = vadd.f32 %v3745, %v3989
        %v4128 = vadd.f32 %v3746, %v3994
        %v4129 = vadd.f32 %v3747, %v3999
        %v4130 = vadd.f32 %v3748, %v4004
        %v4131 = vadd.f32 %v3749, %v4009
        %v4132 = vadd.f32 %v3750, %v4014
        %v4133 = vadd.f32 %v3751, %v4019
        %v4134 = vadd.f32 %v3752, %v4024
        %v4135 = vadd.f32 %v3753, %v4029
        %v4136 = vadd.f32 %v3754, %v4034
        %v4137 = vadd.f32 %v3755, %v4039
        %v4138 = vadd.f32 %v3756, %v4044
        %v4139 = vadd.f32 %v3757, %v4049
        %v4140 = vadd.f32 %v3758, %v4054
        %v4141 = vadd.f32 %v3759, %v4059
        %v4142 = vadd.f32 %v3760, %v4064
        %v4143 = vadd.f32 %v3761, %v4069
        %v4144 = vadd.f32 %v3762, %v4074
        %v4145 = vadd.f32 %v3763, %v4079
        %v4146 = vadd.f32 %v3764, %v4084
        %v4147 = vadd.f32 %v3765, %v4089
        %v4148 = vadd.f32 %v3766, %v4094
        %v4149 = vadd.f32 %v3767, %v4099
        %v4150 = vadd.f32 %v3768, %v4104
        %v4151 = vadd.f32 %v3769, %v4109
        %v4152 = vadd.f32 %v3770, %v4114
        %v4153 = vadd.f32 %v3771, %v4119
        %v4154 = vld [vmem:[%s2] sm:$0x1]
        %v4156 = vlaneseq
        %v4157 = vshrl.u32 %v4156, 7
        %v4158 = vsub.s32 0, %v4157
        %v4159 = vrot.slane %v4154, %v4158
        %v4161 = vadd.f32 %v4122, %v4159
        %v4162 = vadd.f32 %v4123, %v4159
        %v4163 = vadd.f32 %v4124, %v4159
        %v4164 = vadd.f32 %v4125, %v4159
        %v4165 = vadd.f32 %v4126, %v4159
        %v4166 = vadd.f32 %v4127, %v4159
        %v4167 = vadd.f32 %v4128, %v4159
        %v4168 = vadd.f32 %v4129, %v4159
        %v4169 = vadd.f32 %v4130, %v4159
        %v4170 = vadd.f32 %v4131, %v4159
        %v4171 = vadd.f32 %v4132, %v4159
        %v4172 = vadd.f32 %v4133, %v4159
        %v4173 = vadd.f32 %v4134, %v4159
        %v4174 = vadd.f32 %v4135, %v4159
        %v4175 = vadd.f32 %v4136, %v4159
        %v4176 = vadd.f32 %v4137, %v4159
        %v4177 = vadd.f32 %v4138, %v4159
        %v4178 = vadd.f32 %v4139, %v4159
        %v4179 = vadd.f32 %v4140, %v4159
        %v4180 = vadd.f32 %v4141, %v4159
        %v4181 = vadd.f32 %v4142, %v4159
        %v4182 = vadd.f32 %v4143, %v4159
        %v4183 = vadd.f32 %v4144, %v4159
        %v4184 = vadd.f32 %v4145, %v4159
        %v4185 = vadd.f32 %v4146, %v4159
        %v4186 = vadd.f32 %v4147, %v4159
        %v4187 = vadd.f32 %v4148, %v4159
        %v4188 = vadd.f32 %v4149, %v4159
        %v4189 = vadd.f32 %v4150, %v4159
        %v4190 = vadd.f32 %v4151, %v4159
        %v4191 = vadd.f32 %v4152, %v4159
        %v4192 = vadd.f32 %v4153, %v4159
        %vm4193 = vcmask 130048
        %4194 = vst.msk [vmem:[#allocation2] sm:$0xff] %vm4193, %v4161
        %4195 = vst.msk [vmem:[#allocation2 + $0x8] sm:$0xff] %vm4193, %v4162
        %4196 = vst.msk [vmem:[#allocation2 + $0x10] sm:$0xff] %vm4193, %v4163
        %4197 = vst.msk [vmem:[#allocation2 + $0x18] sm:$0xff] %vm4193, %v4164
        %4198 = vst.msk [vmem:[#allocation2 + $0x20] sm:$0xff] %vm4193, %v4165
        %4199 = vst.msk [vmem:[#allocation2 + $0x28] sm:$0xff] %vm4193, %v4166
        %4200 = vst.msk [vmem:[#allocation2 + $0x30] sm:$0xff] %vm4193, %v4167
        %4201 = vst.msk [vmem:[#allocation2 + $0x38] sm:$0xff] %vm4193, %v4168
        %4202 = vst.msk [vmem:[#allocation2 + $0x40] sm:$0xff] %vm4193, %v4169
        %4203 = vst.msk [vmem:[#allocation2 + $0x48] sm:$0xff] %vm4193, %v4170
        %4204 = vst.msk [vmem:[#allocation2 + $0x50] sm:$0xff] %vm4193, %v4171
        %4205 = vst.msk [vmem:[#allocation2 + $0x58] sm:$0xff] %vm4193, %v4172
        %4206 = vst.msk [vmem:[#allocation2 + $0x60] sm:$0xff] %vm4193, %v4173
        %4207 = vst.msk [vmem:[#allocation2 + $0x68] sm:$0xff] %vm4193, %v4174
        %4208 = vst.msk [vmem:[#allocation2 + $0x70] sm:$0xff] %vm4193, %v4175
        %4209 = vst.msk [vmem:[#allocation2 + $0x78] sm:$0xff] %vm4193, %v4176
        %4210 = vst.msk [vmem:[#allocation2 + $0x80] sm:$0xff] %vm4193, %v4177
        %4211 = vst.msk [vmem:[#allocation2 + $0x88] sm:$0xff] %vm4193, %v4178
        %4212 = vst.msk [vmem:[#allocation2 + $0x90] sm:$0xff] %vm4193, %v4179
        %4213 = vst.msk [vmem:[#allocation2 + $0x98] sm:$0xff] %vm4193, %v4180
        %4214 = vst.msk [vmem:[#allocation2 + $0xa0] sm:$0xff] %vm4193, %v4181
        %4215 = vst.msk [vmem:[#allocation2 + $0xa8] sm:$0xff] %vm4193, %v4182
        %4216 = vst.msk [vmem:[#allocation2 + $0xb0] sm:$0xff] %vm4193, %v4183
        %4217 = vst.msk [vmem:[#allocation2 + $0xb8] sm:$0xff] %vm4193, %v4184
        %4218 = vst.msk [vmem:[#allocation2 + $0xc0] sm:$0xff] %vm4193, %v4185
        %4219 = vst.msk [vmem:[#allocation2 + $0xc8] sm:$0xff] %vm4193, %v4186
        %4220 = vst.msk [vmem:[#allocation2 + $0xd0] sm:$0xff] %vm4193, %v4187
        %4221 = vst.msk [vmem:[#allocation2 + $0xd8] sm:$0xff] %vm4193, %v4188
        %4222 = vst.msk [vmem:[#allocation2 + $0xe0] sm:$0xff] %vm4193, %v4189
        %4223 = vst.msk [vmem:[#allocation2 + $0xe8] sm:$0xff] %vm4193, %v4190
        %4224 = vst.msk [vmem:[#allocation2 + $0xf0] sm:$0xff] %vm4193, %v4191
        %4225 = vst.msk [vmem:[#allocation2 + $0xf8] sm:$0xff] %vm4193, %v4192
        %s4226 = smul.u32 %s27, 128
        %s4227 = scalar_lea.vmem [#allocation2], %s4226
        %v4228 = vld [vmem:[%s4227] sm:$0xff]
        %v4229 = vld [vmem:[%s4227 + $0x8] sm:$0xff]
        %v4230 = vld [vmem:[%s4227 + $0x10] sm:$0xff]
        %v4231 = vld [vmem:[%s4227 + $0x18] sm:$0xff]
        %v4232 = vld [vmem:[%s4227 + $0x20] sm:$0xff]
        %v4233 = vld [vmem:[%s4227 + $0x28] sm:$0xff]
        %v4234 = vld [vmem:[%s4227 + $0x30] sm:$0xff]
        %v4235 = vld [vmem:[%s4227 + $0x38] sm:$0xff]
        %v4236 = vld [vmem:[%s4227 + $0x40] sm:$0xff]
        %v4237 = vld [vmem:[%s4227 + $0x48] sm:$0xff]
        %v4238 = vld [vmem:[%s4227 + $0x50] sm:$0xff]
        %v4239 = vld [vmem:[%s4227 + $0x58] sm:$0xff]
        %v4240 = vld [vmem:[%s4227 + $0x60] sm:$0xff]
        %v4241 = vld [vmem:[%s4227 + $0x68] sm:$0xff]
        %v4242 = vld [vmem:[%s4227 + $0x70] sm:$0xff]
        %v4243 = vld [vmem:[%s4227 + $0x78] sm:$0xff]
        %v4244 = vpack.c.bf16 %v4162, %v4161
        %v4245 = vpack.c.bf16 %v4164, %v4163
        %v4246 = vpack.c.bf16 %v4166, %v4165
        %v4247 = vpack.c.bf16 %v4168, %v4167
        %v4248 = vpack.c.bf16 %v4170, %v4169
        %v4249 = vpack.c.bf16 %v4172, %v4171
        %v4250 = vpack.c.bf16 %v4174, %v4173
        %v4251 = vpack.c.bf16 %v4176, %v4175
        %v4252 = vpack.c.bf16 %v4178, %v4177
        %v4253 = vpack.c.bf16 %v4180, %v4179
        %v4254 = vpack.c.bf16 %v4182, %v4181
        %v4255 = vpack.c.bf16 %v4184, %v4183
        %v4256 = vpack.c.bf16 %v4186, %v4185
        %v4257 = vpack.c.bf16 %v4188, %v4187
        %v4258 = vpack.c.bf16 %v4190, %v4189
        %v4259 = vpack.c.bf16 %v4192, %v4191
        %v4260 = vpack.c.bf16 %v4229, %v4228
        %v4261 = vpack.c.bf16 %v4231, %v4230
        %v4262 = vpack.c.bf16 %v4233, %v4232
        %v4263 = vpack.c.bf16 %v4235, %v4234
        %v4264 = vpack.c.bf16 %v4237, %v4236
        %v4265 = vpack.c.bf16 %v4239, %v4238
        %v4266 = vpack.c.bf16 %v4241, %v4240
        %v4267 = vpack.c.bf16 %v4243, %v4242
        %v4268 = vld [vmem:[%s3] sm:$0xf]
        %v4269 = vld [vmem:[%s3 + $0x4] sm:$0xf]
        %v4272 = vunpack.c.l.b16 %v4268
        %v4273 = vunpack.c.l.b16 %v4269
        %v4274 = vpack.c.b16 %v4273, %v4272
        %v4277 = vsel %vm4193, %v4260, 0
        %v4280 = vsel %vm4193, %v4261, 0
        %v4283 = vsel %vm4193, %v4262, 0
        %v4286 = vsel %vm4193, %v4263, 0
        %v4289 = vsel %vm4193, %v4264, 0
        %v4292 = vsel %vm4193, %v4265, 0
        %v4295 = vsel %vm4193, %v4266, 0
        %v4298 = vsel %vm4193, %v4267, 0
        %4300 = vmatprep.subr.bf16.mxu0 0
        %4301 = vmatpush1.bf16.msra.mxu0 0
        %4302 = vmatprep.subr.bf16.mxu0 0
        %4303 = vmatpush1.bf16.msra.mxu0 0
        %4304 = vmatprep.subr.bf16.mxu0 0
        %4305 = vmatpush1.bf16.msra.mxu0 0
        %4306 = vmatprep.subr.bf16.mxu0 0
        %4307 = vmatpush1.bf16.msra.mxu0 0
        %4308 = vmatprep.subr.bf16.mxu0 0
        %4309 = vmatpush1.bf16.msra.mxu0 0
        %4310 = vmatprep.subr.bf16.mxu0 0
        %4311 = vmatpush1.bf16.msra.mxu0 0
        %4312 = vmatprep.subr.bf16.mxu0 0
        %4313 = vmatpush1.bf16.msra.mxu0 0
        %4314 = vmatprep.subr.bf16.mxu0 0
        %4315 = vmatpush1.bf16.msra.mxu0 %v4274
        %4316 = vmatprep.subr.bf16.mxu0 0
        %4317 = vmatpush2.bf16.msra.mxu0 0
        %4318 = vmatprep.subr.bf16.mxu0 0
        %4319 = vmatpush2.bf16.msra.mxu0 0
        %4320 = vmatprep.subr.bf16.mxu0 0
        %4321 = vmatpush2.bf16.msra.mxu0 0
        %4322 = vmatprep.subr.bf16.mxu0 0
        %4323 = vmatpush2.bf16.msra.mxu0 0
        %4324 = vmatprep.subr.bf16.mxu0 0
        %4325 = vmatpush2.bf16.msra.mxu0 0
        %4326 = vmatprep.subr.bf16.mxu0 0
        %4327 = vmatpush2.bf16.msra.mxu0 0
        %4328 = vmatprep.subr.bf16.mxu0 0
        %4329 = vmatpush2.bf16.msra.mxu0 0
        %4330 = vmatprep.subr.bf16.mxu0 0
        %4331 = vmatpush2.bf16.msra.mxu0 0
        %4332 = vmatprep.mubr.bf16.mxu0 0
        %4333 = vmatmul.mubr.bf16.gmra.mxu0 %v4277
        %v4334 = vpop.f32.mrf.mxu0
        %v4335 = vadd.f32 0.0, %v4334
        %v4336 = vpop.f32.mrf.mxu0
        %v4337 = vpop.f32.mrf.mxu0
        %v4338 = vadd.f32 0.0, %v4337
        %v4339 = vpop.f32.mrf.mxu0
        %4340 = vmatprep.mubr.bf16.mxu0 0
        %4341 = vmatmul.mubr.bf16.gmra.mxu0 %v4280
        %v4342 = vpop.f32.mrf.mxu0
        %v4343 = vadd.f32 0.0, %v4342
        %v4344 = vpop.f32.mrf.mxu0
        %v4345 = vpop.f32.mrf.mxu0
        %v4346 = vadd.f32 0.0, %v4345
        %v4347 = vpop.f32.mrf.mxu0
        %4348 = vmatprep.mubr.bf16.mxu0 0
        %4349 = vmatmul.mubr.bf16.gmra.mxu0 %v4283
        %v4350 = vpop.f32.mrf.mxu0
        %v4351 = vadd.f32 0.0, %v4350
        %v4352 = vpop.f32.mrf.mxu0
        %v4353 = vpop.f32.mrf.mxu0
        %v4354 = vadd.f32 0.0, %v4353
        %v4355 = vpop.f32.mrf.mxu0
        %4356 = vmatprep.mubr.bf16.mxu0 0
        %4357 = vmatmul.mubr.bf16.gmra.mxu0 %v4286
        %v4358 = vpop.f32.mrf.mxu0
        %v4359 = vadd.f32 0.0, %v4358
        %v4360 = vpop.f32.mrf.mxu0
        %v4361 = vpop.f32.mrf.mxu0
        %v4362 = vadd.f32 0.0, %v4361
        %v4363 = vpop.f32.mrf.mxu0
        %4364 = vmatprep.mubr.bf16.mxu0 0
        %4365 = vmatmul.mubr.bf16.gmra.mxu0 %v4289
        %v4366 = vpop.f32.mrf.mxu0
        %v4367 = vadd.f32 0.0, %v4366
        %v4368 = vpop.f32.mrf.mxu0
        %v4369 = vpop.f32.mrf.mxu0
        %v4370 = vadd.f32 0.0, %v4369
        %v4371 = vpop.f32.mrf.mxu0
        %4372 = vmatprep.mubr.bf16.mxu0 0
        %4373 = vmatmul.mubr.bf16.gmra.mxu0 %v4292
        %v4374 = vpop.f32.mrf.mxu0
        %v4375 = vadd.f32 0.0, %v4374
        %v4376 = vpop.f32.mrf.mxu0
        %v4377 = vpop.f32.mrf.mxu0
        %v4378 = vadd.f32 0.0, %v4377
        %v4379 = vpop.f32.mrf.mxu0
        %4380 = vmatprep.mubr.bf16.mxu0 0
        %4381 = vmatmul.mubr.bf16.gmra.mxu0 %v4295
        %v4382 = vpop.f32.mrf.mxu0
        %v4383 = vadd.f32 0.0, %v4382
        %v4384 = vpop.f32.mrf.mxu0
        %v4385 = vpop.f32.mrf.mxu0
        %v4386 = vadd.f32 0.0, %v4385
        %v4387 = vpop.f32.mrf.mxu0
        %4388 = vmatprep.mubr.bf16.mxu0 0
        %4389 = vmatmul.mubr.bf16.gmra.mxu0 %v4298
        %v4390 = vpop.f32.mrf.mxu0
        %v4391 = vadd.f32 0.0, %v4390
        %v4392 = vpop.f32.mrf.mxu0
        %v4393 = vpop.f32.mrf.mxu0
        %v4394 = vadd.f32 0.0, %v4393
        %v4395 = vpop.f32.mrf.mxu0
        %4396 = vdwg.mxu0
        %v4397 = vpack.c.bf16 %v4338, %v4335
        %v4398 = vpack.c.bf16 %v4346, %v4343
        %v4399 = vpack.c.bf16 %v4354, %v4351
        %v4400 = vpack.c.bf16 %v4362, %v4359
        %v4401 = vpack.c.bf16 %v4370, %v4367
        %v4402 = vpack.c.bf16 %v4378, %v4375
        %v4403 = vpack.c.bf16 %v4386, %v4383
        %v4404 = vpack.c.bf16 %v4394, %v4391
        %v4406 = vsel %vm4193, %v4397, 0
        %v4409 = vsel %vm4193, %v4398, 0
        %v4412 = vsel %vm4193, %v4399, 0
        %v4415 = vsel %vm4193, %v4400, 0
        %v4418 = vsel %vm4193, %v4401, 0
        %v4421 = vsel %vm4193, %v4402, 0
        %v4424 = vsel %vm4193, %v4403, 0
        %v4427 = vsel %vm4193, %v4404, 0
        %v4430 = vsel %vm4193, %v4244, 0
        %v4433 = vsel %vm4193, %v4245, 0
        %v4436 = vsel %vm4193, %v4246, 0
        %v4439 = vsel %vm4193, %v4247, 0
        %v4442 = vsel %vm4193, %v4248, 0
        %v4445 = vsel %vm4193, %v4249, 0
        %v4448 = vsel %vm4193, %v4250, 0
        %v4451 = vsel %vm4193, %v4251, 0
        %v4454 = vsel %vm4193, %v4252, 0
        %v4457 = vsel %vm4193, %v4253, 0
        %v4460 = vsel %vm4193, %v4254, 0
        %v4463 = vsel %vm4193, %v4255, 0
        %v4466 = vsel %vm4193, %v4256, 0
        %v4469 = vsel %vm4193, %v4257, 0
        %v4472 = vsel %vm4193, %v4258, 0
        %v4475 = vsel %vm4193, %v4259, 0
        %4477 = vmatprep.subr.bf16.mxu0 0
        %4478 = vmatpush1.bf16.xpose.msra.mxu0 %v4451
        %4479 = vmatprep.subr.bf16.mxu0 0
        %4480 = vmatpush1.bf16.xpose.msra.mxu0 %v4448
        %4481 = vmatprep.subr.bf16.mxu0 0
        %4482 = vmatpush1.bf16.xpose.msra.mxu0 %v4445
        %4483 = vmatprep.subr.bf16.mxu0 0
        %4484 = vmatpush1.bf16.xpose.msra.mxu0 %v4442
        %4485 = vmatprep.subr.bf16.mxu0 0
        %4486 = vmatpush1.bf16.xpose.msra.mxu0 %v4439
        %4487 = vmatprep.subr.bf16.mxu0 0
        %4488 = vmatpush1.bf16.xpose.msra.mxu0 %v4436
        %4489 = vmatprep.subr.bf16.mxu0 0
        %4490 = vmatpush1.bf16.xpose.msra.mxu0 %v4433
        %4491 = vmatprep.subr.bf16.mxu0 0
        %4492 = vmatpush1.bf16.xpose.msra.mxu0 %v4430
        %4493 = vmatprep.subr.bf16.mxu0 0
        %4494 = vmatpush2.bf16.xpose.msra.mxu0 %v4475
        %4495 = vmatprep.subr.bf16.mxu0 0
        %4496 = vmatpush2.bf16.xpose.msra.mxu0 %v4472
        %4497 = vmatprep.subr.bf16.mxu0 0
        %4498 = vmatpush2.bf16.xpose.msra.mxu0 %v4469
        %4499 = vmatprep.subr.bf16.mxu0 0
        %4500 = vmatpush2.bf16.xpose.msra.mxu0 %v4466
        %4501 = vmatprep.subr.bf16.mxu0 0
        %4502 = vmatpush2.bf16.xpose.msra.mxu0 %v4463
        %4503 = vmatprep.subr.bf16.mxu0 0
        %4504 = vmatpush2.bf16.xpose.msra.mxu0 %v4460
        %4505 = vmatprep.subr.bf16.mxu0 0
        %4506 = vmatpush2.bf16.xpose.msra.mxu0 %v4457
        %4507 = vmatprep.subr.bf16.mxu0 0
        %4508 = vmatpush2.bf16.xpose.msra.mxu0 %v4454
        %4509 = vmatprep.mubr.bf16.mxu0 0
        %4510 = vmatmul.mubr.bf16.gmra.mxu0 %v4406
        %v4511 = vpop.f32.mrf.mxu0
        %v4512 = vadd.f32 0.0, %v4511
        %v4513 = vpop.f32.mrf.mxu0
        %v4514 = vadd.f32 0.0, %v4513
        %v4515 = vpop.f32.mrf.mxu0
        %v4516 = vadd.f32 0.0, %v4515
        %v4517 = vpop.f32.mrf.mxu0
        %v4518 = vadd.f32 0.0, %v4517
        %4519 = vmatprep.mubr.bf16.mxu0 0
        %4520 = vmatmul.mubr.bf16.gmra.mxu0 %v4409
        %v4521 = vpop.f32.mrf.mxu0
        %v4522 = vadd.f32 0.0, %v4521
        %v4523 = vpop.f32.mrf.mxu0
        %v4524 = vadd.f32 0.0, %v4523
        %v4525 = vpop.f32.mrf.mxu0
        %v4526 = vadd.f32 0.0, %v4525
        %v4527 = vpop.f32.mrf.mxu0
        %v4528 = vadd.f32 0.0, %v4527
        %4529 = vmatprep.mubr.bf16.mxu0 0
        %4530 = vmatmul.mubr.bf16.gmra.mxu0 %v4412
        %v4531 = vpop.f32.mrf.mxu0
        %v4532 = vadd.f32 0.0, %v4531
        %v4533 = vpop.f32.mrf.mxu0
        %v4534 = vadd.f32 0.0, %v4533
        %v4535 = vpop.f32.mrf.mxu0
        %v4536 = vadd.f32 0.0, %v4535
        %v4537 = vpop.f32.mrf.mxu0
        %v4538 = vadd.f32 0.0, %v4537
        %4539 = vmatprep.mubr.bf16.mxu0 0
        %4540 = vmatmul.mubr.bf16.gmra.mxu0 %v4415
        %v4541 = vpop.f32.mrf.mxu0
        %v4542 = vadd.f32 0.0, %v4541
        %v4543 = vpop.f32.mrf.mxu0
        %v4544 = vadd.f32 0.0, %v4543
        %v4545 = vpop.f32.mrf.mxu0
        %v4546 = vadd.f32 0.0, %v4545
        %v4547 = vpop.f32.mrf.mxu0
        %v4548 = vadd.f32 0.0, %v4547
        %4549 = vmatprep.mubr.bf16.mxu0 0
        %4550 = vmatmul.mubr.bf16.gmra.mxu0 %v4418
        %v4551 = vpop.f32.mrf.mxu0
        %v4552 = vadd.f32 0.0, %v4551
        %v4553 = vpop.f32.mrf.mxu0
        %v4554 = vadd.f32 0.0, %v4553
        %v4555 = vpop.f32.mrf.mxu0
        %v4556 = vadd.f32 0.0, %v4555
        %v4557 = vpop.f32.mrf.mxu0
        %v4558 = vadd.f32 0.0, %v4557
        %4559 = vmatprep.mubr.bf16.mxu0 0
        %4560 = vmatmul.mubr.bf16.gmra.mxu0 %v4421
        %v4561 = vpop.f32.mrf.mxu0
        %v4562 = vadd.f32 0.0, %v4561
        %v4563 = vpop.f32.mrf.mxu0
        %v4564 = vadd.f32 0.0, %v4563
        %v4565 = vpop.f32.mrf.mxu0
        %v4566 = vadd.f32 0.0, %v4565
        %v4567 = vpop.f32.mrf.mxu0
        %v4568 = vadd.f32 0.0, %v4567
        %4569 = vmatprep.mubr.bf16.mxu0 0
        %4570 = vmatmul.mubr.bf16.gmra.mxu0 %v4424
        %v4571 = vpop.f32.mrf.mxu0
        %v4572 = vadd.f32 0.0, %v4571
        %v4573 = vpop.f32.mrf.mxu0
        %v4574 = vadd.f32 0.0, %v4573
        %v4575 = vpop.f32.mrf.mxu0
        %v4576 = vadd.f32 0.0, %v4575
        %v4577 = vpop.f32.mrf.mxu0
        %v4578 = vadd.f32 0.0, %v4577
        %4579 = vmatprep.mubr.bf16.mxu0 0
        %4580 = vmatmul.mubr.bf16.gmra.mxu0 %v4427
        %v4581 = vpop.f32.mrf.mxu0
        %v4582 = vadd.f32 0.0, %v4581
        %v4583 = vpop.f32.mrf.mxu0
        %v4584 = vadd.f32 0.0, %v4583
        %v4585 = vpop.f32.mrf.mxu0
        %v4586 = vadd.f32 0.0, %v4585
        %v4587 = vpop.f32.mrf.mxu0
        %v4588 = vadd.f32 0.0, %v4587
        %4589 = vdwg.mxu0
        %v4590 = vmax.f32 %v4512, %v4514
        %4591 = vmax.xlane.f32.xlu0 %v4590
        %v4592 = vpop.xlane.xlu0 %4591
        %v4593 = vmax.f32 %v4516, %v4518
        %4594 = vmax.xlane.f32.xlu0 %v4593
        %v4595 = vpop.xlane.xlu0 %4594
        %v4596 = vmax.f32 %v4522, %v4524
        %4597 = vmax.xlane.f32.xlu0 %v4596
        %v4598 = vpop.xlane.xlu0 %4597
        %v4599 = vmax.f32 %v4526, %v4528
        %4600 = vmax.xlane.f32.xlu0 %v4599
        %v4601 = vpop.xlane.xlu0 %4600
        %v4602 = vmax.f32 %v4532, %v4534
        %4603 = vmax.xlane.f32.xlu0 %v4602
        %v4604 = vpop.xlane.xlu0 %4603
        %v4605 = vmax.f32 %v4536, %v4538
        %4606 = vmax.xlane.f32.xlu0 %v4605
        %v4607 = vpop.xlane.xlu0 %4606
        %v4608 = vmax.f32 %v4542, %v4544
        %4609 = vmax.xlane.f32.xlu0 %v4608
        %v4610 = vpop.xlane.xlu0 %4609
        %v4611 = vmax.f32 %v4546, %v4548
        %4612 = vmax.xlane.f32.xlu0 %v4611
        %v4613 = vpop.xlane.xlu0 %4612
        %v4614 = vmax.f32 %v4552, %v4554
        %4615 = vmax.xlane.f32.xlu0 %v4614
        %v4616 = vpop.xlane.xlu0 %4615
        %v4617 = vmax.f32 %v4556, %v4558
        %4618 = vmax.xlane.f32.xlu0 %v4617
        %v4619 = vpop.xlane.xlu0 %4618
        %v4620 = vmax.f32 %v4562, %v4564
        %4621 = vmax.xlane.f32.xlu0 %v4620
        %v4622 = vpop.xlane.xlu0 %4621
        %v4623 = vmax.f32 %v4566, %v4568
        %4624 = vmax.xlane.f32.xlu0 %v4623
        %v4625 = vpop.xlane.xlu0 %4624
        %v4626 = vmax.f32 %v4572, %v4574
        %4627 = vmax.xlane.f32.xlu0 %v4626
        %v4628 = vpop.xlane.xlu0 %4627
        %v4629 = vmax.f32 %v4576, %v4578
        %4630 = vmax.xlane.f32.xlu0 %v4629
        %v4631 = vpop.xlane.xlu0 %4630
        %v4632 = vmax.f32 %v4582, %v4584
        %4633 = vmax.xlane.f32.xlu0 %v4632
        %v4634 = vpop.xlane.xlu0 %4633
        %v4635 = vmax.f32 %v4586, %v4588
        %4636 = vmax.xlane.f32.xlu0 %v4635
        %v4637 = vpop.xlane.xlu0 %4636
        %v4638 = vsub.f32 %v4512, %v4592
        %v4639 = vsub.f32 %v4514, %v4592
        %v4640 = vsub.f32 %v4516, %v4595
        %v4641 = vsub.f32 %v4518, %v4595
        %v4642 = vsub.f32 %v4522, %v4598
        %v4643 = vsub.f32 %v4524, %v4598
        %v4644 = vsub.f32 %v4526, %v4601
        %v4645 = vsub.f32 %v4528, %v4601
        %v4646 = vsub.f32 %v4532, %v4604
        %v4647 = vsub.f32 %v4534, %v4604
        %v4648 = vsub.f32 %v4536, %v4607
        %v4649 = vsub.f32 %v4538, %v4607
        %v4650 = vsub.f32 %v4542, %v4610
        %v4651 = vsub.f32 %v4544, %v4610
        %v4652 = vsub.f32 %v4546, %v4613
        %v4653 = vsub.f32 %v4548, %v4613
        %v4654 = vsub.f32 %v4552, %v4616
        %v4655 = vsub.f32 %v4554, %v4616
        %v4656 = vsub.f32 %v4556, %v4619
        %v4657 = vsub.f32 %v4558, %v4619
        %v4658 = vsub.f32 %v4562, %v4622
        %v4659 = vsub.f32 %v4564, %v4622
        %v4660 = vsub.f32 %v4566, %v4625
        %v4661 = vsub.f32 %v4568, %v4625
        %v4662 = vsub.f32 %v4572, %v4628
        %v4663 = vsub.f32 %v4574, %v4628
        %v4664 = vsub.f32 %v4576, %v4631
        %v4665 = vsub.f32 %v4578, %v4631
        %v4666 = vsub.f32 %v4582, %v4634
        %v4667 = vsub.f32 %v4584, %v4634
        %v4668 = vsub.f32 %v4586, %v4637
        %v4669 = vsub.f32 %v4588, %v4637
        %v4670 = vmul.f32 %v4638, 1.442695
        %v4671 = vpow.pop %v4670
        %v4672 = vmul.f32 %v4639, 1.442695
        %v4673 = vpow.pop %v4672
        %v4674 = vmul.f32 %v4640, 1.442695
        %v4675 = vpow.pop %v4674
        %v4676 = vmul.f32 %v4641, 1.442695
        %v4677 = vpow.pop %v4676
        %v4678 = vmul.f32 %v4642, 1.442695
        %v4679 = vpow.pop %v4678
        %v4680 = vmul.f32 %v4643, 1.442695
        %v4681 = vpow.pop %v4680
        %v4682 = vmul.f32 %v4644, 1.442695
        %v4683 = vpow.pop %v4682
        %v4684 = vmul.f32 %v4645, 1.442695
        %v4685 = vpow.pop %v4684
        %v4686 = vmul.f32 %v4646, 1.442695
        %v4687 = vpow.pop %v4686
        %v4688 = vmul.f32 %v4647, 1.442695
        %v4689 = vpow.pop %v4688
        %v4690 = vmul.f32 %v4648, 1.442695
        %v4691 = vpow.pop %v4690
        %v4692 = vmul.f32 %v4649, 1.442695
        %v4693 = vpow.pop %v4692
        %v4694 = vmul.f32 %v4650, 1.442695
        %v4695 = vpow.pop %v4694
        %v4696 = vmul.f32 %v4651, 1.442695
        %v4697 = vpow.pop %v4696
        %v4698 = vmul.f32 %v4652, 1.442695
        %v4699 = vpow.pop %v4698
        %v4700 = vmul.f32 %v4653, 1.442695
        %v4701 = vpow.pop %v4700
        %v4702 = vmul.f32 %v4654, 1.442695
        %v4703 = vpow.pop %v4702
        %v4704 = vmul.f32 %v4655, 1.442695
        %v4705 = vpow.pop %v4704
        %v4706 = vmul.f32 %v4656, 1.442695
        %v4707 = vpow.pop %v4706
        %v4708 = vmul.f32 %v4657, 1.442695
        %v4709 = vpow.pop %v4708
        %v4710 = vmul.f32 %v4658, 1.442695
        %v4711 = vpow.pop %v4710
        %v4712 = vmul.f32 %v4659, 1.442695
        %v4713 = vpow.pop %v4712
        %v4714 = vmul.f32 %v4660, 1.442695
        %v4715 = vpow.pop %v4714
        %v4716 = vmul.f32 %v4661, 1.442695
        %v4717 = vpow.pop %v4716
        %v4718 = vmul.f32 %v4662, 1.442695
        %v4719 = vpow.pop %v4718
        %v4720 = vmul.f32 %v4663, 1.442695
        %v4721 = vpow.pop %v4720
        %v4722 = vmul.f32 %v4664, 1.442695
        %v4723 = vpow.pop %v4722
        %v4724 = vmul.f32 %v4665, 1.442695
        %v4725 = vpow.pop %v4724
        %v4726 = vmul.f32 %v4666, 1.442695
        %v4727 = vpow.pop %v4726
        %v4728 = vmul.f32 %v4667, 1.442695
        %v4729 = vpow.pop %v4728
        %v4730 = vmul.f32 %v4668, 1.442695
        %v4731 = vpow.pop %v4730
        %v4732 = vmul.f32 %v4669, 1.442695
        %v4733 = vpow.pop %v4732
        %v4734 = vadd.f32 %v4671, %v4673
        %4735 = vadd.xlane.f32.xlu0 %v4734
        %v4736 = vpop.xlane.xlu0 %4735
        %v4737 = vadd.f32 %v4675, %v4677
        %4738 = vadd.xlane.f32.xlu0 %v4737
        %v4739 = vpop.xlane.xlu0 %4738
        %v4740 = vadd.f32 %v4679, %v4681
        %4741 = vadd.xlane.f32.xlu0 %v4740
        %v4742 = vpop.xlane.xlu0 %4741
        %v4743 = vadd.f32 %v4683, %v4685
        %4744 = vadd.xlane.f32.xlu0 %v4743
        %v4745 = vpop.xlane.xlu0 %4744
        %v4746 = vadd.f32 %v4687, %v4689
        %4747 = vadd.xlane.f32.xlu0 %v4746
        %v4748 = vpop.xlane.xlu0 %4747
        %v4749 = vadd.f32 %v4691, %v4693
        %4750 = vadd.xlane.f32.xlu0 %v4749
        %v4751 = vpop.xlane.xlu0 %4750
        %v4752 = vadd.f32 %v4695, %v4697
        %4753 = vadd.xlane.f32.xlu0 %v4752
        %v4754 = vpop.xlane.xlu0 %4753
        %v4755 = vadd.f32 %v4699, %v4701
        %4756 = vadd.xlane.f32.xlu0 %v4755
        %v4757 = vpop.xlane.xlu0 %4756
        %v4758 = vadd.f32 %v4703, %v4705
        %4759 = vadd.xlane.f32.xlu0 %v4758
        %v4760 = vpop.xlane.xlu0 %4759
        %v4761 = vadd.f32 %v4707, %v4709
        %4762 = vadd.xlane.f32.xlu0 %v4761
        %v4763 = vpop.xlane.xlu0 %4762
        %v4764 = vadd.f32 %v4711, %v4713
        %4765 = vadd.xlane.f32.xlu0 %v4764
        %v4766 = vpop.xlane.xlu0 %4765
        %v4767 = vadd.f32 %v4715, %v4717
        %4768 = vadd.xlane.f32.xlu0 %v4767
        %v4769 = vpop.xlane.xlu0 %4768
        %v4770 = vadd.f32 %v4719, %v4721
        %4771 = vadd.xlane.f32.xlu0 %v4770
        %v4772 = vpop.xlane.xlu0 %4771
        %v4773 = vadd.f32 %v4723, %v4725
        %4774 = vadd.xlane.f32.xlu0 %v4773
        %v4775 = vpop.xlane.xlu0 %4774
        %v4776 = vadd.f32 %v4727, %v4729
        %4777 = vadd.xlane.f32.xlu0 %v4776
        %v4778 = vpop.xlane.xlu0 %4777
        %v4779 = vadd.f32 %v4731, %v4733
        %4780 = vadd.xlane.f32.xlu0 %v4779
        %v4781 = vpop.xlane.xlu0 %4780
        %v4782 = vld [vmem:[%s4] sm:$0xf]
        %v4783 = vld [vmem:[%s4 + $0x4] sm:$0xf]
        %v4786 = vunpack.c.l.b16 %v4782
        %v4787 = vunpack.c.l.b16 %v4783
        %v4788 = vpack.c.b16 %v4787, %v4786
        %4790 = vmatprep.subr.bf16.mxu0 0
        %4791 = vmatpush1.bf16.msra.mxu0 0
        %4792 = vmatprep.subr.bf16.mxu0 0
        %4793 = vmatpush1.bf16.msra.mxu0 0
        %4794 = vmatprep.subr.bf16.mxu0 0
        %4795 = vmatpush1.bf16.msra.mxu0 0
        %4796 = vmatprep.subr.bf16.mxu0 0
        %4797 = vmatpush1.bf16.msra.mxu0 0
        %4798 = vmatprep.subr.bf16.mxu0 0
        %4799 = vmatpush1.bf16.msra.mxu0 0
        %4800 = vmatprep.subr.bf16.mxu0 0
        %4801 = vmatpush1.bf16.msra.mxu0 0
        %4802 = vmatprep.subr.bf16.mxu0 0
        %4803 = vmatpush1.bf16.msra.mxu0 0
        %4804 = vmatprep.subr.bf16.mxu0 0
        %4805 = vmatpush1.bf16.msra.mxu0 %v4788
        %4806 = vmatprep.subr.bf16.mxu0 0
        %4807 = vmatpush2.bf16.msra.mxu0 0
        %4808 = vmatprep.subr.bf16.mxu0 0
        %4809 = vmatpush2.bf16.msra.mxu0 0
        %4810 = vmatprep.subr.bf16.mxu0 0
        %4811 = vmatpush2.bf16.msra.mxu0 0
        %4812 = vmatprep.subr.bf16.mxu0 0
        %4813 = vmatpush2.bf16.msra.mxu0 0
        %4814 = vmatprep.subr.bf16.mxu0 0
        %4815 = vmatpush2.bf16.msra.mxu0 0
        %4816 = vmatprep.subr.bf16.mxu0 0
        %4817 = vmatpush2.bf16.msra.mxu0 0
        %4818 = vmatprep.subr.bf16.mxu0 0
        %4819 = vmatpush2.bf16.msra.mxu0 0
        %4820 = vmatprep.subr.bf16.mxu0 0
        %4821 = vmatpush2.bf16.msra.mxu0 0
        %4822 = vmatprep.mubr.bf16.mxu0 0
        %4823 = vmatmul.mubr.bf16.gmra.mxu0 %v4430
        %v4824 = vpop.f32.mrf.mxu0
        %v4825 = vadd.f32 0.0, %v4824
        %v4826 = vpop.f32.mrf.mxu0
        %v4827 = vpop.f32.mrf.mxu0
        %v4828 = vadd.f32 0.0, %v4827
        %v4829 = vpop.f32.mrf.mxu0
        %4830 = vmatprep.mubr.bf16.mxu0 0
        %4831 = vmatmul.mubr.bf16.gmra.mxu0 %v4433
        %v4832 = vpop.f32.mrf.mxu0
        %v4833 = vadd.f32 0.0, %v4832
        %v4834 = vpop.f32.mrf.mxu0
        %v4835 = vpop.f32.mrf.mxu0
        %v4836 = vadd.f32 0.0, %v4835
        %v4837 = vpop.f32.mrf.mxu0
        %4838 = vmatprep.mubr.bf16.mxu0 0
        %4839 = vmatmul.mubr.bf16.gmra.mxu0 %v4436
        %v4840 = vpop.f32.mrf.mxu0
        %v4841 = vadd.f32 0.0, %v4840
        %v4842 = vpop.f32.mrf.mxu0
        %v4843 = vpop.f32.mrf.mxu0
        %v4844 = vadd.f32 0.0, %v4843
        %v4845 = vpop.f32.mrf.mxu0
        %4846 = vmatprep.mubr.bf16.mxu0 0
        %4847 = vmatmul.mubr.bf16.gmra.mxu0 %v4439
        %v4848 = vpop.f32.mrf.mxu0
        %v4849 = vadd.f32 0.0, %v4848
        %v4850 = vpop.f32.mrf.mxu0
        %v4851 = vpop.f32.mrf.mxu0
        %v4852 = vadd.f32 0.0, %v4851
        %v4853 = vpop.f32.mrf.mxu0
        %4854 = vmatprep.mubr.bf16.mxu0 0
        %4855 = vmatmul.mubr.bf16.gmra.mxu0 %v4442
        %v4856 = vpop.f32.mrf.mxu0
        %v4857 = vadd.f32 0.0, %v4856
        %v4858 = vpop.f32.mrf.mxu0
        %v4859 = vpop.f32.mrf.mxu0
        %v4860 = vadd.f32 0.0, %v4859
        %v4861 = vpop.f32.mrf.mxu0
        %4862 = vmatprep.mubr.bf16.mxu0 0
        %4863 = vmatmul.mubr.bf16.gmra.mxu0 %v4445
        %v4864 = vpop.f32.mrf.mxu0
        %v4865 = vadd.f32 0.0, %v4864
        %v4866 = vpop.f32.mrf.mxu0
        %v4867 = vpop.f32.mrf.mxu0
        %v4868 = vadd.f32 0.0, %v4867
        %v4869 = vpop.f32.mrf.mxu0
        %4870 = vmatprep.mubr.bf16.mxu0 0
        %4871 = vmatmul.mubr.bf16.gmra.mxu0 %v4448
        %v4872 = vpop.f32.mrf.mxu0
        %v4873 = vadd.f32 0.0, %v4872
        %v4874 = vpop.f32.mrf.mxu0
        %v4875 = vpop.f32.mrf.mxu0
        %v4876 = vadd.f32 0.0, %v4875
        %v4877 = vpop.f32.mrf.mxu0
        %4878 = vmatprep.mubr.bf16.mxu0 0
        %4879 = vmatmul.mubr.bf16.gmra.mxu0 %v4451
        %v4880 = vpop.f32.mrf.mxu0
        %v4881 = vadd.f32 0.0, %v4880
        %v4882 = vpop.f32.mrf.mxu0
        %v4883 = vpop.f32.mrf.mxu0
        %v4884 = vadd.f32 0.0, %v4883
        %v4885 = vpop.f32.mrf.mxu0
        %4886 = vmatprep.mubr.bf16.mxu0 0
        %4887 = vmatmul.mubr.bf16.gmra.mxu0 %v4454
        %v4888 = vpop.f32.mrf.mxu0
        %v4889 = vadd.f32 0.0, %v4888
        %v4890 = vpop.f32.mrf.mxu0
        %v4891 = vpop.f32.mrf.mxu0
        %v4892 = vadd.f32 0.0, %v4891
        %v4893 = vpop.f32.mrf.mxu0
        %4894 = vmatprep.mubr.bf16.mxu0 0
        %4895 = vmatmul.mubr.bf16.gmra.mxu0 %v4457
        %v4896 = vpop.f32.mrf.mxu0
        %v4897 = vadd.f32 0.0, %v4896
        %v4898 = vpop.f32.mrf.mxu0
        %v4899 = vpop.f32.mrf.mxu0
        %v4900 = vadd.f32 0.0, %v4899
        %v4901 = vpop.f32.mrf.mxu0
        %4902 = vmatprep.mubr.bf16.mxu0 0
        %4903 = vmatmul.mubr.bf16.gmra.mxu0 %v4460
        %v4904 = vpop.f32.mrf.mxu0
        %v4905 = vadd.f32 0.0, %v4904
        %v4906 = vpop.f32.mrf.mxu0
        %v4907 = vpop.f32.mrf.mxu0
        %v4908 = vadd.f32 0.0, %v4907
        %v4909 = vpop.f32.mrf.mxu0
        %4910 = vmatprep.mubr.bf16.mxu0 0
        %4911 = vmatmul.mubr.bf16.gmra.mxu0 %v4463
        %v4912 = vpop.f32.mrf.mxu0
        %v4913 = vadd.f32 0.0, %v4912
        %v4914 = vpop.f32.mrf.mxu0
        %v4915 = vpop.f32.mrf.mxu0
        %v4916 = vadd.f32 0.0, %v4915
        %v4917 = vpop.f32.mrf.mxu0
        %4918 = vmatprep.mubr.bf16.mxu0 0
        %4919 = vmatmul.mubr.bf16.gmra.mxu0 %v4466
        %v4920 = vpop.f32.mrf.mxu0
        %v4921 = vadd.f32 0.0, %v4920
        %v4922 = vpop.f32.mrf.mxu0
        %v4923 = vpop.f32.mrf.mxu0
        %v4924 = vadd.f32 0.0, %v4923
        %v4925 = vpop.f32.mrf.mxu0
        %4926 = vmatprep.mubr.bf16.mxu0 0
        %4927 = vmatmul.mubr.bf16.gmra.mxu0 %v4469
        %v4928 = vpop.f32.mrf.mxu0
        %v4929 = vadd.f32 0.0, %v4928
        %v4930 = vpop.f32.mrf.mxu0
        %v4931 = vpop.f32.mrf.mxu0
        %v4932 = vadd.f32 0.0, %v4931
        %v4933 = vpop.f32.mrf.mxu0
        %4934 = vmatprep.mubr.bf16.mxu0 0
        %4935 = vmatmul.mubr.bf16.gmra.mxu0 %v4472
        %v4936 = vpop.f32.mrf.mxu0
        %v4937 = vadd.f32 0.0, %v4936
        %v4938 = vpop.f32.mrf.mxu0
        %v4939 = vpop.f32.mrf.mxu0
        %v4940 = vadd.f32 0.0, %v4939
        %v4941 = vpop.f32.mrf.mxu0
        %4942 = vmatprep.mubr.bf16.mxu0 0
        %4943 = vmatmul.mubr.bf16.gmra.mxu0 %v4475
        %v4944 = vpop.f32.mrf.mxu0
        %v4945 = vadd.f32 0.0, %v4944
        %v4946 = vpop.f32.mrf.mxu0
        %v4947 = vpop.f32.mrf.mxu0
        %v4948 = vadd.f32 0.0, %v4947
        %v4949 = vpop.f32.mrf.mxu0
        %4950 = vdwg.mxu0
        %v4951 = vpack.c.bf16 %v4675, %v4671
        %v4952 = vpack.c.bf16 %v4677, %v4673
        %v4953 = vpack.c.bf16 %v4683, %v4679
        %v4954 = vpack.c.bf16 %v4685, %v4681
        %v4955 = vpack.c.bf16 %v4691, %v4687
        %v4956 = vpack.c.bf16 %v4693, %v4689
        %v4957 = vpack.c.bf16 %v4699, %v4695
        %v4958 = vpack.c.bf16 %v4701, %v4697
        %v4959 = vpack.c.bf16 %v4707, %v4703
        %v4960 = vpack.c.bf16 %v4709, %v4705
        %v4961 = vpack.c.bf16 %v4715, %v4711
        %v4962 = vpack.c.bf16 %v4717, %v4713
        %v4963 = vpack.c.bf16 %v4723, %v4719
        %v4964 = vpack.c.bf16 %v4725, %v4721
        %v4965 = vpack.c.bf16 %v4731, %v4727
        %v4966 = vpack.c.bf16 %v4733, %v4729
        %v4967 = vpack.c.bf16 %v4828, %v4825
        %v4968 = vpack.c.bf16 %v4836, %v4833
        %v4969 = vpack.c.bf16 %v4844, %v4841
        %v4970 = vpack.c.bf16 %v4852, %v4849
        %v4971 = vpack.c.bf16 %v4860, %v4857
        %v4972 = vpack.c.bf16 %v4868, %v4865
        %v4973 = vpack.c.bf16 %v4876, %v4873
        %v4974 = vpack.c.bf16 %v4884, %v4881
        %v4975 = vpack.c.bf16 %v4892, %v4889
        %v4976 = vpack.c.bf16 %v4900, %v4897
        %v4977 = vpack.c.bf16 %v4908, %v4905
        %v4978 = vpack.c.bf16 %v4916, %v4913
        %v4979 = vpack.c.bf16 %v4924, %v4921
        %v4980 = vpack.c.bf16 %v4932, %v4929
        %v4981 = vpack.c.bf16 %v4940, %v4937
        %v4982 = vpack.c.bf16 %v4948, %v4945
        %4983 = vmatprep.subr.bf16.mxu0 0
        %4984 = vmatpush1.bf16.msra.mxu0 %v4974
        %4985 = vmatprep.subr.bf16.mxu0 0
        %4986 = vmatpush1.bf16.msra.mxu0 %v4973
        %4987 = vmatprep.subr.bf16.mxu0 0
        %4988 = vmatpush1.bf16.msra.mxu0 %v4972
        %4989 = vmatprep.subr.bf16.mxu0 0
        %4990 = vmatpush1.bf16.msra.mxu0 %v4971
        %4991 = vmatprep.subr.bf16.mxu0 0
        %4992 = vmatpush1.bf16.msra.mxu0 %v4970
        %4993 = vmatprep.subr.bf16.mxu0 0
        %4994 = vmatpush1.bf16.msra.mxu0 %v4969
        %4995 = vmatprep.subr.bf16.mxu0 0
        %4996 = vmatpush1.bf16.msra.mxu0 %v4968
        %4997 = vmatprep.subr.bf16.mxu0 0
        %4998 = vmatpush1.bf16.msra.mxu0 %v4967
        %4999 = vmatprep.subr.bf16.mxu0 0
        %5000 = vmatpush2.bf16.msra.mxu0 %v4982
        %5001 = vmatprep.subr.bf16.mxu0 0
        %5002 = vmatpush2.bf16.msra.mxu0 %v4981
        %5003 = vmatprep.subr.bf16.mxu0 0
        %5004 = vmatpush2.bf16.msra.mxu0 %v4980
        %5005 = vmatprep.subr.bf16.mxu0 0
        %5006 = vmatpush2.bf16.msra.mxu0 %v4979
        %5007 = vmatprep.subr.bf16.mxu0 0
        %5008 = vmatpush2.bf16.msra.mxu0 %v4978
        %5009 = vmatprep.subr.bf16.mxu0 0
        %5010 = vmatpush2.bf16.msra.mxu0 %v4977
        %5011 = vmatprep.subr.bf16.mxu0 0
        %5012 = vmatpush2.bf16.msra.mxu0 %v4976
        %5013 = vmatprep.subr.bf16.mxu0 0
        %5014 = vmatpush2.bf16.msra.mxu0 %v4975
        %5015 = vmatprep.mubr.bf16.mxu0 %v4952
        %5016 = vmatmul.mubr.bf16.gmra.mxu0 %v4951
        %v5017 = vpop.f32.mrf.mxu0
        %v5018 = vadd.f32 0.0, %v5017
        %v5019 = vpop.f32.mrf.mxu0
        %v5020 = vpop.f32.mrf.mxu0
        %v5021 = vadd.f32 0.0, %v5020
        %v5022 = vpop.f32.mrf.mxu0
        %5023 = vmatprep.mubr.bf16.mxu0 %v4954
        %5024 = vmatmul.mubr.bf16.gmra.mxu0 %v4953
        %v5025 = vpop.f32.mrf.mxu0
        %v5026 = vadd.f32 0.0, %v5025
        %v5027 = vpop.f32.mrf.mxu0
        %v5028 = vpop.f32.mrf.mxu0
        %v5029 = vadd.f32 0.0, %v5028
        %v5030 = vpop.f32.mrf.mxu0
        %5031 = vmatprep.mubr.bf16.mxu0 %v4956
        %5032 = vmatmul.mubr.bf16.gmra.mxu0 %v4955
        %v5033 = vpop.f32.mrf.mxu0
        %v5034 = vadd.f32 0.0, %v5033
        %v5035 = vpop.f32.mrf.mxu0
        %v5036 = vpop.f32.mrf.mxu0
        %v5037 = vadd.f32 0.0, %v5036
        %v5038 = vpop.f32.mrf.mxu0
        %5039 = vmatprep.mubr.bf16.mxu0 %v4958
        %5040 = vmatmul.mubr.bf16.gmra.mxu0 %v4957
        %v5041 = vpop.f32.mrf.mxu0
        %v5042 = vadd.f32 0.0, %v5041
        %v5043 = vpop.f32.mrf.mxu0
        %v5044 = vpop.f32.mrf.mxu0
        %v5045 = vadd.f32 0.0, %v5044
        %v5046 = vpop.f32.mrf.mxu0
        %5047 = vmatprep.mubr.bf16.mxu0 %v4960
        %5048 = vmatmul.mubr.bf16.gmra.mxu0 %v4959
        %v5049 = vpop.f32.mrf.mxu0
        %v5050 = vadd.f32 0.0, %v5049
        %v5051 = vpop.f32.mrf.mxu0
        %v5052 = vpop.f32.mrf.mxu0
        %v5053 = vadd.f32 0.0, %v5052
        %v5054 = vpop.f32.mrf.mxu0
        %5055 = vmatprep.mubr.bf16.mxu0 %v4962
        %5056 = vmatmul.mubr.bf16.gmra.mxu0 %v4961
        %v5057 = vpop.f32.mrf.mxu0
        %v5058 = vadd.f32 0.0, %v5057
        %v5059 = vpop.f32.mrf.mxu0
        %v5060 = vpop.f32.mrf.mxu0
        %v5061 = vadd.f32 0.0, %v5060
        %v5062 = vpop.f32.mrf.mxu0
        %5063 = vmatprep.mubr.bf16.mxu0 %v4964
        %5064 = vmatmul.mubr.bf16.gmra.mxu0 %v4963
        %v5065 = vpop.f32.mrf.mxu0
        %v5066 = vadd.f32 0.0, %v5065
        %v5067 = vpop.f32.mrf.mxu0
        %v5068 = vpop.f32.mrf.mxu0
        %v5069 = vadd.f32 0.0, %v5068
        %v5070 = vpop.f32.mrf.mxu0
        %5071 = vmatprep.mubr.bf16.mxu0 %v4966
        %5072 = vmatmul.mubr.bf16.gmra.mxu0 %v4965
        %v5073 = vpop.f32.mrf.mxu0
        %v5074 = vadd.f32 0.0, %v5073
        %v5075 = vpop.f32.mrf.mxu0
        %v5076 = vpop.f32.mrf.mxu0
        %v5077 = vadd.f32 0.0, %v5076
        %v5078 = vpop.f32.mrf.mxu0
        %5079 = vdwg.mxu0
        %v5080 = vrcp.pop %v4736
        %v5081 = vrcp.pop %v4739
        %v5082 = vrcp.pop %v4742
        %v5083 = vrcp.pop %v4745
        %v5084 = vrcp.pop %v4748
        %v5085 = vrcp.pop %v4751
        %v5086 = vrcp.pop %v4754
        %v5087 = vrcp.pop %v4757
        %v5088 = vrcp.pop %v4760
        %v5089 = vrcp.pop %v4763
        %v5090 = vrcp.pop %v4766
        %v5091 = vrcp.pop %v4769
        %v5092 = vrcp.pop %v4772
        %v5093 = vrcp.pop %v4775
        %v5094 = vrcp.pop %v4778
        %v5095 = vrcp.pop %v4781
        %v5096 = vmul.f32 %v5018, %v5080
        %v5097 = vmul.f32 %v5021, %v5081
        %v5098 = vmul.f32 %v5026, %v5082
        %v5099 = vmul.f32 %v5029, %v5083
        %v5100 = vmul.f32 %v5034, %v5084
        %v5101 = vmul.f32 %v5037, %v5085
        %v5102 = vmul.f32 %v5042, %v5086
        %v5103 = vmul.f32 %v5045, %v5087
        %v5104 = vmul.f32 %v5050, %v5088
        %v5105 = vmul.f32 %v5053, %v5089
        %v5106 = vmul.f32 %v5058, %v5090
        %v5107 = vmul.f32 %v5061, %v5091
        %v5108 = vmul.f32 %v5066, %v5092
        %v5109 = vmul.f32 %v5069, %v5093
        %v5110 = vmul.f32 %v5074, %v5094
        %v5111 = vmul.f32 %v5077, %v5095
        %s5112 = sld [smem:[#allocation3]]
        %s5113 = sld [smem:[#allocation3 + $0x1]]
        %v5114 = vstv %s5112
        %v5115 = vmul.f32 %v5114, %v5096
        %v5116 = vmul.f32 %v5114, %v5097
        %v5117 = vmul.f32 %v5114, %v5098
        %v5118 = vmul.f32 %v5114, %v5099
        %v5119 = vmul.f32 %v5114, %v5100
        %v5120 = vmul.f32 %v5114, %v5101
        %v5121 = vmul.f32 %v5114, %v5102
        %v5122 = vmul.f32 %v5114, %v5103
        %v5123 = vmul.f32 %v5114, %v5104
        %v5124 = vmul.f32 %v5114, %v5105
        %v5125 = vmul.f32 %v5114, %v5106
        %v5126 = vmul.f32 %v5114, %v5107
        %v5127 = vmul.f32 %v5114, %v5108
        %v5128 = vmul.f32 %v5114, %v5109
        %v5129 = vmul.f32 %v5114, %v5110
        %v5130 = vmul.f32 %v5114, %v5111
        %v5131 = vadd.f32 %v5115, %v4228
        %v5132 = vadd.f32 %v5116, %v4229
        %v5133 = vadd.f32 %v5117, %v4230
        %v5134 = vadd.f32 %v5118, %v4231
        %v5135 = vadd.f32 %v5119, %v4232
        %v5136 = vadd.f32 %v5120, %v4233
        %v5137 = vadd.f32 %v5121, %v4234
        %v5138 = vadd.f32 %v5122, %v4235
        %v5139 = vadd.f32 %v5123, %v4236
        %v5140 = vadd.f32 %v5124, %v4237
        %v5141 = vadd.f32 %v5125, %v4238
        %v5142 = vadd.f32 %v5126, %v4239
        %v5143 = vadd.f32 %v5127, %v4240
        %v5144 = vadd.f32 %v5128, %v4241
        %v5145 = vadd.f32 %v5129, %v4242
        %v5146 = vadd.f32 %v5130, %v4243
        %v5147 = vld [vmem:[%s5] sm:$0x1]
        %v5148 = vstv %s5113
        %v5150 = vsel %vm4193, %v5147, 0
        %v5153 = vsel %vm4193, %v5131, 0
        %v5156 = vsel %vm4193, %v5132, 0
        %v5159 = vsel %vm4193, %v5133, 0
        %v5162 = vsel %vm4193, %v5134, 0
        %v5165 = vsel %vm4193, %v5135, 0
        %v5168 = vsel %vm4193, %v5136, 0
        %v5171 = vsel %vm4193, %v5137, 0
        %v5174 = vsel %vm4193, %v5138, 0
        %v5177 = vsel %vm4193, %v5139, 0
        %v5180 = vsel %vm4193, %v5140, 0
        %v5183 = vsel %vm4193, %v5141, 0
        %v5186 = vsel %vm4193, %v5142, 0
        %v5189 = vsel %vm4193, %v5143, 0
        %v5192 = vsel %vm4193, %v5144, 0
        %v5195 = vsel %vm4193, %v5145, 0
        %v5198 = vsel %vm4193, %v5146, 0
        %5200 = vmatprep.subr.mxu0 0.0
        %5201 = vmatpush1.xpose.msra.mxu0 %v5198
        %5202 = vmatprep.subr.mxu0 0.0
        %5203 = vmatpush1.xpose.msra.mxu0 %v5195
        %5204 = vmatprep.subr.mxu0 0.0
        %5205 = vmatpush1.xpose.msra.mxu0 %v5192
        %5206 = vmatprep.subr.mxu0 0.0
        %5207 = vmatpush1.xpose.msra.mxu0 %v5189
        %5208 = vmatprep.subr.mxu0 0.0
        %5209 = vmatpush1.xpose.msra.mxu0 %v5186
        %5210 = vmatprep.subr.mxu0 0.0
        %5211 = vmatpush1.xpose.msra.mxu0 %v5183
        %5212 = vmatprep.subr.mxu0 0.0
        %5213 = vmatpush1.xpose.msra.mxu0 %v5180
        %5214 = vmatprep.subr.mxu0 0.0
        %5215 = vmatpush1.xpose.msra.mxu0 %v5177
        %5216 = vmatprep.subr.mxu0 0.0
        %5217 = vmatpush1.xpose.msra.mxu0 %v5174
        %5218 = vmatprep.subr.mxu0 0.0
        %5219 = vmatpush1.xpose.msra.mxu0 %v5171
        %5220 = vmatprep.subr.mxu0 0.0
        %5221 = vmatpush1.xpose.msra.mxu0 %v5168
        %5222 = vmatprep.subr.mxu0 0.0
        %5223 = vmatpush1.xpose.msra.mxu0 %v5165
        %5224 = vmatprep.subr.mxu0 0.0
        %5225 = vmatpush1.xpose.msra.mxu0 %v5162
        %5226 = vmatprep.subr.mxu0 0.0
        %5227 = vmatpush1.xpose.msra.mxu0 %v5159
        %5228 = vmatprep.subr.mxu0 0.0
        %5229 = vmatpush1.xpose.msra.mxu0 %v5156
        %5230 = vmatprep.subr.mxu0 0.0
        %5231 = vmatpush1.xpose.msra.mxu0 %v5153
        %5232 = vmatprep.subr.mxu0 0.0
        %5233 = vmatpush2.xpose.msra.mxu0 0.0
        %5234 = vmatprep.subr.mxu0 0.0
        %5235 = vmatpush2.xpose.msra.mxu0 0.0
        %5236 = vmatprep.subr.mxu0 0.0
        %5237 = vmatpush2.xpose.msra.mxu0 0.0
        %5238 = vmatprep.subr.mxu0 0.0
        %5239 = vmatpush2.xpose.msra.mxu0 0.0
        %5240 = vmatprep.subr.mxu0 0.0
        %5241 = vmatpush2.xpose.msra.mxu0 0.0
        %5242 = vmatprep.subr.mxu0 0.0
        %5243 = vmatpush2.xpose.msra.mxu0 0.0
        %5244 = vmatprep.subr.mxu0 0.0
        %5245 = vmatpush2.xpose.msra.mxu0 0.0
        %5246 = vmatprep.subr.mxu0 0.0
        %5247 = vmatpush2.xpose.msra.mxu0 0.0
        %5248 = vmatprep.subr.mxu0 0.0
        %5249 = vmatpush2.xpose.msra.mxu0 0.0
        %5250 = vmatprep.subr.mxu0 0.0
        %5251 = vmatpush2.xpose.msra.mxu0 0.0
        %5252 = vmatprep.subr.mxu0 0.0
        %5253 = vmatpush2.xpose.msra.mxu0 0.0
        %5254 = vmatprep.subr.mxu0 0.0
        %5255 = vmatpush2.xpose.msra.mxu0 0.0
        %5256 = vmatprep.subr.mxu0 0.0
        %5257 = vmatpush2.xpose.msra.mxu0 0.0
        %5258 = vmatprep.subr.mxu0 0.0
        %5259 = vmatpush2.xpose.msra.mxu0 0.0
        %5260 = vmatprep.subr.mxu0 0.0
        %5261 = vmatpush2.xpose.msra.mxu0 0.0
        %5262 = vmatprep.subr.mxu0 0.0
        %5263 = vmatpush2.xpose.msra.mxu0 0.0
        %5264 = vmatprep.mubr.f32.mxu0 0.0
        %5265 = vmatmul.mubr.f32.gmra.mxu0 %v5150
        %v5266 = vpop.f32.mrf.mxu0
        %v5267 = vadd.f32 %v5148, %v5266
        %v5268 = vpop.f32.mrf.mxu0
        %5269 = vdwg.mxu0
        %5270 = vst [vmem:[%s298] sm:$0x1] %v5267
        %s5271 = sand.u32 %s196, 1
        %s5272 = scalar_lea.sflag [#allocation4], %s5271
        %s5273 = sand.u32 %s196, 1
        %s5274 = scalar_lea.vmem [#allocation6], %s5273
        // Predicated region
        $region53: #{tpu_custom_call.1} parent=47 // pred_check
          %p5275 = pneg %p206
        $region54: #{tpu_custom_call.1} parent=47 // pred_check_branch
          %5277 = sbr.rel (%p5275) target = $region56
        $region55: #{tpu_custom_call.1} parent=47 // pred_region
          %s5279 = ssub.s32 16, 16
          %5280 = vsyncadd %s5272, %s5279
          %s5281 = smul.addr %s26, 2
          %s5282 = sadd.s32 %s27, %s5281
          %s5283 = smul.addr %s5282, 16
          %s5284 = scalar_lea.hbm %s7, %s5283
          %s5286 = sshll.u32 %s5274, 4
          %s5287 = int_to_ptr.vmem [resolvable:$true] %s5286
          %5289 = dma.vmem_to_hbm [thread:$0]  %s5287, 16, %s5284, %s5272
        $region56: #{tpu_custom_call.1} parent=47 // pred_fallthru
          _
      $region48: #{tpu_custom_call.1} parent=5 // pred_fallthru
        _
      %p5290 = scmp.le.s32.totalorder 2, %s17
      // Predicated region
      $region57: #{tpu_custom_call.1} parent=5 // pred_check
        %p5291 = pneg %p5290
      $region58: #{tpu_custom_call.1} parent=5 // pred_check_branch
        %5293 = sbr.rel (%p5291) target = $region60
      $region59: #{tpu_custom_call.1} parent=5 // pred_region
        %s5294 = ssub.s32 %s17, 2
        // Predicated region
        $region61: #{tpu_custom_call.1} parent=59 // pred_check
          %p5295 = pneg %p212
        $region62: #{tpu_custom_call.1} parent=59 // pred_check_branch
          %5297 = sbr.rel (%p5295) target = $region64
        $region63: #{tpu_custom_call.1} parent=59 // pred_region
          %s5298 = sand.u32 %s197, 1
          %s5299 = scalar_lea.sflag [#allocation4], %s5298
          %s5300 = sand.u32 %s197, 1
          %s5301 = scalar_lea.vmem [#allocation6], %s5300
          %5302 = dma.done %s5299, 16
        $region64: #{tpu_custom_call.1} parent=59 // pred_fallthru
          _
      $region60: #{tpu_custom_call.1} parent=5 // pred_fallthru
        _
    $region6: #{tpu_custom_call.1} parent=1 // loop_footer
      %s21 = sadd.s32 1, %s17
    $region7: #{tpu_custom_call.1} parent=1 // loop_footer_branch
      %16 = sbr.rel target = $region3
    $region8: #{tpu_custom_call.1} parent=1 // loop_exit
      _
    %5303 = vsyncpa [#allocation4], 1
    %s5304 = scalar_lea.sflag [#allocation4], 1
    %5305 = vsyncpa %s5304, 1
    %5306 = vsyncpa [#allocation5], 1
    %s5307 = scalar_lea.sflag [#allocation5], 1
    %5308 = vsyncpa %s5307, 1

</llo_original>
